<compile_context>
chip_gen: v7x
topology: tpu7x:2x2x1
jax: 0.10.0
libtpu: 0.0.40
codegen_flags: <defaults>
</compile_context>

<pallas_src>
import math
from functools import partial

import numpy as np
import jax
import jax.numpy as jnp
from jax.experimental import pallas as pl
from jax.experimental.pallas import tpu as pltpu


# ----- fused Pallas kernel: conv (im2col matmul) + BN(batch stats) + ReLU + pool -----

def _fused_block_kernel(a_ref, w_ref, mask_ref, gamma_ref, beta_ref, o_ref, *,
                        inv_m, eps, slab_rows):
    # a_ref: (Mp, Kp) bf16 im2col patches, w_ref: (Kp, C) bf16 weights.
    conv = jnp.dot(a_ref[...], w_ref[...], preferred_element_type=jnp.float32)  # (Mp, C) f32

    # Training-mode BatchNorm batch statistics (biased variance), computed while
    # the conv output is resident in VMEM.  Zero-padded patch rows give exactly
    # zero conv rows, so the unmasked sum is already the exact sum over the
    # m_true real rows; the validity mask is only needed for the centered
    # (two-pass) variance so padded rows do not contribute (0 - mean)^2.
    mean = jnp.sum(conv, axis=0, keepdims=True) * inv_m                 # (1, C)
    diff = (conv - mean) * mask_ref[...]                                # mask: (Mp, 1)
    var = jnp.sum(diff * diff, axis=0, keepdims=True) * inv_m           # (1, C)

    scale = gamma_ref[...] * jax.lax.rsqrt(var + eps)                   # (1, C)
    shift = beta_ref[...] - mean * scale                                # (1, C)
    act = jnp.maximum(conv * scale + shift, 0.0)                        # (Mp, C) f32

    if slab_rows is not None:
        # Fused 2x2 max-pool: patch rows were laid out as 4 slabs of slab_rows
        # rows (one slab per pool offset), slab_rows is a multiple of 16 so the
        # slices below are (8,128)-tile aligned.
        r = slab_rows
        act = jnp.maximum(jnp.maximum(act[0 * r:1 * r], act[1 * r:2 * r]),
                          jnp.maximum(act[2 * r:3 * r], act[3 * r:4 * r]))

    o_ref[...] = act.astype(o_ref.dtype)


def fused_conv_bn_relu_pool(patches, w_mat, mask, gamma_row, beta_row, *,
                            inv_m, eps, slab_rows, out_rows, out_dtype):
    mp, kp = patches.shape
    c = w_mat.shape[1]
    kernel = partial(_fused_block_kernel, inv_m=inv_m, eps=eps, slab_rows=slab_rows)
    return pl.pallas_call(
        kernel,
        out_shape=jax.ShapeDtypeStruct((out_rows, c), out_dtype),
        grid=(1,),  # whole layer in one block: total work is tiny, launch-bound
        in_specs=[
            pl.BlockSpec((mp, kp), lambda i: (0, 0)),
            pl.BlockSpec((kp, c), lambda i: (0, 0)),
            pl.BlockSpec((mp, 1), lambda i: (0, 0)),
            pl.BlockSpec((1, c), lambda i: (0, 0)),
            pl.BlockSpec((1, c), lambda i: (0, 0)),
        ],
        out_specs=pl.BlockSpec((out_rows, c), lambda i: (0, 0)),
        compiler_params=pltpu.CompilerParams(dimension_semantics=("arbitrary",)),
    )(patches, w_mat, mask, gamma_row, beta_row)


# ------------------------- plain-JAX glue (pure data movement) -------------------------

def _round_up(v, m):
    return ((v + m - 1) // m) * m


def build_patches(x, padding, pool, row_align=16, k_align=32):
    """im2col for a 3x3 conv, NHWC input.

    Returns (patches, mask, meta).  patches: (Mp, Kp) with K = 9*Cin zero-padded
    to k_align and rows zero-padded/reordered as described below.  mask: (Mp, 1)
    f32 compile-time constant, 1 for real patch rows.  For pooling blocks the
    rows are ordered as 4 slabs (pool offsets (0,0),(0,1),(1,0),(1,1)), each
    slab padded to a multiple of row_align, followed by the rows the pool drops
    (needed only for BN statistics) and zero padding.
    """
    n, _, _, cin = x.shape
    if padding:
        x = jnp.pad(x, ((0, 0), (padding, padding), (padding, padding), (0, 0)))
    ho, wo = x.shape[1] - 2, x.shape[2] - 2
    k = 9 * cin
    kp = _round_up(k, k_align)

    cols = jnp.stack([x[:, i:i + ho, j:j + wo, :] for i in range(3) for j in range(3)],
                     axis=3)                                   # (N, Ho, Wo, 9, Cin)
    patches4 = cols.reshape(n, ho, wo, k)
    if kp != k:
        patches4 = jnp.pad(patches4, ((0, 0), (0, 0), (0, 0), (0, kp - k)))

    m_true = n * ho * wo

    if not pool:
        mp = _round_up(m_true, row_align)
        patches = patches4.reshape(m_true, kp)
        if mp != m_true:
            patches = jnp.pad(patches, ((0, mp - m_true), (0, 0)))
        mask_np = np.zeros((mp, 1), np.float32)
        mask_np[:m_true] = 1.0
        meta = dict(m_true=m_true, kp=kp, k=k, slab_rows=None, out_rows=mp,
                    out_true=m_true, out_h=ho, out_w=wo)
        return patches, jnp.asarray(mask_np), meta

    # Pooling block: reorder rows into 4 aligned slabs + leftover rows.
    hp, wp = ho // 2, wo // 2
    m4 = n * hp * wp
    m4p = _round_up(m4, row_align)

    ev = patches4[:, :2 * hp, :2 * wp, :].reshape(n, hp, 2, wp, 2, kp)
    ev = jnp.transpose(ev, (2, 4, 0, 1, 3, 5)).reshape(4, m4, kp)   # slab q = (di, dj)
    if m4p != m4:
        ev = jnp.pad(ev, ((0, 0), (0, m4p - m4), (0, 0)))
    ev = ev.reshape(4 * m4p, kp)

    rest_parts = []
    if ho > 2 * hp:
        rest_parts.append(patches4[:, 2 * hp:, :, :].reshape(-1, kp))
    if wo > 2 * wp:
        rest_parts.append(patches4[:, :2 * hp, 2 * wp:, :].reshape(-1, kp))
    n_rest = int(sum(r.shape[0] for r in rest_parts))

    total = 4 * m4p + n_rest
    mp = _round_up(total, row_align)
    pieces = [ev] + rest_parts
    if mp != total:
        pieces.append(jnp.zeros((mp - total, kp), patches4.dtype))
    patches = jnp.concatenate(pieces, axis=0) if len(pieces) > 1 else ev

    mask_np = np.zeros((mp, 1), np.float32)
    for q in range(4):
        mask_np[q * m4p:q * m4p + m4] = 1.0
    mask_np[4 * m4p:4 * m4p + n_rest] = 1.0

    meta = dict(m_true=m_true, kp=kp, k=k, slab_rows=m4p, out_rows=m4p,
                out_true=m4, out_h=hp, out_w=wp)
    return patches, jnp.asarray(mask_np), meta


def init_params(depth, key):
    """Deterministic init matching ConvNetNopool.__init__ / init_layer.

    The Conv2d bias is intentionally omitted: training-mode BatchNorm subtracts
    the batch mean, which cancels a per-channel constant bias exactly, so the
    forward output is identical with or without it.
    """
    params, configs = [], []
    for i in range(depth):
        indim = 3 if i == 0 else 64
        outdim = 64
        key, kw = jax.random.split(key)
        n = 3 * 3 * outdim   # init_layer: normal(0, sqrt(2 / (kh*kw*out_channels)))
        w = jax.random.normal(kw, (outdim, indim, 3, 3), jnp.float32) * math.sqrt(2.0 / float(n))
        params.append(dict(
            w=w,
            gamma=jnp.ones((outdim,), jnp.float32),   # BN weight fill(1)
            beta=jnp.zeros((outdim,), jnp.float32),   # BN bias fill(0)
        ))
        configs.append((i in (0, 1), 0 if i in (0, 1) else 1))   # (pool, padding)
    return params, tuple(configs)


def make_forward(configs, eps=1e-5):
    depth = len(configs)

    @jax.jit
    def forward(x_nchw, params):
        # NCHW -> NHWC; bf16 activations between layers, f32 final output.
        x = jnp.transpose(x_nchw, (0, 2, 3, 1)).astype(jnp.bfloat16)
        for idx, ((pool, padding), p) in enumerate(zip(configs, params)):
            n, cin = x.shape[0], x.shape[-1]
            last = idx == depth - 1
            patches, mask, meta = build_patches(x, padding, pool)
            # weight (Cout, Cin, 3, 3) -> (kh, kw, Cin, Cout) -> (9*Cin, Cout), pad K rows.
            w_mat = jnp.transpose(p["w"], (2, 3, 1, 0)).reshape(9 * cin, p["w"].shape[0])
            if meta["kp"] != meta["k"]:
                w_mat = jnp.pad(w_mat, ((0, meta["kp"] - meta["k"]), (0, 0)))
            act = fused_conv_bn_relu_pool(
                patches,
                w_mat.astype(jnp.bfloat16),
                mask,
                p["gamma"][None, :],
                p["beta"][None, :],
                inv_m=1.0 / float(meta["m_true"]),
                eps=eps,
                slab_rows=meta["slab_rows"],
                out_rows=meta["out_rows"],
                out_dtype=jnp.float32 if last else jnp.bfloat16,
            )
            x = act[:meta["out_true"]].reshape(n, meta["out_h"], meta["out_w"], act.shape[-1])
        return jnp.transpose(x, (0, 3, 1, 2))   # NHWC -> NCHW

    return forward


if __name__ == "__main__":
    key = jax.random.PRNGKey(0)
    k_params, k_x = jax.random.split(key)
    depth = 4
    params, configs = init_params(depth, k_params)
    # Small deterministic input: batch=2, 3 channels, 20x20 spatial.
    # 20 -> conv(p=0) 18 -> pool 9 -> conv(p=0) 7 -> pool 3 -> conv(p=1) 3 -> conv(p=1) 3
    x = jax.random.normal(k_x, (2, 3, 20, 20), jnp.float32)
    fwd = make_forward(configs)
    out = fwd(x, params)
    jax.block_until_ready(out)
    assert out.shape == (2, 64, 3, 3), out.shape
    assert out.dtype == jnp.float32
    assert bool(jnp.all(jnp.isfinite(out)))
    print("KERNEL_OK")
</pallas_src>

<mosaic_0001>
module attributes {stable_mosaic.version = 11 : i64} {
  func.func @_fused_block_kernel(%arg0: i32, %arg1: memref<704x32xbf16, #tpu.memory_space<vmem>>, %arg2: memref<32x64xbf16, #tpu.memory_space<vmem>>, %arg3: memref<704x1xf32, #tpu.memory_space<vmem>>, %arg4: memref<1x64xf32, #tpu.memory_space<vmem>>, %arg5: memref<1x64xf32, #tpu.memory_space<vmem>>, %arg6: memref<176x64xbf16, #tpu.memory_space<vmem>>) attributes {dimension_semantics = [#tpu.dimension_semantics<arbitrary>], iteration_bounds = array<i64: 1>, scalar_prefetch = 0 : i64, scratch_operands = 0 : i64, tpu.core_type = #tpu.core_type<tc>, window_params = [{pipeline_mode = #tpu.pipeline_mode<synchronous>, transform_indices = @transform_0, window_bounds = array<i64: 704, 32>}, {pipeline_mode = #tpu.pipeline_mode<synchronous>, transform_indices = @transform_1, window_bounds = array<i64: 32, 64>}, {pipeline_mode = #tpu.pipeline_mode<synchronous>, transform_indices = @transform_2, window_bounds = array<i64: 704, 1>}, {pipeline_mode = #tpu.pipeline_mode<synchronous>, transform_indices = @transform_3, window_bounds = array<i64: 1, 64>}, {pipeline_mode = #tpu.pipeline_mode<synchronous>, transform_indices = @transform_4, window_bounds = array<i64: 1, 64>}, {pipeline_mode = #tpu.pipeline_mode<synchronous>, transform_indices = @transform_5, window_bounds = array<i64: 176, 64>}]} {
    %c0 = arith.constant 0 : index
    %c0_0 = arith.constant 0 : index
    %0 = vector.load %arg1[%c0, %c0_0] : memref<704x32xbf16, #tpu.memory_space<vmem>>, vector<704x32xbf16>
    %c0_1 = arith.constant 0 : index
    %c0_2 = arith.constant 0 : index
    %1 = vector.load %arg2[%c0_1, %c0_2] : memref<32x64xbf16, #tpu.memory_space<vmem>>, vector<32x64xbf16>
    %cst = arith.constant dense<0.000000e+00> : vector<704x64xf32>
    %2 = tpu.matmul %0, %1, %cst {dimension_numbers = #tpu.dot_dimension_numbers<[1], [0], [0], [1], [0, 0, 1, 1], [], []>} : vector<704x32xbf16>, vector<32x64xbf16>, vector<704x64xf32> -> vector<704x64xf32>
    %cst_3 = arith.constant dense<0.000000e+00> : vector<64xf32>
    %3 = vector.multi_reduction <add>, %2, %cst_3 [0] : vector<704x64xf32> to vector<64xf32>
    %4 = vector.shape_cast %3 : vector<64xf32> to vector<1x64xf32>
    %cst_4 = arith.constant 0.00154320989 : f32
    %5 = vector.broadcast %cst_4 : f32 to vector<1x64xf32>
    %6 = arith.mulf %4, %5 : vector<1x64xf32>
    %7 = vector.broadcast %6 : vector<1x64xf32> to vector<704x64xf32>
    %8 = arith.subf %2, %7 : vector<704x64xf32>
    %c0_5 = arith.constant 0 : index
    %c0_6 = arith.constant 0 : index
    %9 = vector.load %arg3[%c0_5, %c0_6] : memref<704x1xf32, #tpu.memory_space<vmem>>, vector<704x1xf32>
    %10 = vector.broadcast %9 : vector<704x1xf32> to vector<704x64xf32>
    %11 = arith.mulf %8, %10 : vector<704x64xf32>
    %12 = arith.mulf %11, %11 : vector<704x64xf32>
    %cst_7 = arith.constant dense<0.000000e+00> : vector<64xf32>
    %13 = vector.multi_reduction <add>, %12, %cst_7 [0] : vector<704x64xf32> to vector<64xf32>
    %14 = vector.shape_cast %13 : vector<64xf32> to vector<1x64xf32>
    %cst_8 = arith.constant 0.00154320989 : f32
    %15 = vector.broadcast %cst_8 : f32 to vector<1x64xf32>
    %16 = arith.mulf %14, %15 : vector<1x64xf32>
    %c0_9 = arith.constant 0 : index
    %c0_10 = arith.constant 0 : index
    %17 = vector.load %arg4[%c0_9, %c0_10] : memref<1x64xf32, #tpu.memory_space<vmem>>, vector<1x64xf32>
    %cst_11 = arith.constant 9.99999974E-6 : f32
    %18 = vector.broadcast %cst_11 : f32 to vector<1x64xf32>
    %19 = arith.addf %16, %18 : vector<1x64xf32>
    %20 = math.rsqrt %19 : vector<1x64xf32>
    %21 = arith.mulf %17, %20 : vector<1x64xf32>
    %c0_12 = arith.constant 0 : index
    %c0_13 = arith.constant 0 : index
    %22 = vector.load %arg5[%c0_12, %c0_13] : memref<1x64xf32, #tpu.memory_space<vmem>>, vector<1x64xf32>
    %23 = arith.mulf %6, %21 : vector<1x64xf32>
    %24 = arith.subf %22, %23 : vector<1x64xf32>
    %25 = vector.broadcast %21 : vector<1x64xf32> to vector<704x64xf32>
    %26 = arith.mulf %2, %25 : vector<704x64xf32>
    %27 = vector.broadcast %24 : vector<1x64xf32> to vector<704x64xf32>
    %28 = arith.addf %26, %27 : vector<704x64xf32>
    %cst_14 = arith.constant 0.000000e+00 : f32
    %29 = vector.broadcast %cst_14 : f32 to vector<704x64xf32>
    %30 = arith.maximumf %28, %29 : vector<704x64xf32>
    %31 = vector.extract_strided_slice %30 {offsets = [0, 0], sizes = [176, 64], strides = [1, 1]} : vector<704x64xf32> to vector<176x64xf32>
    %32 = vector.extract_strided_slice %30 {offsets = [176, 0], sizes = [176, 64], strides = [1, 1]} : vector<704x64xf32> to vector<176x64xf32>
    %33 = arith.maximumf %31, %32 : vector<176x64xf32>
    %34 = vector.extract_strided_slice %30 {offsets = [352, 0], sizes = [176, 64], strides = [1, 1]} : vector<704x64xf32> to vector<176x64xf32>
    %35 = vector.extract_strided_slice %30 {offsets = [528, 0], sizes = [176, 64], strides = [1, 1]} : vector<704x64xf32> to vector<176x64xf32>
    %36 = arith.maximumf %34, %35 : vector<176x64xf32>
    %37 = arith.maximumf %33, %36 : vector<176x64xf32>
    %38 = arith.truncf %37 : vector<176x64xf32> to vector<176x64xbf16>
    %c0_15 = arith.constant 0 : index
    %c0_16 = arith.constant 0 : index
    %39 = vector.load %arg6[%c0_15, %c0_16] : memref<176x64xbf16, #tpu.memory_space<vmem>>, vector<176x64xbf16>
    tpu.vector_store %arg6[%c0_15, %c0_16], %38 {strides = array<i32>} : memref<176x64xbf16, #tpu.memory_space<vmem>>, vector<176x64xbf16>,
    return
  }
  func.func @transform_0(%arg0: i32) -> (i32, i32) {
    %c0_i32 = arith.constant 0 : i32
    %c0_i32_0 = arith.constant 0 : i32
    %c0_i32_1 = arith.constant 0 : i32
    return %c0_i32, %c0_i32_0 : i32, i32
  }
  func.func @transform_1(%arg0: i32) -> (i32, i32) {
    %c0_i32 = arith.constant 0 : i32
    %c0_i32_0 = arith.constant 0 : i32
    %c0_i32_1 = arith.constant 0 : i32
    return %c0_i32, %c0_i32_0 : i32, i32
  }
  func.func @transform_2(%arg0: i32) -> (i32, i32) {
    %c0_i32 = arith.constant 0 : i32
    %c0_i32_0 = arith.constant 0 : i32
    %c0_i32_1 = arith.constant 0 : i32
    return %c0_i32, %c0_i32_0 : i32, i32
  }
  func.func @transform_3(%arg0: i32) -> (i32, i32) {
    %c0_i32 = arith.constant 0 : i32
    %c0_i32_0 = arith.constant 0 : i32
    %c0_i32_1 = arith.constant 0 : i32
    return %c0_i32, %c0_i32_0 : i32, i32
  }
  func.func @transform_4(%arg0: i32) -> (i32, i32) {
    %c0_i32 = arith.constant 0 : i32
    %c0_i32_0 = arith.constant 0 : i32
    %c0_i32_1 = arith.constant 0 : i32
    return %c0_i32, %c0_i32_0 : i32, i32
  }
  func.func @transform_5(%arg0: i32) -> (i32, i32) {
    %c0_i32 = arith.constant 0 : i32
    %c0_i32_0 = arith.constant 0 : i32
    %c0_i32_1 = arith.constant 0 : i32
    return %c0_i32, %c0_i32_0 : i32, i32
  }
}

module attributes {stable_mosaic.version = 11 : i64} {
  func.func @_fused_block_kernel(%arg0: i32, %arg1: memref<160x576xbf16, #tpu.memory_space<vmem>>, %arg2: memref<576x64xbf16, #tpu.memory_space<vmem>>, %arg3: memref<160x1xf32, #tpu.memory_space<vmem>>, %arg4: memref<1x64xf32, #tpu.memory_space<vmem>>, %arg5: memref<1x64xf32, #tpu.memory_space<vmem>>, %arg6: memref<32x64xbf16, #tpu.memory_space<vmem>>) attributes {dimension_semantics = [#tpu.dimension_semantics<arbitrary>], iteration_bounds = array<i64: 1>, scalar_prefetch = 0 : i64, scratch_operands = 0 : i64, tpu.core_type = #tpu.core_type<tc>, window_params = [{pipeline_mode = #tpu.pipeline_mode<synchronous>, transform_indices = @transform_0, window_bounds = array<i64: 160, 576>}, {pipeline_mode = #tpu.pipeline_mode<synchronous>, transform_indices = @transform_1, window_bounds = array<i64: 576, 64>}, {pipeline_mode = #tpu.pipeline_mode<synchronous>, transform_indices = @transform_2, window_bounds = array<i64: 160, 1>}, {pipeline_mode = #tpu.pipeline_mode<synchronous>, transform_indices = @transform_3, window_bounds = array<i64: 1, 64>}, {pipeline_mode = #tpu.pipeline_mode<synchronous>, transform_indices = @transform_4, window_bounds = array<i64: 1, 64>}, {pipeline_mode = #tpu.pipeline_mode<synchronous>, transform_indices = @transform_5, window_bounds = array<i64: 32, 64>}]} {
    %c0 = arith.constant 0 : index
    %c0_0 = arith.constant 0 : index
    %0 = vector.load %arg1[%c0, %c0_0] : memref<160x576xbf16, #tpu.memory_space<vmem>>, vector<160x576xbf16>
    %c0_1 = arith.constant 0 : index
    %c0_2 = arith.constant 0 : index
    %1 = vector.load %arg2[%c0_1, %c0_2] : memref<576x64xbf16, #tpu.memory_space<vmem>>, vector<576x64xbf16>
    %cst = arith.constant dense<0.000000e+00> : vector<160x64xf32>
    %2 = tpu.matmul %0, %1, %cst {dimension_numbers = #tpu.dot_dimension_numbers<[1], [0], [0], [1], [0, 0, 1, 1], [], []>} : vector<160x576xbf16>, vector<576x64xbf16>, vector<160x64xf32> -> vector<160x64xf32>
    %cst_3 = arith.constant dense<0.000000e+00> : vector<64xf32>
    %3 = vector.multi_reduction <add>, %2, %cst_3 [0] : vector<160x64xf32> to vector<64xf32>
    %4 = vector.shape_cast %3 : vector<64xf32> to vector<1x64xf32>
    %cst_4 = arith.constant 0.0102040814 : f32
    %5 = vector.broadcast %cst_4 : f32 to vector<1x64xf32>
    %6 = arith.mulf %4, %5 : vector<1x64xf32>
    %7 = vector.broadcast %6 : vector<1x64xf32> to vector<160x64xf32>
    %8 = arith.subf %2, %7 : vector<160x64xf32>
    %c0_5 = arith.constant 0 : index
    %c0_6 = arith.constant 0 : index
    %9 = vector.load %arg3[%c0_5, %c0_6] : memref<160x1xf32, #tpu.memory_space<vmem>>, vector<160x1xf32>
    %10 = vector.broadcast %9 : vector<160x1xf32> to vector<160x64xf32>
    %11 = arith.mulf %8, %10 : vector<160x64xf32>
    %12 = arith.mulf %11, %11 : vector<160x64xf32>
    %cst_7 = arith.constant dense<0.000000e+00> : vector<64xf32>
    %13 = vector.multi_reduction <add>, %12, %cst_7 [0] : vector<160x64xf32> to vector<64xf32>
    %14 = vector.shape_cast %13 : vector<64xf32> to vector<1x64xf32>
    %cst_8 = arith.constant 0.0102040814 : f32
    %15 = vector.broadcast %cst_8 : f32 to vector<1x64xf32>
    %16 = arith.mulf %14, %15 : vector<1x64xf32>
    %c0_9 = arith.constant 0 : index
    %c0_10 = arith.constant 0 : index
    %17 = vector.load %arg4[%c0_9, %c0_10] : memref<1x64xf32, #tpu.memory_space<vmem>>, vector<1x64xf32>
    %cst_11 = arith.constant 9.99999974E-6 : f32
    %18 = vector.broadcast %cst_11 : f32 to vector<1x64xf32>
    %19 = arith.addf %16, %18 : vector<1x64xf32>
    %20 = math.rsqrt %19 : vector<1x64xf32>
    %21 = arith.mulf %17, %20 : vector<1x64xf32>
    %c0_12 = arith.constant 0 : index
    %c0_13 = arith.constant 0 : index
    %22 = vector.load %arg5[%c0_12, %c0_13] : memref<1x64xf32, #tpu.memory_space<vmem>>, vector<1x64xf32>
    %23 = arith.mulf %6, %21 : vector<1x64xf32>
    %24 = arith.subf %22, %23 : vector<1x64xf32>
    %25 = vector.broadcast %21 : vector<1x64xf32> to vector<160x64xf32>
    %26 = arith.mulf %2, %25 : vector<160x64xf32>
    %27 = vector.broadcast %24 : vector<1x64xf32> to vector<160x64xf32>
    %28 = arith.addf %26, %27 : vector<160x64xf32>
    %cst_14 = arith.constant 0.000000e+00 : f32
    %29 = vector.broadcast %cst_14 : f32 to vector<160x64xf32>
    %30 = arith.maximumf %28, %29 : vector<160x64xf32>
    %31 = vector.extract_strided_slice %30 {offsets = [0, 0], sizes = [32, 64], strides = [1, 1]} : vector<160x64xf32> to vector<32x64xf32>
    %32 = vector.extract_strided_slice %30 {offsets = [32, 0], sizes = [32, 64], strides = [1, 1]} : vector<160x64xf32> to vector<32x64xf32>
    %33 = arith.maximumf %31, %32 : vector<32x64xf32>
    %34 = vector.extract_strided_slice %30 {offsets = [64, 0], sizes = [32, 64], strides = [1, 1]} : vector<160x64xf32> to vector<32x64xf32>
    %35 = vector.extract_strided_slice %30 {offsets = [96, 0], sizes = [32, 64], strides = [1, 1]} : vector<160x64xf32> to vector<32x64xf32>
    %36 = arith.maximumf %34, %35 : vector<32x64xf32>
    %37 = arith.maximumf %33, %36 : vector<32x64xf32>
    %38 = arith.truncf %37 : vector<32x64xf32> to vector<32x64xbf16>
    %c0_15 = arith.constant 0 : index
    %c0_16 = arith.constant 0 : index
    %39 = vector.load %arg6[%c0_15, %c0_16] : memref<32x64xbf16, #tpu.memory_space<vmem>>, vector<32x64xbf16>
    tpu.vector_store %arg6[%c0_15, %c0_16], %38 {strides = array<i32>} : memref<32x64xbf16, #tpu.memory_space<vmem>>, vector<32x64xbf16>,
    return
  }
  func.func @transform_0(%arg0: i32) -> (i32, i32) {
    %c0_i32 = arith.constant 0 : i32
    %c0_i32_0 = arith.constant 0 : i32
    %c0_i32_1 = arith.constant 0 : i32
    return %c0_i32, %c0_i32_0 : i32, i32
  }
  func.func @transform_1(%arg0: i32) -> (i32, i32) {
    %c0_i32 = arith.constant 0 : i32
    %c0_i32_0 = arith.constant 0 : i32
    %c0_i32_1 = arith.constant 0 : i32
    return %c0_i32, %c0_i32_0 : i32, i32
  }
  func.func @transform_2(%arg0: i32) -> (i32, i32) {
    %c0_i32 = arith.constant 0 : i32
    %c0_i32_0 = arith.constant 0 : i32
    %c0_i32_1 = arith.constant 0 : i32
    return %c0_i32, %c0_i32_0 : i32, i32
  }
  func.func @transform_3(%arg0: i32) -> (i32, i32) {
    %c0_i32 = arith.constant 0 : i32
    %c0_i32_0 = arith.constant 0 : i32
    %c0_i32_1 = arith.constant 0 : i32
    return %c0_i32, %c0_i32_0 : i32, i32
  }
  func.func @transform_4(%arg0: i32) -> (i32, i32) {
    %c0_i32 = arith.constant 0 : i32
    %c0_i32_0 = arith.constant 0 : i32
    %c0_i32_1 = arith.constant 0 : i32
    return %c0_i32, %c0_i32_0 : i32, i32
  }
  func.func @transform_5(%arg0: i32) -> (i32, i32) {
    %c0_i32 = arith.constant 0 : i32
    %c0_i32_0 = arith.constant 0 : i32
    %c0_i32_1 = arith.constant 0 : i32
    return %c0_i32, %c0_i32_0 : i32, i32
  }
}

module attributes {stable_mosaic.version = 11 : i64} {
  func.func @_fused_block_kernel(%arg0: i32, %arg1: memref<32x576xbf16, #tpu.memory_space<vmem>>, %arg2: memref<576x64xbf16, #tpu.memory_space<vmem>>, %arg3: memref<32x1xf32, #tpu.memory_space<vmem>>, %arg4: memref<1x64xf32, #tpu.memory_space<vmem>>, %arg5: memref<1x64xf32, #tpu.memory_space<vmem>>, %arg6: memref<32x64xf32, #tpu.memory_space<vmem>>) attributes {dimension_semantics = [#tpu.dimension_semantics<arbitrary>], iteration_bounds = array<i64: 1>, scalar_prefetch = 0 : i64, scratch_operands = 0 : i64, tpu.core_type = #tpu.core_type<tc>, window_params = [{pipeline_mode = #tpu.pipeline_mode<synchronous>, transform_indices = @transform_0, window_bounds = array<i64: 32, 576>}, {pipeline_mode = #tpu.pipeline_mode<synchronous>, transform_indices = @transform_1, window_bounds = array<i64: 576, 64>}, {pipeline_mode = #tpu.pipeline_mode<synchronous>, transform_indices = @transform_2, window_bounds = array<i64: 32, 1>}, {pipeline_mode = #tpu.pipeline_mode<synchronous>, transform_indices = @transform_3, window_bounds = array<i64: 1, 64>}, {pipeline_mode = #tpu.pipeline_mode<synchronous>, transform_indices = @transform_4, window_bounds = array<i64: 1, 64>}, {pipeline_mode = #tpu.pipeline_mode<synchronous>, transform_indices = @transform_5, window_bounds = array<i64: 32, 64>}]} {
    %c0 = arith.constant 0 : index
    %c0_0 = arith.constant 0 : index
    %0 = vector.load %arg1[%c0, %c0_0] : memref<32x576xbf16, #tpu.memory_space<vmem>>, vector<32x576xbf16>
    %c0_1 = arith.constant 0 : index
    %c0_2 = arith.constant 0 : index
    %1 = vector.load %arg2[%c0_1, %c0_2] : memref<576x64xbf16, #tpu.memory_space<vmem>>, vector<576x64xbf16>
    %cst = arith.constant dense<0.000000e+00> : vector<32x64xf32>
    %2 = tpu.matmul %0, %1, %cst {dimension_numbers = #tpu.dot_dimension_numbers<[1], [0], [0], [1], [0, 0, 1, 1], [], []>} : vector<32x576xbf16>, vector<576x64xbf16>, vector<32x64xf32> -> vector<32x64xf32>
    %cst_3 = arith.constant dense<0.000000e+00> : vector<64xf32>
    %3 = vector.multi_reduction <add>, %2, %cst_3 [0] : vector<32x64xf32> to vector<64xf32>
    %4 = vector.shape_cast %3 : vector<64xf32> to vector<1x64xf32>
    %cst_4 = arith.constant 0.055555556 : f32
    %5 = vector.broadcast %cst_4 : f32 to vector<1x64xf32>
    %6 = arith.mulf %4, %5 : vector<1x64xf32>
    %7 = vector.broadcast %6 : vector<1x64xf32> to vector<32x64xf32>
    %8 = arith.subf %2, %7 : vector<32x64xf32>
    %c0_5 = arith.constant 0 : index
    %c0_6 = arith.constant 0 : index
    %9 = vector.load %arg3[%c0_5, %c0_6] : memref<32x1xf32, #tpu.memory_space<vmem>>, vector<32x1xf32>
    %10 = vector.broadcast %9 : vector<32x1xf32> to vector<32x64xf32>
    %11 = arith.mulf %8, %10 : vector<32x64xf32>
    %12 = arith.mulf %11, %11 : vector<32x64xf32>
    %cst_7 = arith.constant dense<0.000000e+00> : vector<64xf32>
    %13 = vector.multi_reduction <add>, %12, %cst_7 [0] : vector<32x64xf32> to vector<64xf32>
    %14 = vector.shape_cast %13 : vector<64xf32> to vector<1x64xf32>
    %cst_8 = arith.constant 0.055555556 : f32
    %15 = vector.broadcast %cst_8 : f32 to vector<1x64xf32>
    %16 = arith.mulf %14, %15 : vector<1x64xf32>
    %c0_9 = arith.constant 0 : index
    %c0_10 = arith.constant 0 : index
    %17 = vector.load %arg4[%c0_9, %c0_10] : memref<1x64xf32, #tpu.memory_space<vmem>>, vector<1x64xf32>
    %cst_11 = arith.constant 9.99999974E-6 : f32
    %18 = vector.broadcast %cst_11 : f32 to vector<1x64xf32>
    %19 = arith.addf %16, %18 : vector<1x64xf32>
    %20 = math.rsqrt %19 : vector<1x64xf32>
    %21 = arith.mulf %17, %20 : vector<1x64xf32>
    %c0_12 = arith.constant 0 : index
    %c0_13 = arith.constant 0 : index
    %22 = vector.load %arg5[%c0_12, %c0_13] : memref<1x64xf32, #tpu.memory_space<vmem>>, vector<1x64xf32>
    %23 = arith.mulf %6, %21 : vector<1x64xf32>
    %24 = arith.subf %22, %23 : vector<1x64xf32>
    %25 = vector.broadcast %21 : vector<1x64xf32> to vector<32x64xf32>
    %26 = arith.mulf %2, %25 : vector<32x64xf32>
    %27 = vector.broadcast %24 : vector<1x64xf32> to vector<32x64xf32>
    %28 = arith.addf %26, %27 : vector<32x64xf32>
    %cst_14 = arith.constant 0.000000e+00 : f32
    %29 = vector.broadcast %cst_14 : f32 to vector<32x64xf32>
    %30 = arith.maximumf %28, %29 : vector<32x64xf32>
    %c0_15 = arith.constant 0 : index
    %c0_16 = arith.constant 0 : index
    %31 = vector.load %arg6[%c0_15, %c0_16] : memref<32x64xf32, #tpu.memory_space<vmem>>, vector<32x64xf32>
    tpu.vector_store %arg6[%c0_15, %c0_16], %30 {strides = array<i32>} : memref<32x64xf32, #tpu.memory_space<vmem>>, vector<32x64xf32>,
    return
  }
  func.func @transform_0(%arg0: i32) -> (i32, i32) {
    %c0_i32 = arith.constant 0 : i32
    %c0_i32_0 = arith.constant 0 : i32
    %c0_i32_1 = arith.constant 0 : i32
    return %c0_i32, %c0_i32_0 : i32, i32
  }
  func.func @transform_1(%arg0: i32) -> (i32, i32) {
    %c0_i32 = arith.constant 0 : i32
    %c0_i32_0 = arith.constant 0 : i32
    %c0_i32_1 = arith.constant 0 : i32
    return %c0_i32, %c0_i32_0 : i32, i32
  }
  func.func @transform_2(%arg0: i32) -> (i32, i32) {
    %c0_i32 = arith.constant 0 : i32
    %c0_i32_0 = arith.constant 0 : i32
    %c0_i32_1 = arith.constant 0 : i32
    return %c0_i32, %c0_i32_0 : i32, i32
  }
  func.func @transform_3(%arg0: i32) -> (i32, i32) {
    %c0_i32 = arith.constant 0 : i32
    %c0_i32_0 = arith.constant 0 : i32
    %c0_i32_1 = arith.constant 0 : i32
    return %c0_i32, %c0_i32_0 : i32, i32
  }
  func.func @transform_4(%arg0: i32) -> (i32, i32) {
    %c0_i32 = arith.constant 0 : i32
    %c0_i32_0 = arith.constant 0 : i32
    %c0_i32_1 = arith.constant 0 : i32
    return %c0_i32, %c0_i32_0 : i32, i32
  }
  func.func @transform_5(%arg0: i32) -> (i32, i32) {
    %c0_i32 = arith.constant 0 : i32
    %c0_i32_0 = arith.constant 0 : i32
    %c0_i32_1 = arith.constant 0 : i32
    return %c0_i32, %c0_i32_0 : i32, i32
  }
}

module attributes {stable_mosaic.version = 11 : i64} {
  func.func @_fused_block_kernel(%arg0: i32, %arg1: memref<32x576xbf16, #tpu.memory_space<vmem>>, %arg2: memref<576x64xbf16, #tpu.memory_space<vmem>>, %arg3: memref<32x1xf32, #tpu.memory_space<vmem>>, %arg4: memref<1x64xf32, #tpu.memory_space<vmem>>, %arg5: memref<1x64xf32, #tpu.memory_space<vmem>>, %arg6: memref<32x64xbf16, #tpu.memory_space<vmem>>) attributes {dimension_semantics = [#tpu.dimension_semantics<arbitrary>], iteration_bounds = array<i64: 1>, scalar_prefetch = 0 : i64, scratch_operands = 0 : i64, tpu.core_type = #tpu.core_type<tc>, window_params = [{pipeline_mode = #tpu.pipeline_mode<synchronous>, transform_indices = @transform_0, window_bounds = array<i64: 32, 576>}, {pipeline_mode = #tpu.pipeline_mode<synchronous>, transform_indices = @transform_1, window_bounds = array<i64: 576, 64>}, {pipeline_mode = #tpu.pipeline_mode<synchronous>, transform_indices = @transform_2, window_bounds = array<i64: 32, 1>}, {pipeline_mode = #tpu.pipeline_mode<synchronous>, transform_indices = @transform_3, window_bounds = array<i64: 1, 64>}, {pipeline_mode = #tpu.pipeline_mode<synchronous>, transform_indices = @transform_4, window_bounds = array<i64: 1, 64>}, {pipeline_mode = #tpu.pipeline_mode<synchronous>, transform_indices = @transform_5, window_bounds = array<i64: 32, 64>}]} {
    %c0 = arith.constant 0 : index
    %c0_0 = arith.constant 0 : index
    %0 = vector.load %arg1[%c0, %c0_0] : memref<32x576xbf16, #tpu.memory_space<vmem>>, vector<32x576xbf16>
    %c0_1 = arith.constant 0 : index
    %c0_2 = arith.constant 0 : index
    %1 = vector.load %arg2[%c0_1, %c0_2] : memref<576x64xbf16, #tpu.memory_space<vmem>>, vector<576x64xbf16>
    %cst = arith.constant dense<0.000000e+00> : vector<32x64xf32>
    %2 = tpu.matmul %0, %1, %cst {dimension_numbers = #tpu.dot_dimension_numbers<[1], [0], [0], [1], [0, 0, 1, 1], [], []>} : vector<32x576xbf16>, vector<576x64xbf16>, vector<32x64xf32> -> vector<32x64xf32>
    %cst_3 = arith.constant dense<0.000000e+00> : vector<64xf32>
    %3 = vector.multi_reduction <add>, %2, %cst_3 [0] : vector<32x64xf32> to vector<64xf32>
    %4 = vector.shape_cast %3 : vector<64xf32> to vector<1x64xf32>
    %cst_4 = arith.constant 0.055555556 : f32
    %5 = vector.broadcast %cst_4 : f32 to vector<1x64xf32>
    %6 = arith.mulf %4, %5 : vector<1x64xf32>
    %7 = vector.broadcast %6 : vector<1x64xf32> to vector<32x64xf32>
    %8 = arith.subf %2, %7 : vector<32x64xf32>
    %c0_5 = arith.constant 0 : index
    %c0_6 = arith.constant 0 : index
    %9 = vector.load %arg3[%c0_5, %c0_6] : memref<32x1xf32, #tpu.memory_space<vmem>>, vector<32x1xf32>
    %10 = vector.broadcast %9 : vector<32x1xf32> to vector<32x64xf32>
    %11 = arith.mulf %8, %10 : vector<32x64xf32>
    %12 = arith.mulf %11, %11 : vector<32x64xf32>
    %cst_7 = arith.constant dense<0.000000e+00> : vector<64xf32>
    %13 = vector.multi_reduction <add>, %12, %cst_7 [0] : vector<32x64xf32> to vector<64xf32>
    %14 = vector.shape_cast %13 : vector<64xf32> to vector<1x64xf32>
    %cst_8 = arith.constant 0.055555556 : f32
    %15 = vector.broadcast %cst_8 : f32 to vector<1x64xf32>
    %16 = arith.mulf %14, %15 : vector<1x64xf32>
    %c0_9 = arith.constant 0 : index
    %c0_10 = arith.constant 0 : index
    %17 = vector.load %arg4[%c0_9, %c0_10] : memref<1x64xf32, #tpu.memory_space<vmem>>, vector<1x64xf32>
    %cst_11 = arith.constant 9.99999974E-6 : f32
    %18 = vector.broadcast %cst_11 : f32 to vector<1x64xf32>
    %19 = arith.addf %16, %18 : vector<1x64xf32>
    %20 = math.rsqrt %19 : vector<1x64xf32>
    %21 = arith.mulf %17, %20 : vector<1x64xf32>
    %c0_12 = arith.constant 0 : index
    %c0_13 = arith.constant 0 : index
    %22 = vector.load %arg5[%c0_12, %c0_13] : memref<1x64xf32, #tpu.memory_space<vmem>>, vector<1x64xf32>
    %23 = arith.mulf %6, %21 : vector<1x64xf32>
    %24 = arith.subf %22, %23 : vector<1x64xf32>
    %25 = vector.broadcast %21 : vector<1x64xf32> to vector<32x64xf32>
    %26 = arith.mulf %2, %25 : vector<32x64xf32>
    %27 = vector.broadcast %24 : vector<1x64xf32> to vector<32x64xf32>
    %28 = arith.addf %26, %27 : vector<32x64xf32>
    %cst_14 = arith.constant 0.000000e+00 : f32
    %29 = vector.broadcast %cst_14 : f32 to vector<32x64xf32>
    %30 = arith.maximumf %28, %29 : vector<32x64xf32>
    %31 = arith.truncf %30 : vector<32x64xf32> to vector<32x64xbf16>
    %c0_15 = arith.constant 0 : index
    %c0_16 = arith.constant 0 : index
    %32 = vector.load %arg6[%c0_15, %c0_16] : memref<32x64xbf16, #tpu.memory_space<vmem>>, vector<32x64xbf16>
    tpu.vector_store %arg6[%c0_15, %c0_16], %31 {strides = array<i32>} : memref<32x64xbf16, #tpu.memory_space<vmem>>, vector<32x64xbf16>,
    return
  }
  func.func @transform_0(%arg0: i32) -> (i32, i32) {
    %c0_i32 = arith.constant 0 : i32
    %c0_i32_0 = arith.constant 0 : i32
    %c0_i32_1 = arith.constant 0 : i32
    return %c0_i32, %c0_i32_0 : i32, i32
  }
  func.func @transform_1(%arg0: i32) -> (i32, i32) {
    %c0_i32 = arith.constant 0 : i32
    %c0_i32_0 = arith.constant 0 : i32
    %c0_i32_1 = arith.constant 0 : i32
    return %c0_i32, %c0_i32_0 : i32, i32
  }
  func.func @transform_2(%arg0: i32) -> (i32, i32) {
    %c0_i32 = arith.constant 0 : i32
    %c0_i32_0 = arith.constant 0 : i32
    %c0_i32_1 = arith.constant 0 : i32
    return %c0_i32, %c0_i32_0 : i32, i32
  }
  func.func @transform_3(%arg0: i32) -> (i32, i32) {
    %c0_i32 = arith.constant 0 : i32
    %c0_i32_0 = arith.constant 0 : i32
    %c0_i32_1 = arith.constant 0 : i32
    return %c0_i32, %c0_i32_0 : i32, i32
  }
  func.func @transform_4(%arg0: i32) -> (i32, i32) {
    %c0_i32 = arith.constant 0 : i32
    %c0_i32_0 = arith.constant 0 : i32
    %c0_i32_1 = arith.constant 0 : i32
    return %c0_i32, %c0_i32_0 : i32, i32
  }
  func.func @transform_5(%arg0: i32) -> (i32, i32) {
    %c0_i32 = arith.constant 0 : i32
    %c0_i32_0 = arith.constant 0 : i32
    %c0_i32_1 = arith.constant 0 : i32
    return %c0_i32, %c0_i32_0 : i32, i32
  }
}

</mosaic_0001>

<llo_original>
// kernel: forward.4
$region0: #{forward.4}
  #allocation0 [shape = 'u32[]', space=smem, size = 0x4, offset = 0x4, fixed_abs, tag = 'smem constant byte address 0x4 - core index']
  #allocation1 [shape = 'u32[144,128]{1,0:T(1,128)}', space=vmem, size = 0x12000, scoped, tag = 'internal scratch']
  %s0 = inlined_call_operand.vmem [shape: bf16[704,32], index: 0, kind: input, shape index: {}]
  %s1 = inlined_call_operand.vmem [shape: bf16[32,64], index: 1, kind: input, shape index: {}]
  %s2 = inlined_call_operand.vmem [shape: f32[704,1], index: 2, kind: input, shape index: {}]
  %s3 = inlined_call_operand.vmem [shape: f32[1,64], index: 3, kind: input, shape index: {}]
  %s4 = inlined_call_operand.vmem [shape: f32[1,64], index: 4, kind: input, shape index: {}]
  %s5 = inlined_call_operand.vmem [shape: bf16[176,64], index: 5, kind: output, shape index: {}]
  %s6 = sld [smem:[#allocation0]]
  $region30: #{forward.4} parent=0
    _
  %s8 = ssub.s32 1, %s6
  %s9 = scalar_select 0, %s8, %s6
  // Predicated region
  $region2: #{forward.4} parent=0 // pred_check
    _
  $region3: #{forward.4} parent=0 // pred_check_branch
    %11 = sbr.rel (0) target = $region5
  $region4: #{forward.4} parent=0 // pred_region
    _
  $region5: #{forward.4} parent=0 // pred_fallthru
    _
  // Predicated region
  $region6: #{forward.4} parent=0 // pred_check
    _
  $region7: #{forward.4} parent=0 // pred_check_branch
    %13 = sbr.rel (0) target = $region9
  $region8: #{forward.4} parent=0 // pred_region
    _
  $region9: #{forward.4} parent=0 // pred_fallthru
    _
  // Predicated region
  $region10: #{forward.4} parent=0 // pred_check
    _
  $region11: #{forward.4} parent=0 // pred_check_branch
    %15 = sbr.rel (0) target = $region13
  $region12: #{forward.4} parent=0 // pred_region
    _
  $region13: #{forward.4} parent=0 // pred_fallthru
    _
  // Predicated region
  $region14: #{forward.4} parent=0 // pred_check
    _
  $region15: #{forward.4} parent=0 // pred_check_branch
    %17 = sbr.rel (0) target = $region17
  $region16: #{forward.4} parent=0 // pred_region
    _
  $region17: #{forward.4} parent=0 // pred_fallthru
    _
  // Predicated region
  $region18: #{forward.4} parent=0 // pred_check
    _
  $region19: #{forward.4} parent=0 // pred_check_branch
    %19 = sbr.rel (0) target = $region21
  $region20: #{forward.4} parent=0 // pred_region
    _
  $region21: #{forward.4} parent=0 // pred_fallthru
    _
  %v21 = vld [vmem:[%s0] sm:$0xf]
  %v22 = vld [vmem:[%s0 + $0x4] sm:$0xf]
  %v23 = vld [vmem:[%s0 + $0x8] sm:$0xf]
  %v24 = vld [vmem:[%s0 + $0xc] sm:$0xf]
  %v25 = vld [vmem:[%s0 + $0x10] sm:$0xf]
  %v26 = vld [vmem:[%s0 + $0x14] sm:$0xf]
  %v27 = vld [vmem:[%s0 + $0x18] sm:$0xf]
  %v28 = vld [vmem:[%s0 + $0x1c] sm:$0xf]
  %v29 = vld [vmem:[%s0 + $0x20] sm:$0xf]
  %v30 = vld [vmem:[%s0 + $0x24] sm:$0xf]
  %v31 = vld [vmem:[%s0 + $0x28] sm:$0xf]
  %v32 = vld [vmem:[%s0 + $0x2c] sm:$0xf]
  %v33 = vld [vmem:[%s0 + $0x30] sm:$0xf]
  %v34 = vld [vmem:[%s0 + $0x34] sm:$0xf]
  %v35 = vld [vmem:[%s0 + $0x38] sm:$0xf]
  %v36 = vld [vmem:[%s0 + $0x3c] sm:$0xf]
  %v37 = vld [vmem:[%s0 + $0x40] sm:$0xf]
  %v38 = vld [vmem:[%s0 + $0x44] sm:$0xf]
  %v39 = vld [vmem:[%s0 + $0x48] sm:$0xf]
  %v40 = vld [vmem:[%s0 + $0x4c] sm:$0xf]
  %v41 = vld [vmem:[%s0 + $0x50] sm:$0xf]
  %v42 = vld [vmem:[%s0 + $0x54] sm:$0xf]
  %v43 = vld [vmem:[%s0 + $0x58] sm:$0xf]
  %v44 = vld [vmem:[%s0 + $0x5c] sm:$0xf]
  %v45 = vld [vmem:[%s0 + $0x60] sm:$0xf]
  %v46 = vld [vmem:[%s0 + $0x64] sm:$0xf]
  %v47 = vld [vmem:[%s0 + $0x68] sm:$0xf]
  %v48 = vld [vmem:[%s0 + $0x6c] sm:$0xf]
  %v49 = vld [vmem:[%s0 + $0x70] sm:$0xf]
  %v50 = vld [vmem:[%s0 + $0x74] sm:$0xf]
  %v51 = vld [vmem:[%s0 + $0x78] sm:$0xf]
  %v52 = vld [vmem:[%s0 + $0x7c] sm:$0xf]
  %v53 = vld [vmem:[%s0 + $0x80] sm:$0xf]
  %v54 = vld [vmem:[%s0 + $0x84] sm:$0xf]
  %v55 = vld [vmem:[%s0 + $0x88] sm:$0xf]
  %v56 = vld [vmem:[%s0 + $0x8c] sm:$0xf]
  %v57 = vld [vmem:[%s0 + $0x90] sm:$0xf]
  %v58 = vld [vmem:[%s0 + $0x94] sm:$0xf]
  %v59 = vld [vmem:[%s0 + $0x98] sm:$0xf]
  %v60 = vld [vmem:[%s0 + $0x9c] sm:$0xf]
  %v61 = vld [vmem:[%s0 + $0xa0] sm:$0xf]
  %v62 = vld [vmem:[%s0 + $0xa4] sm:$0xf]
  %v63 = vld [vmem:[%s0 + $0xa8] sm:$0xf]
  %v64 = vld [vmem:[%s0 + $0xac] sm:$0xf]
  %v65 = vld [vmem:[%s0 + $0xb0] sm:$0xf]
  %v66 = vld [vmem:[%s0 + $0xb4] sm:$0xf]
  %v67 = vld [vmem:[%s0 + $0xb8] sm:$0xf]
  %v68 = vld [vmem:[%s0 + $0xbc] sm:$0xf]
  %v69 = vld [vmem:[%s0 + $0xc0] sm:$0xf]
  %v70 = vld [vmem:[%s0 + $0xc4] sm:$0xf]
  %v71 = vld [vmem:[%s0 + $0xc8] sm:$0xf]
  %v72 = vld [vmem:[%s0 + $0xcc] sm:$0xf]
  %v73 = vld [vmem:[%s0 + $0xd0] sm:$0xf]
  %v74 = vld [vmem:[%s0 + $0xd4] sm:$0xf]
  %v75 = vld [vmem:[%s0 + $0xd8] sm:$0xf]
  %v76 = vld [vmem:[%s0 + $0xdc] sm:$0xf]
  %v77 = vld [vmem:[%s0 + $0xe0] sm:$0xf]
  %v78 = vld [vmem:[%s0 + $0xe4] sm:$0xf]
  %v79 = vld [vmem:[%s0 + $0xe8] sm:$0xf]
  %v80 = vld [vmem:[%s0 + $0xec] sm:$0xf]
  %v81 = vld [vmem:[%s0 + $0xf0] sm:$0xf]
  %v82 = vld [vmem:[%s0 + $0xf4] sm:$0xf]
  %v83 = vld [vmem:[%s0 + $0xf8] sm:$0xf]
  %v84 = vld [vmem:[%s0 + $0xfc] sm:$0xf]
  %v85 = vld [vmem:[%s0 + $0x100] sm:$0xf]
  %v86 = vld [vmem:[%s0 + $0x104] sm:$0xf]
  %v87 = vld [vmem:[%s0 + $0x108] sm:$0xf]
  %v88 = vld [vmem:[%s0 + $0x10c] sm:$0xf]
  %v89 = vld [vmem:[%s0 + $0x110] sm:$0xf]
  %v90 = vld [vmem:[%s0 + $0x114] sm:$0xf]
  %v91 = vld [vmem:[%s0 + $0x118] sm:$0xf]
  %v92 = vld [vmem:[%s0 + $0x11c] sm:$0xf]
  %v93 = vld [vmem:[%s0 + $0x120] sm:$0xf]
  %v94 = vld [vmem:[%s0 + $0x124] sm:$0xf]
  %v95 = vld [vmem:[%s0 + $0x128] sm:$0xf]
  %v96 = vld [vmem:[%s0 + $0x12c] sm:$0xf]
  %v97 = vld [vmem:[%s0 + $0x130] sm:$0xf]
  %v98 = vld [vmem:[%s0 + $0x134] sm:$0xf]
  %v99 = vld [vmem:[%s0 + $0x138] sm:$0xf]
  %v100 = vld [vmem:[%s0 + $0x13c] sm:$0xf]
  %v101 = vld [vmem:[%s0 + $0x140] sm:$0xf]
  %v102 = vld [vmem:[%s0 + $0x144] sm:$0xf]
  %v103 = vld [vmem:[%s0 + $0x148] sm:$0xf]
  %v104 = vld [vmem:[%s0 + $0x14c] sm:$0xf]
  %v105 = vld [vmem:[%s0 + $0x150] sm:$0xf]
  %v106 = vld [vmem:[%s0 + $0x154] sm:$0xf]
  %v107 = vld [vmem:[%s0 + $0x158] sm:$0xf]
  %v108 = vld [vmem:[%s0 + $0x15c] sm:$0xf]
  %v109 = vld [vmem:[%s1] sm:$0xf]
  %v110 = vld [vmem:[%s1 + $0x4] sm:$0xf]
  %v111 = vld [vmem:[%s1 + $0x8] sm:$0xf]
  %v112 = vld [vmem:[%s1 + $0xc] sm:$0xf]
  %v201 = vunpack.c.l.b16 %v21
  %v202 = vunpack.c.l.b16 %v22
  %v203 = vunpack.c.l.b16 %v23
  %v204 = vunpack.c.l.b16 %v24
  %v205 = vunpack.c.l.b16 %v25
  %v206 = vunpack.c.l.b16 %v26
  %v207 = vunpack.c.l.b16 %v27
  %v208 = vunpack.c.l.b16 %v28
  %v209 = vunpack.c.l.b16 %v29
  %v210 = vunpack.c.l.b16 %v30
  %v211 = vunpack.c.l.b16 %v31
  %v212 = vunpack.c.l.b16 %v32
  %v213 = vunpack.c.l.b16 %v33
  %v214 = vunpack.c.l.b16 %v34
  %v215 = vunpack.c.l.b16 %v35
  %v216 = vunpack.c.l.b16 %v36
  %v217 = vunpack.c.l.b16 %v37
  %v218 = vunpack.c.l.b16 %v38
  %v219 = vunpack.c.l.b16 %v39
  %v220 = vunpack.c.l.b16 %v40
  %v221 = vunpack.c.l.b16 %v41
  %v222 = vunpack.c.l.b16 %v42
  %v223 = vunpack.c.l.b16 %v43
  %v224 = vunpack.c.l.b16 %v44
  %v225 = vunpack.c.l.b16 %v45
  %v226 = vunpack.c.l.b16 %v46
  %v227 = vunpack.c.l.b16 %v47
  %v228 = vunpack.c.l.b16 %v48
  %v229 = vunpack.c.l.b16 %v49
  %v230 = vunpack.c.l.b16 %v50
  %v231 = vunpack.c.l.b16 %v51
  %v232 = vunpack.c.l.b16 %v52
  %v233 = vunpack.c.l.b16 %v53
  %v234 = vunpack.c.l.b16 %v54
  %v235 = vunpack.c.l.b16 %v55
  %v236 = vunpack.c.l.b16 %v56
  %v237 = vunpack.c.l.b16 %v57
  %v238 = vunpack.c.l.b16 %v58
  %v239 = vunpack.c.l.b16 %v59
  %v240 = vunpack.c.l.b16 %v60
  %v241 = vunpack.c.l.b16 %v61
  %v242 = vunpack.c.l.b16 %v62
  %v243 = vunpack.c.l.b16 %v63
  %v244 = vunpack.c.l.b16 %v64
  %v245 = vunpack.c.l.b16 %v65
  %v246 = vunpack.c.l.b16 %v66
  %v247 = vunpack.c.l.b16 %v67
  %v248 = vunpack.c.l.b16 %v68
  %v249 = vunpack.c.l.b16 %v69
  %v250 = vunpack.c.l.b16 %v70
  %v251 = vunpack.c.l.b16 %v71
  %v252 = vunpack.c.l.b16 %v72
  %v253 = vunpack.c.l.b16 %v73
  %v254 = vunpack.c.l.b16 %v74
  %v255 = vunpack.c.l.b16 %v75
  %v256 = vunpack.c.l.b16 %v76
  %v257 = vunpack.c.l.b16 %v77
  %v258 = vunpack.c.l.b16 %v78
  %v259 = vunpack.c.l.b16 %v79
  %v260 = vunpack.c.l.b16 %v80
  %v261 = vunpack.c.l.b16 %v81
  %v262 = vunpack.c.l.b16 %v82
  %v263 = vunpack.c.l.b16 %v83
  %v264 = vunpack.c.l.b16 %v84
  %v265 = vunpack.c.l.b16 %v85
  %v266 = vunpack.c.l.b16 %v86
  %v267 = vunpack.c.l.b16 %v87
  %v268 = vunpack.c.l.b16 %v88
  %v269 = vunpack.c.l.b16 %v89
  %v270 = vunpack.c.l.b16 %v90
  %v271 = vunpack.c.l.b16 %v91
  %v272 = vunpack.c.l.b16 %v92
  %v273 = vunpack.c.l.b16 %v93
  %v274 = vunpack.c.l.b16 %v94
  %v275 = vunpack.c.l.b16 %v95
  %v276 = vunpack.c.l.b16 %v96
  %v277 = vunpack.c.l.b16 %v97
  %v278 = vunpack.c.l.b16 %v98
  %v279 = vunpack.c.l.b16 %v99
  %v280 = vunpack.c.l.b16 %v100
  %v281 = vunpack.c.l.b16 %v101
  %v282 = vunpack.c.l.b16 %v102
  %v283 = vunpack.c.l.b16 %v103
  %v284 = vunpack.c.l.b16 %v104
  %v285 = vunpack.c.l.b16 %v105
  %v286 = vunpack.c.l.b16 %v106
  %v287 = vunpack.c.l.b16 %v107
  %v288 = vunpack.c.l.b16 %v108
  %v289 = vpack.c.b16 %v202, %v201
  %v290 = vpack.c.b16 %v204, %v203
  %v291 = vpack.c.b16 %v206, %v205
  %v292 = vpack.c.b16 %v208, %v207
  %v293 = vpack.c.b16 %v210, %v209
  %v294 = vpack.c.b16 %v212, %v211
  %v295 = vpack.c.b16 %v214, %v213
  %v296 = vpack.c.b16 %v216, %v215
  %v297 = vpack.c.b16 %v218, %v217
  %v298 = vpack.c.b16 %v220, %v219
  %v299 = vpack.c.b16 %v222, %v221
  %v300 = vpack.c.b16 %v224, %v223
  %v301 = vpack.c.b16 %v226, %v225
  %v302 = vpack.c.b16 %v228, %v227
  %v303 = vpack.c.b16 %v230, %v229
  %v304 = vpack.c.b16 %v232, %v231
  %v305 = vpack.c.b16 %v234, %v233
  %v306 = vpack.c.b16 %v236, %v235
  %v307 = vpack.c.b16 %v238, %v237
  %v308 = vpack.c.b16 %v240, %v239
  %v309 = vpack.c.b16 %v242, %v241
  %v310 = vpack.c.b16 %v244, %v243
  %v311 = vpack.c.b16 %v246, %v245
  %v312 = vpack.c.b16 %v248, %v247
  %v313 = vpack.c.b16 %v250, %v249
  %v314 = vpack.c.b16 %v252, %v251
  %v315 = vpack.c.b16 %v254, %v253
  %v316 = vpack.c.b16 %v256, %v255
  %v317 = vpack.c.b16 %v258, %v257
  %v318 = vpack.c.b16 %v260, %v259
  %v319 = vpack.c.b16 %v262, %v261
  %v320 = vpack.c.b16 %v264, %v263
  %v321 = vpack.c.b16 %v266, %v265
  %v322 = vpack.c.b16 %v268, %v267
  %v323 = vpack.c.b16 %v270, %v269
  %v324 = vpack.c.b16 %v272, %v271
  %v325 = vpack.c.b16 %v274, %v273
  %v326 = vpack.c.b16 %v276, %v275
  %v327 = vpack.c.b16 %v278, %v277
  %v328 = vpack.c.b16 %v280, %v279
  %v329 = vpack.c.b16 %v282, %v281
  %v330 = vpack.c.b16 %v284, %v283
  %v331 = vpack.c.b16 %v286, %v285
  %v332 = vpack.c.b16 %v288, %v287
  %v337 = vunpack.c.l.b16 %v109
  %v338 = vunpack.c.l.b16 %v110
  %v339 = vunpack.c.l.b16 %v111
  %v340 = vunpack.c.l.b16 %v112
  %v341 = vpack.c.b16 %v338, %v337
  %v342 = vpack.c.b16 %v340, %v339
  %vm345 = vcmask 261120
  %v347 = vsel %vm345, %v289, 0
  %v350 = vsel %vm345, %v290, 0
  %v353 = vsel %vm345, %v291, 0
  %v356 = vsel %vm345, %v292, 0
  %v359 = vsel %vm345, %v293, 0
  %v362 = vsel %vm345, %v294, 0
  %v365 = vsel %vm345, %v295, 0
  %v368 = vsel %vm345, %v296, 0
  %v371 = vsel %vm345, %v297, 0
  %v374 = vsel %vm345, %v298, 0
  %v377 = vsel %vm345, %v299, 0
  %v380 = vsel %vm345, %v300, 0
  %v383 = vsel %vm345, %v301, 0
  %v386 = vsel %vm345, %v302, 0
  %v389 = vsel %vm345, %v303, 0
  %v392 = vsel %vm345, %v304, 0
  %v395 = vsel %vm345, %v305, 0
  %v398 = vsel %vm345, %v306, 0
  %v401 = vsel %vm345, %v307, 0
  %v404 = vsel %vm345, %v308, 0
  %v407 = vsel %vm345, %v309, 0
  %v410 = vsel %vm345, %v310, 0
  %v413 = vsel %vm345, %v311, 0
  %v416 = vsel %vm345, %v312, 0
  %v419 = vsel %vm345, %v313, 0
  %v422 = vsel %vm345, %v314, 0
  %v425 = vsel %vm345, %v315, 0
  %v428 = vsel %vm345, %v316, 0
  %v431 = vsel %vm345, %v317, 0
  %v434 = vsel %vm345, %v318, 0
  %v437 = vsel %vm345, %v319, 0
  %v440 = vsel %vm345, %v320, 0
  %v443 = vsel %vm345, %v321, 0
  %v446 = vsel %vm345, %v322, 0
  %v449 = vsel %vm345, %v323, 0
  %v452 = vsel %vm345, %v324, 0
  %v455 = vsel %vm345, %v325, 0
  %v458 = vsel %vm345, %v326, 0
  %v461 = vsel %vm345, %v327, 0
  %v464 = vsel %vm345, %v328, 0
  %v467 = vsel %vm345, %v329, 0
  %v470 = vsel %vm345, %v330, 0
  %v473 = vsel %vm345, %v331, 0
  %v476 = vsel %vm345, %v332, 0
  %478 = vmatprep.subr.bf16.mxu0 0
  %479 = vmatpush1.bf16.msra.mxu0 %v341
  %480 = vmatprep.subr.bf16.mxu0 0
  %481 = vmatpush1.bf16.msra.mxu0 %v342
  %482 = vmatprep.subr.bf16.mxu0 0
  %483 = vmatpush1.bf16.msra.mxu0 0
  %484 = vmatprep.subr.bf16.mxu0 0
  %485 = vmatpush1.bf16.msra.mxu0 0
  %486 = vmatprep.subr.bf16.mxu0 0
  %487 = vmatpush1.bf16.msra.mxu0 0
  %488 = vmatprep.subr.bf16.mxu0 0
  %489 = vmatpush1.bf16.msra.mxu0 0
  %490 = vmatprep.subr.bf16.mxu0 0
  %491 = vmatpush1.bf16.msra.mxu0 0
  %492 = vmatprep.subr.bf16.mxu0 0
  %493 = vmatpush1.bf16.msra.mxu0 0
  %494 = vmatprep.subr.bf16.mxu0 0
  %495 = vmatpush1.bf16.msra.mxu0 0
  %496 = vmatprep.subr.bf16.mxu0 0
  %497 = vmatpush1.bf16.msra.mxu0 0
  %498 = vmatprep.subr.bf16.mxu0 0
  %499 = vmatpush1.bf16.msra.mxu0 0
  %500 = vmatprep.subr.bf16.mxu0 0
  %501 = vmatpush1.bf16.msra.mxu0 0
  %502 = vmatprep.subr.bf16.mxu0 0
  %503 = vmatpush1.bf16.msra.mxu0 0
  %504 = vmatprep.subr.bf16.mxu0 0
  %505 = vmatpush1.bf16.msra.mxu0 0
  %506 = vmatprep.subr.bf16.mxu0 0
  %507 = vmatpush1.bf16.msra.mxu0 0
  %508 = vmatprep.subr.bf16.mxu0 0
  %509 = vmatpush1.bf16.msra.mxu0 0
  %510 = vmatprep.mubr.bf16.mxu0 0
  %511 = vmatmul.mubr.bf16.gmra.mrb[0].mxu0 %v347
  %v512 = vpop.f32.mrb[0].mxu0
  %v513 = vadd.f32 0.0, %v512
  %v514 = vpop.f32.mrb[0].mxu0
  %v515 = vpop.f32.mrb[0].mxu0
  %v516 = vadd.f32 0.0, %v515
  %v517 = vpop.f32.mrb[0].mxu0
  %518 = vmatprep.mubr.bf16.mxu0 0
  %519 = vmatmul.mubr.bf16.gmra.mrb[0].mxu0 %v350
  %v520 = vpop.f32.mrb[0].mxu0
  %v521 = vadd.f32 0.0, %v520
  %v522 = vpop.f32.mrb[0].mxu0
  %v523 = vpop.f32.mrb[0].mxu0
  %v524 = vadd.f32 0.0, %v523
  %v525 = vpop.f32.mrb[0].mxu0
  %526 = vmatprep.mubr.bf16.mxu0 0
  %527 = vmatmul.mubr.bf16.gmra.mrb[0].mxu0 %v353
  %v528 = vpop.f32.mrb[0].mxu0
  %v529 = vadd.f32 0.0, %v528
  %v530 = vpop.f32.mrb[0].mxu0
  %v531 = vpop.f32.mrb[0].mxu0
  %v532 = vadd.f32 0.0, %v531
  %v533 = vpop.f32.mrb[0].mxu0
  %534 = vmatprep.mubr.bf16.mxu0 0
  %535 = vmatmul.mubr.bf16.gmra.mrb[0].mxu0 %v356
  %v536 = vpop.f32.mrb[0].mxu0
  %v537 = vadd.f32 0.0, %v536
  %v538 = vpop.f32.mrb[0].mxu0
  %v539 = vpop.f32.mrb[0].mxu0
  %v540 = vadd.f32 0.0, %v539
  %v541 = vpop.f32.mrb[0].mxu0
  %542 = vmatprep.mubr.bf16.mxu0 0
  %543 = vmatmul.mubr.bf16.gmra.mrb[0].mxu0 %v359
  %v544 = vpop.f32.mrb[0].mxu0
  %v545 = vadd.f32 0.0, %v544
  %v546 = vpop.f32.mrb[0].mxu0
  %v547 = vpop.f32.mrb[0].mxu0
  %v548 = vadd.f32 0.0, %v547
  %v549 = vpop.f32.mrb[0].mxu0
  %550 = vmatprep.mubr.bf16.mxu0 0
  %551 = vmatmul.mubr.bf16.gmra.mrb[0].mxu0 %v362
  %v552 = vpop.f32.mrb[0].mxu0
  %v553 = vadd.f32 0.0, %v552
  %v554 = vpop.f32.mrb[0].mxu0
  %v555 = vpop.f32.mrb[0].mxu0
  %v556 = vadd.f32 0.0, %v555
  %v557 = vpop.f32.mrb[0].mxu0
  %558 = vmatprep.mubr.bf16.mxu0 0
  %559 = vmatmul.mubr.bf16.gmra.mrb[0].mxu0 %v365
  %v560 = vpop.f32.mrb[0].mxu0
  %v561 = vadd.f32 0.0, %v560
  %v562 = vpop.f32.mrb[0].mxu0
  %v563 = vpop.f32.mrb[0].mxu0
  %v564 = vadd.f32 0.0, %v563
  %v565 = vpop.f32.mrb[0].mxu0
  %566 = vmatprep.mubr.bf16.mxu0 0
  %567 = vmatmul.mubr.bf16.gmra.mrb[0].mxu0 %v368
  %v568 = vpop.f32.mrb[0].mxu0
  %v569 = vadd.f32 0.0, %v568
  %v570 = vpop.f32.mrb[0].mxu0
  %v571 = vpop.f32.mrb[0].mxu0
  %v572 = vadd.f32 0.0, %v571
  %v573 = vpop.f32.mrb[0].mxu0
  %574 = vmatprep.mubr.bf16.mxu0 0
  %575 = vmatmul.mubr.bf16.gmra.mrb[0].mxu0 %v371
  %v576 = vpop.f32.mrb[0].mxu0
  %v577 = vadd.f32 0.0, %v576
  %v578 = vpop.f32.mrb[0].mxu0
  %v579 = vpop.f32.mrb[0].mxu0
  %v580 = vadd.f32 0.0, %v579
  %v581 = vpop.f32.mrb[0].mxu0
  %582 = vmatprep.mubr.bf16.mxu0 0
  %583 = vmatmul.mubr.bf16.gmra.mrb[0].mxu0 %v374
  %v584 = vpop.f32.mrb[0].mxu0
  %v585 = vadd.f32 0.0, %v584
  %v586 = vpop.f32.mrb[0].mxu0
  %v587 = vpop.f32.mrb[0].mxu0
  %v588 = vadd.f32 0.0, %v587
  %v589 = vpop.f32.mrb[0].mxu0
  %590 = vmatprep.mubr.bf16.mxu0 0
  %591 = vmatmul.mubr.bf16.gmra.mrb[0].mxu0 %v377
  %v592 = vpop.f32.mrb[0].mxu0
  %v593 = vadd.f32 0.0, %v592
  %v594 = vpop.f32.mrb[0].mxu0
  %v595 = vpop.f32.mrb[0].mxu0
  %v596 = vadd.f32 0.0, %v595
  %v597 = vpop.f32.mrb[0].mxu0
  %598 = vmatprep.mubr.bf16.mxu0 0
  %599 = vmatmul.mubr.bf16.gmra.mrb[0].mxu0 %v380
  %v600 = vpop.f32.mrb[0].mxu0
  %v601 = vadd.f32 0.0, %v600
  %v602 = vpop.f32.mrb[0].mxu0
  %v603 = vpop.f32.mrb[0].mxu0
  %v604 = vadd.f32 0.0, %v603
  %v605 = vpop.f32.mrb[0].mxu0
  %606 = vmatprep.mubr.bf16.mxu0 0
  %607 = vmatmul.mubr.bf16.gmra.mrb[0].mxu0 %v383
  %v608 = vpop.f32.mrb[0].mxu0
  %v609 = vadd.f32 0.0, %v608
  %v610 = vpop.f32.mrb[0].mxu0
  %v611 = vpop.f32.mrb[0].mxu0
  %v612 = vadd.f32 0.0, %v611
  %v613 = vpop.f32.mrb[0].mxu0
  %614 = vmatprep.mubr.bf16.mxu0 0
  %615 = vmatmul.mubr.bf16.gmra.mrb[0].mxu0 %v386
  %v616 = vpop.f32.mrb[0].mxu0
  %v617 = vadd.f32 0.0, %v616
  %v618 = vpop.f32.mrb[0].mxu0
  %v619 = vpop.f32.mrb[0].mxu0
  %v620 = vadd.f32 0.0, %v619
  %v621 = vpop.f32.mrb[0].mxu0
  %622 = vmatprep.mubr.bf16.mxu0 0
  %623 = vmatmul.mubr.bf16.gmra.mrb[0].mxu0 %v389
  %v624 = vpop.f32.mrb[0].mxu0
  %v625 = vadd.f32 0.0, %v624
  %v626 = vpop.f32.mrb[0].mxu0
  %v627 = vpop.f32.mrb[0].mxu0
  %v628 = vadd.f32 0.0, %v627
  %v629 = vpop.f32.mrb[0].mxu0
  %630 = vmatprep.mubr.bf16.mxu0 0
  %631 = vmatmul.mubr.bf16.gmra.mrb[0].mxu0 %v392
  %v632 = vpop.f32.mrb[0].mxu0
  %v633 = vadd.f32 0.0, %v632
  %v634 = vpop.f32.mrb[0].mxu0
  %v635 = vpop.f32.mrb[0].mxu0
  %v636 = vadd.f32 0.0, %v635
  %v637 = vpop.f32.mrb[0].mxu0
  %638 = vmatprep.mubr.bf16.mxu0 0
  %639 = vmatmul.mubr.bf16.gmra.mrb[0].mxu0 %v395
  %v640 = vpop.f32.mrb[0].mxu0
  %v641 = vadd.f32 0.0, %v640
  %v642 = vpop.f32.mrb[0].mxu0
  %v643 = vpop.f32.mrb[0].mxu0
  %v644 = vadd.f32 0.0, %v643
  %v645 = vpop.f32.mrb[0].mxu0
  %646 = vmatprep.mubr.bf16.mxu0 0
  %647 = vmatmul.mubr.bf16.gmra.mrb[0].mxu0 %v398
  %v648 = vpop.f32.mrb[0].mxu0
  %v649 = vadd.f32 0.0, %v648
  %v650 = vpop.f32.mrb[0].mxu0
  %v651 = vpop.f32.mrb[0].mxu0
  %v652 = vadd.f32 0.0, %v651
  %v653 = vpop.f32.mrb[0].mxu0
  %654 = vmatprep.mubr.bf16.mxu0 0
  %655 = vmatmul.mubr.bf16.gmra.mrb[0].mxu0 %v401
  %v656 = vpop.f32.mrb[0].mxu0
  %v657 = vadd.f32 0.0, %v656
  %v658 = vpop.f32.mrb[0].mxu0
  %v659 = vpop.f32.mrb[0].mxu0
  %v660 = vadd.f32 0.0, %v659
  %v661 = vpop.f32.mrb[0].mxu0
  %662 = vmatprep.mubr.bf16.mxu0 0
  %663 = vmatmul.mubr.bf16.gmra.mrb[0].mxu0 %v404
  %v664 = vpop.f32.mrb[0].mxu0
  %v665 = vadd.f32 0.0, %v664
  %v666 = vpop.f32.mrb[0].mxu0
  %v667 = vpop.f32.mrb[0].mxu0
  %v668 = vadd.f32 0.0, %v667
  %v669 = vpop.f32.mrb[0].mxu0
  %670 = vmatprep.mubr.bf16.mxu0 0
  %671 = vmatmul.mubr.bf16.gmra.mrb[0].mxu0 %v407
  %v672 = vpop.f32.mrb[0].mxu0
  %v673 = vadd.f32 0.0, %v672
  %v674 = vpop.f32.mrb[0].mxu0
  %v675 = vpop.f32.mrb[0].mxu0
  %v676 = vadd.f32 0.0, %v675
  %v677 = vpop.f32.mrb[0].mxu0
  %678 = vmatprep.mubr.bf16.mxu0 0
  %679 = vmatmul.mubr.bf16.gmra.mrb[0].mxu0 %v410
  %v680 = vpop.f32.mrb[0].mxu0
  %v681 = vadd.f32 0.0, %v680
  %v682 = vpop.f32.mrb[0].mxu0
  %v683 = vpop.f32.mrb[0].mxu0
  %v684 = vadd.f32 0.0, %v683
  %v685 = vpop.f32.mrb[0].mxu0
  %686 = vmatprep.mubr.bf16.mxu0 0
  %687 = vmatmul.mubr.bf16.gmra.mrb[0].mxu0 %v413
  %v688 = vpop.f32.mrb[0].mxu0
  %v689 = vadd.f32 0.0, %v688
  %v690 = vpop.f32.mrb[0].mxu0
  %v691 = vpop.f32.mrb[0].mxu0
  %v692 = vadd.f32 0.0, %v691
  %v693 = vpop.f32.mrb[0].mxu0
  %694 = vmatprep.mubr.bf16.mxu0 0
  %695 = vmatmul.mubr.bf16.gmra.mrb[0].mxu0 %v416
  %v696 = vpop.f32.mrb[0].mxu0
  %v697 = vadd.f32 0.0, %v696
  %v698 = vpop.f32.mrb[0].mxu0
  %v699 = vpop.f32.mrb[0].mxu0
  %v700 = vadd.f32 0.0, %v699
  %v701 = vpop.f32.mrb[0].mxu0
  %702 = vmatprep.mubr.bf16.mxu0 0
  %703 = vmatmul.mubr.bf16.gmra.mrb[0].mxu0 %v419
  %v704 = vpop.f32.mrb[0].mxu0
  %v705 = vadd.f32 0.0, %v704
  %v706 = vpop.f32.mrb[0].mxu0
  %v707 = vpop.f32.mrb[0].mxu0
  %v708 = vadd.f32 0.0, %v707
  %v709 = vpop.f32.mrb[0].mxu0
  %710 = vmatprep.mubr.bf16.mxu0 0
  %711 = vmatmul.mubr.bf16.gmra.mrb[0].mxu0 %v422
  %v712 = vpop.f32.mrb[0].mxu0
  %v713 = vadd.f32 0.0, %v712
  %v714 = vpop.f32.mrb[0].mxu0
  %v715 = vpop.f32.mrb[0].mxu0
  %v716 = vadd.f32 0.0, %v715
  %v717 = vpop.f32.mrb[0].mxu0
  %718 = vmatprep.mubr.bf16.mxu0 0
  %719 = vmatmul.mubr.bf16.gmra.mrb[0].mxu0 %v425
  %v720 = vpop.f32.mrb[0].mxu0
  %v721 = vadd.f32 0.0, %v720
  %v722 = vpop.f32.mrb[0].mxu0
  %v723 = vpop.f32.mrb[0].mxu0
  %v724 = vadd.f32 0.0, %v723
  %v725 = vpop.f32.mrb[0].mxu0
  %726 = vmatprep.mubr.bf16.mxu0 0
  %727 = vmatmul.mubr.bf16.gmra.mrb[0].mxu0 %v428
  %v728 = vpop.f32.mrb[0].mxu0
  %v729 = vadd.f32 0.0, %v728
  %v730 = vpop.f32.mrb[0].mxu0
  %v731 = vpop.f32.mrb[0].mxu0
  %v732 = vadd.f32 0.0, %v731
  %v733 = vpop.f32.mrb[0].mxu0
  %734 = vmatprep.mubr.bf16.mxu0 0
  %735 = vmatmul.mubr.bf16.gmra.mrb[0].mxu0 %v431
  %v736 = vpop.f32.mrb[0].mxu0
  %v737 = vadd.f32 0.0, %v736
  %v738 = vpop.f32.mrb[0].mxu0
  %v739 = vpop.f32.mrb[0].mxu0
  %v740 = vadd.f32 0.0, %v739
  %v741 = vpop.f32.mrb[0].mxu0
  %742 = vmatprep.mubr.bf16.mxu0 0
  %743 = vmatmul.mubr.bf16.gmra.mrb[0].mxu0 %v434
  %v744 = vpop.f32.mrb[0].mxu0
  %v745 = vadd.f32 0.0, %v744
  %v746 = vpop.f32.mrb[0].mxu0
  %v747 = vpop.f32.mrb[0].mxu0
  %v748 = vadd.f32 0.0, %v747
  %v749 = vpop.f32.mrb[0].mxu0
  %750 = vmatprep.mubr.bf16.mxu0 0
  %751 = vmatmul.mubr.bf16.gmra.mrb[0].mxu0 %v437
  %v752 = vpop.f32.mrb[0].mxu0
  %v753 = vadd.f32 0.0, %v752
  %v754 = vpop.f32.mrb[0].mxu0
  %v755 = vpop.f32.mrb[0].mxu0
  %v756 = vadd.f32 0.0, %v755
  %v757 = vpop.f32.mrb[0].mxu0
  %758 = vmatprep.mubr.bf16.mxu0 0
  %759 = vmatmul.mubr.bf16.gmra.mrb[0].mxu0 %v440
  %v760 = vpop.f32.mrb[0].mxu0
  %v761 = vadd.f32 0.0, %v760
  %v762 = vpop.f32.mrb[0].mxu0
  %v763 = vpop.f32.mrb[0].mxu0
  %v764 = vadd.f32 0.0, %v763
  %v765 = vpop.f32.mrb[0].mxu0
  %766 = vmatprep.mubr.bf16.mxu0 0
  %767 = vmatmul.mubr.bf16.gmra.mrb[0].mxu0 %v443
  %v768 = vpop.f32.mrb[0].mxu0
  %v769 = vadd.f32 0.0, %v768
  %v770 = vpop.f32.mrb[0].mxu0
  %v771 = vpop.f32.mrb[0].mxu0
  %v772 = vadd.f32 0.0, %v771
  %v773 = vpop.f32.mrb[0].mxu0
  %774 = vmatprep.mubr.bf16.mxu0 0
  %775 = vmatmul.mubr.bf16.gmra.mrb[0].mxu0 %v446
  %v776 = vpop.f32.mrb[0].mxu0
  %v777 = vadd.f32 0.0, %v776
  %v778 = vpop.f32.mrb[0].mxu0
  %v779 = vpop.f32.mrb[0].mxu0
  %v780 = vadd.f32 0.0, %v779
  %v781 = vpop.f32.mrb[0].mxu0
  %782 = vmatprep.mubr.bf16.mxu0 0
  %783 = vmatmul.mubr.bf16.gmra.mrb[0].mxu0 %v449
  %v784 = vpop.f32.mrb[0].mxu0
  %v785 = vadd.f32 0.0, %v784
  %v786 = vpop.f32.mrb[0].mxu0
  %v787 = vpop.f32.mrb[0].mxu0
  %v788 = vadd.f32 0.0, %v787
  %v789 = vpop.f32.mrb[0].mxu0
  %790 = vmatprep.mubr.bf16.mxu0 0
  %791 = vmatmul.mubr.bf16.gmra.mrb[0].mxu0 %v452
  %v792 = vpop.f32.mrb[0].mxu0
  %v793 = vadd.f32 0.0, %v792
  %v794 = vpop.f32.mrb[0].mxu0
  %v795 = vpop.f32.mrb[0].mxu0
  %v796 = vadd.f32 0.0, %v795
  %v797 = vpop.f32.mrb[0].mxu0
  %798 = vmatprep.mubr.bf16.mxu0 0
  %799 = vmatmul.mubr.bf16.gmra.mrb[0].mxu0 %v455
  %v800 = vpop.f32.mrb[0].mxu0
  %v801 = vadd.f32 0.0, %v800
  %v802 = vpop.f32.mrb[0].mxu0
  %v803 = vpop.f32.mrb[0].mxu0
  %v804 = vadd.f32 0.0, %v803
  %v805 = vpop.f32.mrb[0].mxu0
  %806 = vmatprep.mubr.bf16.mxu0 0
  %807 = vmatmul.mubr.bf16.gmra.mrb[0].mxu0 %v458
  %v808 = vpop.f32.mrb[0].mxu0
  %v809 = vadd.f32 0.0, %v808
  %v810 = vpop.f32.mrb[0].mxu0
  %v811 = vpop.f32.mrb[0].mxu0
  %v812 = vadd.f32 0.0, %v811
  %v813 = vpop.f32.mrb[0].mxu0
  %814 = vmatprep.mubr.bf16.mxu0 0
  %815 = vmatmul.mubr.bf16.gmra.mrb[0].mxu0 %v461
  %v816 = vpop.f32.mrb[0].mxu0
  %v817 = vadd.f32 0.0, %v816
  %v818 = vpop.f32.mrb[0].mxu0
  %v819 = vpop.f32.mrb[0].mxu0
  %v820 = vadd.f32 0.0, %v819
  %v821 = vpop.f32.mrb[0].mxu0
  %822 = vmatprep.mubr.bf16.mxu0 0
  %823 = vmatmul.mubr.bf16.gmra.mrb[0].mxu0 %v464
  %v824 = vpop.f32.mrb[0].mxu0
  %v825 = vadd.f32 0.0, %v824
  %v826 = vpop.f32.mrb[0].mxu0
  %v827 = vpop.f32.mrb[0].mxu0
  %v828 = vadd.f32 0.0, %v827
  %v829 = vpop.f32.mrb[0].mxu0
  %830 = vmatprep.mubr.bf16.mxu0 0
  %831 = vmatmul.mubr.bf16.gmra.mrb[0].mxu0 %v467
  %v832 = vpop.f32.mrb[0].mxu0
  %v833 = vadd.f32 0.0, %v832
  %v834 = vpop.f32.mrb[0].mxu0
  %v835 = vpop.f32.mrb[0].mxu0
  %v836 = vadd.f32 0.0, %v835
  %v837 = vpop.f32.mrb[0].mxu0
  %838 = vmatprep.mubr.bf16.mxu0 0
  %839 = vmatmul.mubr.bf16.gmra.mrb[0].mxu0 %v470
  %v840 = vpop.f32.mrb[0].mxu0
  %v841 = vadd.f32 0.0, %v840
  %v842 = vpop.f32.mrb[0].mxu0
  %v843 = vpop.f32.mrb[0].mxu0
  %v844 = vadd.f32 0.0, %v843
  %v845 = vpop.f32.mrb[0].mxu0
  %846 = vmatprep.mubr.bf16.mxu0 0
  %847 = vmatmul.mubr.bf16.gmra.mrb[0].mxu0 %v473
  %v848 = vpop.f32.mrb[0].mxu0
  %v849 = vadd.f32 0.0, %v848
  %v850 = vpop.f32.mrb[0].mxu0
  %v851 = vpop.f32.mrb[0].mxu0
  %v852 = vadd.f32 0.0, %v851
  %v853 = vpop.f32.mrb[0].mxu0
  %854 = vmatprep.mubr.bf16.mxu0 0
  %855 = vmatmul.mubr.bf16.gmra.mrb[0].mxu0 %v476
  %v856 = vpop.f32.mrb[0].mxu0
  %v857 = vadd.f32 0.0, %v856
  %v858 = vpop.f32.mrb[0].mxu0
  %v859 = vpop.f32.mrb[0].mxu0
  %v860 = vadd.f32 0.0, %v859
  %v861 = vpop.f32.mrb[0].mxu0
  %862 = vdwg.mxu0
  %vm863 = vcmask 523264
  %v864 = vsel %vm863, %v513, 0.0
  %v865 = vsel %vm863, %v516, 0.0
  %v866 = vadd.f32 %v864, %v865
  %v867 = vsel %vm863, %v521, 0.0
  %v868 = vadd.f32 %v866, %v867
  %v869 = vsel %vm863, %v524, 0.0
  %v870 = vadd.f32 %v868, %v869
  %v871 = vsel %vm863, %v529, 0.0
  %v872 = vadd.f32 %v870, %v871
  %v873 = vsel %vm863, %v532, 0.0
  %v874 = vadd.f32 %v872, %v873
  %v875 = vsel %vm863, %v537, 0.0
  %v876 = vadd.f32 %v874, %v875
  %v877 = vsel %vm863, %v540, 0.0
  %v878 = vadd.f32 %v876, %v877
  %v879 = vsel %vm863, %v545, 0.0
  %v880 = vadd.f32 %v878, %v879
  %v881 = vsel %vm863, %v548, 0.0
  %v882 = vadd.f32 %v880, %v881
  %v883 = vsel %vm863, %v553, 0.0
  %v884 = vadd.f32 %v882, %v883
  %v885 = vsel %vm863, %v556, 0.0
  %v886 = vadd.f32 %v884, %v885
  %v887 = vsel %vm863, %v561, 0.0
  %v888 = vadd.f32 %v886, %v887
  %v889 = vsel %vm863, %v564, 0.0
  %v890 = vadd.f32 %v888, %v889
  %v891 = vsel %vm863, %v569, 0.0
  %v892 = vadd.f32 %v890, %v891
  %v893 = vsel %vm863, %v572, 0.0
  %v894 = vadd.f32 %v892, %v893
  %v895 = vsel %vm863, %v577, 0.0
  %v896 = vadd.f32 %v894, %v895
  %v897 = vsel %vm863, %v580, 0.0
  %v898 = vadd.f32 %v896, %v897
  %v899 = vsel %vm863, %v585, 0.0
  %v900 = vadd.f32 %v898, %v899
  %v901 = vsel %vm863, %v588, 0.0
  %v902 = vadd.f32 %v900, %v901
  %v903 = vsel %vm863, %v593, 0.0
  %v904 = vadd.f32 %v902, %v903
  %v905 = vsel %vm863, %v596, 0.0
  %v906 = vadd.f32 %v904, %v905
  %v907 = vsel %vm863, %v601, 0.0
  %v908 = vadd.f32 %v906, %v907
  %v909 = vsel %vm863, %v604, 0.0
  %v910 = vadd.f32 %v908, %v909
  %v911 = vsel %vm863, %v609, 0.0
  %v912 = vadd.f32 %v910, %v911
  %v913 = vsel %vm863, %v612, 0.0
  %v914 = vadd.f32 %v912, %v913
  %v915 = vsel %vm863, %v617, 0.0
  %v916 = vadd.f32 %v914, %v915
  %v917 = vsel %vm863, %v620, 0.0
  %v918 = vadd.f32 %v916, %v917
  %v919 = vsel %vm863, %v625, 0.0
  %v920 = vadd.f32 %v918, %v919
  %v921 = vsel %vm863, %v628, 0.0
  %v922 = vadd.f32 %v920, %v921
  %v923 = vsel %vm863, %v633, 0.0
  %v924 = vadd.f32 %v922, %v923
  %v925 = vsel %vm863, %v636, 0.0
  %v926 = vadd.f32 %v924, %v925
  %v927 = vsel %vm863, %v641, 0.0
  %v928 = vadd.f32 %v926, %v927
  %v929 = vsel %vm863, %v644, 0.0
  %v930 = vadd.f32 %v928, %v929
  %v931 = vsel %vm863, %v649, 0.0
  %v932 = vadd.f32 %v930, %v931
  %v933 = vsel %vm863, %v652, 0.0
  %v934 = vadd.f32 %v932, %v933
  %v935 = vsel %vm863, %v657, 0.0
  %v936 = vadd.f32 %v934, %v935
  %v937 = vsel %vm863, %v660, 0.0
  %v938 = vadd.f32 %v936, %v937
  %v939 = vsel %vm863, %v665, 0.0
  %v940 = vadd.f32 %v938, %v939
  %v941 = vsel %vm863, %v668, 0.0
  %v942 = vadd.f32 %v940, %v941
  %v943 = vsel %vm863, %v673, 0.0
  %v944 = vadd.f32 %v942, %v943
  %v945 = vsel %vm863, %v676, 0.0
  %v946 = vadd.f32 %v944, %v945
  %v947 = vsel %vm863, %v681, 0.0
  %v948 = vadd.f32 %v946, %v947
  %v949 = vsel %vm863, %v684, 0.0
  %v950 = vadd.f32 %v948, %v949
  %v951 = vsel %vm863, %v689, 0.0
  %v952 = vadd.f32 %v950, %v951
  %v953 = vsel %vm863, %v692, 0.0
  %v954 = vadd.f32 %v952, %v953
  %v955 = vsel %vm863, %v697, 0.0
  %v956 = vadd.f32 %v954, %v955
  %v957 = vsel %vm863, %v700, 0.0
  %v958 = vadd.f32 %v956, %v957
  %v959 = vsel %vm863, %v705, 0.0
  %v960 = vadd.f32 %v958, %v959
  %v961 = vsel %vm863, %v708, 0.0
  %v962 = vadd.f32 %v960, %v961
  %v963 = vsel %vm863, %v713, 0.0
  %v964 = vadd.f32 %v962, %v963
  %v965 = vsel %vm863, %v716, 0.0
  %v966 = vadd.f32 %v964, %v965
  %v967 = vsel %vm863, %v721, 0.0
  %v968 = vadd.f32 %v966, %v967
  %v969 = vsel %vm863, %v724, 0.0
  %v970 = vadd.f32 %v968, %v969
  %v971 = vsel %vm863, %v729, 0.0
  %v972 = vadd.f32 %v970, %v971
  %v973 = vsel %vm863, %v732, 0.0
  %v974 = vadd.f32 %v972, %v973
  %v975 = vsel %vm863, %v737, 0.0
  %v976 = vadd.f32 %v974, %v975
  %v977 = vsel %vm863, %v740, 0.0
  %v978 = vadd.f32 %v976, %v977
  %v979 = vsel %vm863, %v745, 0.0
  %v980 = vadd.f32 %v978, %v979
  %v981 = vsel %vm863, %v748, 0.0
  %v982 = vadd.f32 %v980, %v981
  %v983 = vsel %vm863, %v753, 0.0
  %v984 = vadd.f32 %v982, %v983
  %v985 = vsel %vm863, %v756, 0.0
  %v986 = vadd.f32 %v984, %v985
  %v987 = vsel %vm863, %v761, 0.0
  %v988 = vadd.f32 %v986, %v987
  %v989 = vsel %vm863, %v764, 0.0
  %v990 = vadd.f32 %v988, %v989
  %v991 = vsel %vm863, %v769, 0.0
  %v992 = vadd.f32 %v990, %v991
  %v993 = vsel %vm863, %v772, 0.0
  %v994 = vadd.f32 %v992, %v993
  %v995 = vsel %vm863, %v777, 0.0
  %v996 = vadd.f32 %v994, %v995
  %v997 = vsel %vm863, %v780, 0.0
  %v998 = vadd.f32 %v996, %v997
  %v999 = vsel %vm863, %v785, 0.0
  %v1000 = vadd.f32 %v998, %v999
  %v1001 = vsel %vm863, %v788, 0.0
  %v1002 = vadd.f32 %v1000, %v1001
  %v1003 = vsel %vm863, %v793, 0.0
  %v1004 = vadd.f32 %v1002, %v1003
  %v1005 = vsel %vm863, %v796, 0.0
  %v1006 = vadd.f32 %v1004, %v1005
  %v1007 = vsel %vm863, %v801, 0.0
  %v1008 = vadd.f32 %v1006, %v1007
  %v1009 = vsel %vm863, %v804, 0.0
  %v1010 = vadd.f32 %v1008, %v1009
  %v1011 = vsel %vm863, %v809, 0.0
  %v1012 = vadd.f32 %v1010, %v1011
  %v1013 = vsel %vm863, %v812, 0.0
  %v1014 = vadd.f32 %v1012, %v1013
  %v1015 = vsel %vm863, %v817, 0.0
  %v1016 = vadd.f32 %v1014, %v1015
  %v1017 = vsel %vm863, %v820, 0.0
  %v1018 = vadd.f32 %v1016, %v1017
  %v1019 = vsel %vm863, %v825, 0.0
  %v1020 = vadd.f32 %v1018, %v1019
  %v1021 = vsel %vm863, %v828, 0.0
  %v1022 = vadd.f32 %v1020, %v1021
  %v1023 = vsel %vm863, %v833, 0.0
  %v1024 = vadd.f32 %v1022, %v1023
  %v1025 = vsel %vm863, %v836, 0.0
  %v1026 = vadd.f32 %v1024, %v1025
  %v1027 = vsel %vm863, %v841, 0.0
  %v1028 = vadd.f32 %v1026, %v1027
  %v1029 = vsel %vm863, %v844, 0.0
  %v1030 = vadd.f32 %v1028, %v1029
  %v1031 = vsel %vm863, %v849, 0.0
  %v1032 = vadd.f32 %v1030, %v1031
  %v1033 = vsel %vm863, %v852, 0.0
  %v1034 = vadd.f32 %v1032, %v1033
  %v1035 = vsel %vm863, %v857, 0.0
  %v1036 = vadd.f32 %v1034, %v1035
  %v1037 = vsel %vm863, %v860, 0.0
  %v1038 = vadd.f32 %v1036, %v1037
  %v1039 = vrot.slane %v1038, 4
  %v1040 = vadd.f32 %v1038, %v1039
  %v1041 = vrot.slane %v1040, 2
  %v1042 = vadd.f32 %v1040, %v1041
  %v1043 = vrot.slane %v1042, 1
  %v1044 = vadd.f32 %v1042, %v1043
  %v1045 = vmul.f32 %v1044, 0.0015432099
  %v1046 = vsub.f32 %v513, %v1045
  %v1047 = vsub.f32 %v516, %v1045
  %v1048 = vsub.f32 %v521, %v1045
  %v1049 = vsub.f32 %v524, %v1045
  %v1050 = vsub.f32 %v529, %v1045
  %v1051 = vsub.f32 %v532, %v1045
  %v1052 = vsub.f32 %v537, %v1045
  %v1053 = vsub.f32 %v540, %v1045
  %v1054 = vsub.f32 %v545, %v1045
  %v1055 = vsub.f32 %v548, %v1045
  %v1056 = vsub.f32 %v553, %v1045
  %v1057 = vsub.f32 %v556, %v1045
  %v1058 = vsub.f32 %v561, %v1045
  %v1059 = vsub.f32 %v564, %v1045
  %v1060 = vsub.f32 %v569, %v1045
  %v1061 = vsub.f32 %v572, %v1045
  %v1062 = vsub.f32 %v577, %v1045
  %v1063 = vsub.f32 %v580, %v1045
  %v1064 = vsub.f32 %v585, %v1045
  %v1065 = vsub.f32 %v588, %v1045
  %v1066 = vsub.f32 %v593, %v1045
  %v1067 = vsub.f32 %v596, %v1045
  %v1068 = vsub.f32 %v601, %v1045
  %v1069 = vsub.f32 %v604, %v1045
  %v1070 = vsub.f32 %v609, %v1045
  %v1071 = vsub.f32 %v612, %v1045
  %v1072 = vsub.f32 %v617, %v1045
  %v1073 = vsub.f32 %v620, %v1045
  %v1074 = vsub.f32 %v625, %v1045
  %v1075 = vsub.f32 %v628, %v1045
  %v1076 = vsub.f32 %v633, %v1045
  %v1077 = vsub.f32 %v636, %v1045
  %v1078 = vsub.f32 %v641, %v1045
  %v1079 = vsub.f32 %v644, %v1045
  %v1080 = vsub.f32 %v649, %v1045
  %v1081 = vsub.f32 %v652, %v1045
  %v1082 = vsub.f32 %v657, %v1045
  %v1083 = vsub.f32 %v660, %v1045
  %v1084 = vsub.f32 %v665, %v1045
  %v1085 = vsub.f32 %v668, %v1045
  %v1086 = vsub.f32 %v673, %v1045
  %v1087 = vsub.f32 %v676, %v1045
  %v1088 = vsub.f32 %v681, %v1045
  %v1089 = vsub.f32 %v684, %v1045
  %v1090 = vsub.f32 %v689, %v1045
  %v1091 = vsub.f32 %v692, %v1045
  %v1092 = vsub.f32 %v697, %v1045
  %v1093 = vsub.f32 %v700, %v1045
  %v1094 = vsub.f32 %v705, %v1045
  %v1095 = vsub.f32 %v708, %v1045
  %v1096 = vsub.f32 %v713, %v1045
  %v1097 = vsub.f32 %v716, %v1045
  %v1098 = vsub.f32 %v721, %v1045
  %v1099 = vsub.f32 %v724, %v1045
  %v1100 = vsub.f32 %v729, %v1045
  %v1101 = vsub.f32 %v732, %v1045
  %v1102 = vsub.f32 %v737, %v1045
  %v1103 = vsub.f32 %v740, %v1045
  %v1104 = vsub.f32 %v745, %v1045
  %v1105 = vsub.f32 %v748, %v1045
  %v1106 = vsub.f32 %v753, %v1045
  %v1107 = vsub.f32 %v756, %v1045
  %v1108 = vsub.f32 %v761, %v1045
  %v1109 = vsub.f32 %v764, %v1045
  %v1110 = vsub.f32 %v769, %v1045
  %v1111 = vsub.f32 %v772, %v1045
  %v1112 = vsub.f32 %v777, %v1045
  %v1113 = vsub.f32 %v780, %v1045
  %v1114 = vsub.f32 %v785, %v1045
  %v1115 = vsub.f32 %v788, %v1045
  %v1116 = vsub.f32 %v793, %v1045
  %v1117 = vsub.f32 %v796, %v1045
  %v1118 = vsub.f32 %v801, %v1045
  %v1119 = vsub.f32 %v804, %v1045
  %v1120 = vsub.f32 %v809, %v1045
  %v1121 = vsub.f32 %v812, %v1045
  %v1122 = vsub.f32 %v817, %v1045
  %v1123 = vsub.f32 %v820, %v1045
  %v1124 = vsub.f32 %v825, %v1045
  %v1125 = vsub.f32 %v828, %v1045
  %v1126 = vsub.f32 %v833, %v1045
  %v1127 = vsub.f32 %v836, %v1045
  %v1128 = vsub.f32 %v841, %v1045
  %v1129 = vsub.f32 %v844, %v1045
  %v1130 = vsub.f32 %v849, %v1045
  %v1131 = vsub.f32 %v852, %v1045
  %v1132 = vsub.f32 %v857, %v1045
  %v1133 = vsub.f32 %v860, %v1045
  %v1134 = vld [vmem:[%s2] sm:$0xff]
  %v1135 = vld [vmem:[%s2 + $0x8] sm:$0xff]
  %v1136 = vld [vmem:[%s2 + $0x10] sm:$0xff]
  %v1137 = vld [vmem:[%s2 + $0x18] sm:$0xff]
  %v1138 = vld [vmem:[%s2 + $0x20] sm:$0xff]
  %v1139 = vld [vmem:[%s2 + $0x28] sm:$0xff]
  %v1140 = vld [vmem:[%s2 + $0x30] sm:$0xff]
  %v1141 = vld [vmem:[%s2 + $0x38] sm:$0xff]
  %v1142 = vld [vmem:[%s2 + $0x40] sm:$0xff]
  %v1143 = vld [vmem:[%s2 + $0x48] sm:$0xff]
  %v1144 = vld [vmem:[%s2 + $0x50] sm:$0xff]
  %v1145 = vld [vmem:[%s2 + $0x58] sm:$0xff]
  %v1146 = vld [vmem:[%s2 + $0x60] sm:$0xff]
  %v1147 = vld [vmem:[%s2 + $0x68] sm:$0xff]
  %v1148 = vld [vmem:[%s2 + $0x70] sm:$0xff]
  %v1149 = vld [vmem:[%s2 + $0x78] sm:$0xff]
  %v1150 = vld [vmem:[%s2 + $0x80] sm:$0xff]
  %v1151 = vld [vmem:[%s2 + $0x88] sm:$0xff]
  %v1152 = vld [vmem:[%s2 + $0x90] sm:$0xff]
  %v1153 = vld [vmem:[%s2 + $0x98] sm:$0xff]
  %v1154 = vld [vmem:[%s2 + $0xa0] sm:$0xff]
  %v1155 = vld [vmem:[%s2 + $0xa8] sm:$0xff]
  %v1156 = vld [vmem:[%s2 + $0xb0] sm:$0xff]
  %v1157 = vld [vmem:[%s2 + $0xb8] sm:$0xff]
  %v1158 = vld [vmem:[%s2 + $0xc0] sm:$0xff]
  %v1159 = vld [vmem:[%s2 + $0xc8] sm:$0xff]
  %v1160 = vld [vmem:[%s2 + $0xd0] sm:$0xff]
  %v1161 = vld [vmem:[%s2 + $0xd8] sm:$0xff]
  %v1162 = vld [vmem:[%s2 + $0xe0] sm:$0xff]
  %v1163 = vld [vmem:[%s2 + $0xe8] sm:$0xff]
  %v1164 = vld [vmem:[%s2 + $0xf0] sm:$0xff]
  %v1165 = vld [vmem:[%s2 + $0xf8] sm:$0xff]
  %v1166 = vld [vmem:[%s2 + $0x100] sm:$0xff]
  %v1167 = vld [vmem:[%s2 + $0x108] sm:$0xff]
  %v1168 = vld [vmem:[%s2 + $0x110] sm:$0xff]
  %v1169 = vld [vmem:[%s2 + $0x118] sm:$0xff]
  %v1170 = vld [vmem:[%s2 + $0x120] sm:$0xff]
  %v1171 = vld [vmem:[%s2 + $0x128] sm:$0xff]
  %v1172 = vld [vmem:[%s2 + $0x130] sm:$0xff]
  %v1173 = vld [vmem:[%s2 + $0x138] sm:$0xff]
  %v1174 = vld [vmem:[%s2 + $0x140] sm:$0xff]
  %v1175 = vld [vmem:[%s2 + $0x148] sm:$0xff]
  %v1176 = vld [vmem:[%s2 + $0x150] sm:$0xff]
  %v1177 = vld [vmem:[%s2 + $0x158] sm:$0xff]
  %v1178 = vld [vmem:[%s2 + $0x160] sm:$0xff]
  %v1179 = vld [vmem:[%s2 + $0x168] sm:$0xff]
  %v1180 = vld [vmem:[%s2 + $0x170] sm:$0xff]
  %v1181 = vld [vmem:[%s2 + $0x178] sm:$0xff]
  %v1182 = vld [vmem:[%s2 + $0x180] sm:$0xff]
  %v1183 = vld [vmem:[%s2 + $0x188] sm:$0xff]
  %v1184 = vld [vmem:[%s2 + $0x190] sm:$0xff]
  %v1185 = vld [vmem:[%s2 + $0x198] sm:$0xff]
  %v1186 = vld [vmem:[%s2 + $0x1a0] sm:$0xff]
  %v1187 = vld [vmem:[%s2 + $0x1a8] sm:$0xff]
  %v1188 = vld [vmem:[%s2 + $0x1b0] sm:$0xff]
  %v1189 = vld [vmem:[%s2 + $0x1b8] sm:$0xff]
  %v1190 = vld [vmem:[%s2 + $0x1c0] sm:$0xff]
  %v1191 = vld [vmem:[%s2 + $0x1c8] sm:$0xff]
  %v1192 = vld [vmem:[%s2 + $0x1d0] sm:$0xff]
  %v1193 = vld [vmem:[%s2 + $0x1d8] sm:$0xff]
  %v1194 = vld [vmem:[%s2 + $0x1e0] sm:$0xff]
  %v1195 = vld [vmem:[%s2 + $0x1e8] sm:$0xff]
  %v1196 = vld [vmem:[%s2 + $0x1f0] sm:$0xff]
  %v1197 = vld [vmem:[%s2 + $0x1f8] sm:$0xff]
  %v1198 = vld [vmem:[%s2 + $0x200] sm:$0xff]
  %v1199 = vld [vmem:[%s2 + $0x208] sm:$0xff]
  %v1200 = vld [vmem:[%s2 + $0x210] sm:$0xff]
  %v1201 = vld [vmem:[%s2 + $0x218] sm:$0xff]
  %v1202 = vld [vmem:[%s2 + $0x220] sm:$0xff]
  %v1203 = vld [vmem:[%s2 + $0x228] sm:$0xff]
  %v1204 = vld [vmem:[%s2 + $0x230] sm:$0xff]
  %v1205 = vld [vmem:[%s2 + $0x238] sm:$0xff]
  %v1206 = vld [vmem:[%s2 + $0x240] sm:$0xff]
  %v1207 = vld [vmem:[%s2 + $0x248] sm:$0xff]
  %v1208 = vld [vmem:[%s2 + $0x250] sm:$0xff]
  %v1209 = vld [vmem:[%s2 + $0x258] sm:$0xff]
  %v1210 = vld [vmem:[%s2 + $0x260] sm:$0xff]
  %v1211 = vld [vmem:[%s2 + $0x268] sm:$0xff]
  %v1212 = vld [vmem:[%s2 + $0x270] sm:$0xff]
  %v1213 = vld [vmem:[%s2 + $0x278] sm:$0xff]
  %v1214 = vld [vmem:[%s2 + $0x280] sm:$0xff]
  %v1215 = vld [vmem:[%s2 + $0x288] sm:$0xff]
  %v1216 = vld [vmem:[%s2 + $0x290] sm:$0xff]
  %v1217 = vld [vmem:[%s2 + $0x298] sm:$0xff]
  %v1218 = vld [vmem:[%s2 + $0x2a0] sm:$0xff]
  %v1219 = vld [vmem:[%s2 + $0x2a8] sm:$0xff]
  %v1220 = vld [vmem:[%s2 + $0x2b0] sm:$0xff]
  %v1221 = vld [vmem:[%s2 + $0x2b8] sm:$0xff]
  %1223 = vset.pattern.permute.xlu0 0
  %1224 = vperm.xlu0 %1223, %v1134
  %v1225 = vpop.permute.xlu0 %1224
  %1228 = vset.pattern.permute.xlu0 0
  %1229 = vperm.xlu0 %1228, %v1135
  %v1230 = vpop.permute.xlu0 %1229
  %1233 = vset.pattern.permute.xlu0 0
  %1234 = vperm.xlu0 %1233, %v1136
  %v1235 = vpop.permute.xlu0 %1234
  %1238 = vset.pattern.permute.xlu0 0
  %1239 = vperm.xlu0 %1238, %v1137
  %v1240 = vpop.permute.xlu0 %1239
  %1243 = vset.pattern.permute.xlu0 0
  %1244 = vperm.xlu0 %1243, %v1138
  %v1245 = vpop.permute.xlu0 %1244
  %1248 = vset.pattern.permute.xlu0 0
  %1249 = vperm.xlu0 %1248, %v1139
  %v1250 = vpop.permute.xlu0 %1249
  %1253 = vset.pattern.permute.xlu0 0
  %1254 = vperm.xlu0 %1253, %v1140
  %v1255 = vpop.permute.xlu0 %1254
  %1258 = vset.pattern.permute.xlu0 0
  %1259 = vperm.xlu0 %1258, %v1141
  %v1260 = vpop.permute.xlu0 %1259
  %1263 = vset.pattern.permute.xlu0 0
  %1264 = vperm.xlu0 %1263, %v1142
  %v1265 = vpop.permute.xlu0 %1264
  %1268 = vset.pattern.permute.xlu0 0
  %1269 = vperm.xlu0 %1268, %v1143
  %v1270 = vpop.permute.xlu0 %1269
  %1273 = vset.pattern.permute.xlu0 0
  %1274 = vperm.xlu0 %1273, %v1144
  %v1275 = vpop.permute.xlu0 %1274
  %1278 = vset.pattern.permute.xlu0 0
  %1279 = vperm.xlu0 %1278, %v1145
  %v1280 = vpop.permute.xlu0 %1279
  %1283 = vset.pattern.permute.xlu0 0
  %1284 = vperm.xlu0 %1283, %v1146
  %v1285 = vpop.permute.xlu0 %1284
  %1288 = vset.pattern.permute.xlu0 0
  %1289 = vperm.xlu0 %1288, %v1147
  %v1290 = vpop.permute.xlu0 %1289
  %1293 = vset.pattern.permute.xlu0 0
  %1294 = vperm.xlu0 %1293, %v1148
  %v1295 = vpop.permute.xlu0 %1294
  %1298 = vset.pattern.permute.xlu0 0
  %1299 = vperm.xlu0 %1298, %v1149
  %v1300 = vpop.permute.xlu0 %1299
  %1303 = vset.pattern.permute.xlu0 0
  %1304 = vperm.xlu0 %1303, %v1150
  %v1305 = vpop.permute.xlu0 %1304
  %1308 = vset.pattern.permute.xlu0 0
  %1309 = vperm.xlu0 %1308, %v1151
  %v1310 = vpop.permute.xlu0 %1309
  %1313 = vset.pattern.permute.xlu0 0
  %1314 = vperm.xlu0 %1313, %v1152
  %v1315 = vpop.permute.xlu0 %1314
  %1318 = vset.pattern.permute.xlu0 0
  %1319 = vperm.xlu0 %1318, %v1153
  %v1320 = vpop.permute.xlu0 %1319
  %1323 = vset.pattern.permute.xlu0 0
  %1324 = vperm.xlu0 %1323, %v1154
  %v1325 = vpop.permute.xlu0 %1324
  %1328 = vset.pattern.permute.xlu0 0
  %1329 = vperm.xlu0 %1328, %v1155
  %v1330 = vpop.permute.xlu0 %1329
  %1333 = vset.pattern.permute.xlu0 0
  %1334 = vperm.xlu0 %1333, %v1156
  %v1335 = vpop.permute.xlu0 %1334
  %1338 = vset.pattern.permute.xlu0 0
  %1339 = vperm.xlu0 %1338, %v1157
  %v1340 = vpop.permute.xlu0 %1339
  %1343 = vset.pattern.permute.xlu0 0
  %1344 = vperm.xlu0 %1343, %v1158
  %v1345 = vpop.permute.xlu0 %1344
  %1348 = vset.pattern.permute.xlu0 0
  %1349 = vperm.xlu0 %1348, %v1159
  %v1350 = vpop.permute.xlu0 %1349
  %1353 = vset.pattern.permute.xlu0 0
  %1354 = vperm.xlu0 %1353, %v1160
  %v1355 = vpop.permute.xlu0 %1354
  %1358 = vset.pattern.permute.xlu0 0
  %1359 = vperm.xlu0 %1358, %v1161
  %v1360 = vpop.permute.xlu0 %1359
  %1363 = vset.pattern.permute.xlu0 0
  %1364 = vperm.xlu0 %1363, %v1162
  %v1365 = vpop.permute.xlu0 %1364
  %1368 = vset.pattern.permute.xlu0 0
  %1369 = vperm.xlu0 %1368, %v1163
  %v1370 = vpop.permute.xlu0 %1369
  %1373 = vset.pattern.permute.xlu0 0
  %1374 = vperm.xlu0 %1373, %v1164
  %v1375 = vpop.permute.xlu0 %1374
  %1378 = vset.pattern.permute.xlu0 0
  %1379 = vperm.xlu0 %1378, %v1165
  %v1380 = vpop.permute.xlu0 %1379
  %1383 = vset.pattern.permute.xlu0 0
  %1384 = vperm.xlu0 %1383, %v1166
  %v1385 = vpop.permute.xlu0 %1384
  %1388 = vset.pattern.permute.xlu0 0
  %1389 = vperm.xlu0 %1388, %v1167
  %v1390 = vpop.permute.xlu0 %1389
  %1393 = vset.pattern.permute.xlu0 0
  %1394 = vperm.xlu0 %1393, %v1168
  %v1395 = vpop.permute.xlu0 %1394
  %1398 = vset.pattern.permute.xlu0 0
  %1399 = vperm.xlu0 %1398, %v1169
  %v1400 = vpop.permute.xlu0 %1399
  %1403 = vset.pattern.permute.xlu0 0
  %1404 = vperm.xlu0 %1403, %v1170
  %v1405 = vpop.permute.xlu0 %1404
  %1408 = vset.pattern.permute.xlu0 0
  %1409 = vperm.xlu0 %1408, %v1171
  %v1410 = vpop.permute.xlu0 %1409
  %1413 = vset.pattern.permute.xlu0 0
  %1414 = vperm.xlu0 %1413, %v1172
  %v1415 = vpop.permute.xlu0 %1414
  %1418 = vset.pattern.permute.xlu0 0
  %1419 = vperm.xlu0 %1418, %v1173
  %v1420 = vpop.permute.xlu0 %1419
  %1423 = vset.pattern.permute.xlu0 0
  %1424 = vperm.xlu0 %1423, %v1174
  %v1425 = vpop.permute.xlu0 %1424
  %1428 = vset.pattern.permute.xlu0 0
  %1429 = vperm.xlu0 %1428, %v1175
  %v1430 = vpop.permute.xlu0 %1429
  %1433 = vset.pattern.permute.xlu0 0
  %1434 = vperm.xlu0 %1433, %v1176
  %v1435 = vpop.permute.xlu0 %1434
  %1438 = vset.pattern.permute.xlu0 0
  %1439 = vperm.xlu0 %1438, %v1177
  %v1440 = vpop.permute.xlu0 %1439
  %1443 = vset.pattern.permute.xlu0 0
  %1444 = vperm.xlu0 %1443, %v1178
  %v1445 = vpop.permute.xlu0 %1444
  %1448 = vset.pattern.permute.xlu0 0
  %1449 = vperm.xlu0 %1448, %v1179
  %v1450 = vpop.permute.xlu0 %1449
  %1453 = vset.pattern.permute.xlu0 0
  %1454 = vperm.xlu0 %1453, %v1180
  %v1455 = vpop.permute.xlu0 %1454
  %1458 = vset.pattern.permute.xlu0 0
  %1459 = vperm.xlu0 %1458, %v1181
  %v1460 = vpop.permute.xlu0 %1459
  %1463 = vset.pattern.permute.xlu0 0
  %1464 = vperm.xlu0 %1463, %v1182
  %v1465 = vpop.permute.xlu0 %1464
  %1468 = vset.pattern.permute.xlu0 0
  %1469 = vperm.xlu0 %1468, %v1183
  %v1470 = vpop.permute.xlu0 %1469
  %1473 = vset.pattern.permute.xlu0 0
  %1474 = vperm.xlu0 %1473, %v1184
  %v1475 = vpop.permute.xlu0 %1474
  %1478 = vset.pattern.permute.xlu0 0
  %1479 = vperm.xlu0 %1478, %v1185
  %v1480 = vpop.permute.xlu0 %1479
  %1483 = vset.pattern.permute.xlu0 0
  %1484 = vperm.xlu0 %1483, %v1186
  %v1485 = vpop.permute.xlu0 %1484
  %1488 = vset.pattern.permute.xlu0 0
  %1489 = vperm.xlu0 %1488, %v1187
  %v1490 = vpop.permute.xlu0 %1489
  %1493 = vset.pattern.permute.xlu0 0
  %1494 = vperm.xlu0 %1493, %v1188
  %v1495 = vpop.permute.xlu0 %1494
  %1498 = vset.pattern.permute.xlu0 0
  %1499 = vperm.xlu0 %1498, %v1189
  %v1500 = vpop.permute.xlu0 %1499
  %1503 = vset.pattern.permute.xlu0 0
  %1504 = vperm.xlu0 %1503, %v1190
  %v1505 = vpop.permute.xlu0 %1504
  %1508 = vset.pattern.permute.xlu0 0
  %1509 = vperm.xlu0 %1508, %v1191
  %v1510 = vpop.permute.xlu0 %1509
  %1513 = vset.pattern.permute.xlu0 0
  %1514 = vperm.xlu0 %1513, %v1192
  %v1515 = vpop.permute.xlu0 %1514
  %1518 = vset.pattern.permute.xlu0 0
  %1519 = vperm.xlu0 %1518, %v1193
  %v1520 = vpop.permute.xlu0 %1519
  %1523 = vset.pattern.permute.xlu0 0
  %1524 = vperm.xlu0 %1523, %v1194
  %v1525 = vpop.permute.xlu0 %1524
  %1528 = vset.pattern.permute.xlu0 0
  %1529 = vperm.xlu0 %1528, %v1195
  %v1530 = vpop.permute.xlu0 %1529
  %1533 = vset.pattern.permute.xlu0 0
  %1534 = vperm.xlu0 %1533, %v1196
  %v1535 = vpop.permute.xlu0 %1534
  %1538 = vset.pattern.permute.xlu0 0
  %1539 = vperm.xlu0 %1538, %v1197
  %v1540 = vpop.permute.xlu0 %1539
  %1543 = vset.pattern.permute.xlu0 0
  %1544 = vperm.xlu0 %1543, %v1198
  %v1545 = vpop.permute.xlu0 %1544
  %1548 = vset.pattern.permute.xlu0 0
  %1549 = vperm.xlu0 %1548, %v1199
  %v1550 = vpop.permute.xlu0 %1549
  %1553 = vset.pattern.permute.xlu0 0
  %1554 = vperm.xlu0 %1553, %v1200
  %v1555 = vpop.permute.xlu0 %1554
  %1558 = vset.pattern.permute.xlu0 0
  %1559 = vperm.xlu0 %1558, %v1201
  %v1560 = vpop.permute.xlu0 %1559
  %1563 = vset.pattern.permute.xlu0 0
  %1564 = vperm.xlu0 %1563, %v1202
  %v1565 = vpop.permute.xlu0 %1564
  %1568 = vset.pattern.permute.xlu0 0
  %1569 = vperm.xlu0 %1568, %v1203
  %v1570 = vpop.permute.xlu0 %1569
  %1573 = vset.pattern.permute.xlu0 0
  %1574 = vperm.xlu0 %1573, %v1204
  %v1575 = vpop.permute.xlu0 %1574
  %1578 = vset.pattern.permute.xlu0 0
  %1579 = vperm.xlu0 %1578, %v1205
  %v1580 = vpop.permute.xlu0 %1579
  %1583 = vset.pattern.permute.xlu0 0
  %1584 = vperm.xlu0 %1583, %v1206
  %v1585 = vpop.permute.xlu0 %1584
  %1588 = vset.pattern.permute.xlu0 0
  %1589 = vperm.xlu0 %1588, %v1207
  %v1590 = vpop.permute.xlu0 %1589
  %1593 = vset.pattern.permute.xlu0 0
  %1594 = vperm.xlu0 %1593, %v1208
  %v1595 = vpop.permute.xlu0 %1594
  %1598 = vset.pattern.permute.xlu0 0
  %1599 = vperm.xlu0 %1598, %v1209
  %v1600 = vpop.permute.xlu0 %1599
  %1603 = vset.pattern.permute.xlu0 0
  %1604 = vperm.xlu0 %1603, %v1210
  %v1605 = vpop.permute.xlu0 %1604
  %1608 = vset.pattern.permute.xlu0 0
  %1609 = vperm.xlu0 %1608, %v1211
  %v1610 = vpop.permute.xlu0 %1609
  %1613 = vset.pattern.permute.xlu0 0
  %1614 = vperm.xlu0 %1613, %v1212
  %v1615 = vpop.permute.xlu0 %1614
  %1618 = vset.pattern.permute.xlu0 0
  %1619 = vperm.xlu0 %1618, %v1213
  %v1620 = vpop.permute.xlu0 %1619
  %1623 = vset.pattern.permute.xlu0 0
  %1624 = vperm.xlu0 %1623, %v1214
  %v1625 = vpop.permute.xlu0 %1624
  %1628 = vset.pattern.permute.xlu0 0
  %1629 = vperm.xlu0 %1628, %v1215
  %v1630 = vpop.permute.xlu0 %1629
  %1633 = vset.pattern.permute.xlu0 0
  %1634 = vperm.xlu0 %1633, %v1216
  %v1635 = vpop.permute.xlu0 %1634
  %1638 = vset.pattern.permute.xlu0 0
  %1639 = vperm.xlu0 %1638, %v1217
  %v1640 = vpop.permute.xlu0 %1639
  %1643 = vset.pattern.permute.xlu0 0
  %1644 = vperm.xlu0 %1643, %v1218
  %v1645 = vpop.permute.xlu0 %1644
  %1648 = vset.pattern.permute.xlu0 0
  %1649 = vperm.xlu0 %1648, %v1219
  %v1650 = vpop.permute.xlu0 %1649
  %1653 = vset.pattern.permute.xlu0 0
  %1654 = vperm.xlu0 %1653, %v1220
  %v1655 = vpop.permute.xlu0 %1654
  %1658 = vset.pattern.permute.xlu0 0
  %1659 = vperm.xlu0 %1658, %v1221
  %v1660 = vpop.permute.xlu0 %1659
  %v1662 = vmul.f32 %v1046, %v1225
  %v1663 = vmul.f32 %v1047, %v1230
  %v1664 = vmul.f32 %v1048, %v1235
  %v1665 = vmul.f32 %v1049, %v1240
  %v1666 = vmul.f32 %v1050, %v1245
  %v1667 = vmul.f32 %v1051, %v1250
  %v1668 = vmul.f32 %v1052, %v1255
  %v1669 = vmul.f32 %v1053, %v1260
  %v1670 = vmul.f32 %v1054, %v1265
  %v1671 = vmul.f32 %v1055, %v1270
  %v1672 = vmul.f32 %v1056, %v1275
  %v1673 = vmul.f32 %v1057, %v1280
  %v1674 = vmul.f32 %v1058, %v1285
  %v1675 = vmul.f32 %v1059, %v1290
  %v1676 = vmul.f32 %v1060, %v1295
  %v1677 = vmul.f32 %v1061, %v1300
  %v1678 = vmul.f32 %v1062, %v1305
  %v1679 = vmul.f32 %v1063, %v1310
  %v1680 = vmul.f32 %v1064, %v1315
  %v1681 = vmul.f32 %v1065, %v1320
  %v1682 = vmul.f32 %v1066, %v1325
  %v1683 = vmul.f32 %v1067, %v1330
  %v1684 = vmul.f32 %v1068, %v1335
  %v1685 = vmul.f32 %v1069, %v1340
  %v1686 = vmul.f32 %v1070, %v1345
  %v1687 = vmul.f32 %v1071, %v1350
  %v1688 = vmul.f32 %v1072, %v1355
  %v1689 = vmul.f32 %v1073, %v1360
  %v1690 = vmul.f32 %v1074, %v1365
  %v1691 = vmul.f32 %v1075, %v1370
  %v1692 = vmul.f32 %v1076, %v1375
  %v1693 = vmul.f32 %v1077, %v1380
  %v1694 = vmul.f32 %v1078, %v1385
  %v1695 = vmul.f32 %v1079, %v1390
  %v1696 = vmul.f32 %v1080, %v1395
  %v1697 = vmul.f32 %v1081, %v1400
  %v1698 = vmul.f32 %v1082, %v1405
  %v1699 = vmul.f32 %v1083, %v1410
  %v1700 = vmul.f32 %v1084, %v1415
  %v1701 = vmul.f32 %v1085, %v1420
  %v1702 = vmul.f32 %v1086, %v1425
  %v1703 = vmul.f32 %v1087, %v1430
  %v1704 = vmul.f32 %v1088, %v1435
  %v1705 = vmul.f32 %v1089, %v1440
  %v1706 = vmul.f32 %v1090, %v1445
  %v1707 = vmul.f32 %v1091, %v1450
  %v1708 = vmul.f32 %v1092, %v1455
  %v1709 = vmul.f32 %v1093, %v1460
  %v1710 = vmul.f32 %v1094, %v1465
  %v1711 = vmul.f32 %v1095, %v1470
  %v1712 = vmul.f32 %v1096, %v1475
  %v1713 = vmul.f32 %v1097, %v1480
  %v1714 = vmul.f32 %v1098, %v1485
  %v1715 = vmul.f32 %v1099, %v1490
  %v1716 = vmul.f32 %v1100, %v1495
  %v1717 = vmul.f32 %v1101, %v1500
  %v1718 = vmul.f32 %v1102, %v1505
  %v1719 = vmul.f32 %v1103, %v1510
  %v1720 = vmul.f32 %v1104, %v1515
  %v1721 = vmul.f32 %v1105, %v1520
  %v1722 = vmul.f32 %v1106, %v1525
  %v1723 = vmul.f32 %v1107, %v1530
  %v1724 = vmul.f32 %v1108, %v1535
  %v1725 = vmul.f32 %v1109, %v1540
  %v1726 = vmul.f32 %v1110, %v1545
  %v1727 = vmul.f32 %v1111, %v1550
  %v1728 = vmul.f32 %v1112, %v1555
  %v1729 = vmul.f32 %v1113, %v1560
  %v1730 = vmul.f32 %v1114, %v1565
  %v1731 = vmul.f32 %v1115, %v1570
  %v1732 = vmul.f32 %v1116, %v1575
  %v1733 = vmul.f32 %v1117, %v1580
  %v1734 = vmul.f32 %v1118, %v1585
  %v1735 = vmul.f32 %v1119, %v1590
  %v1736 = vmul.f32 %v1120, %v1595
  %v1737 = vmul.f32 %v1121, %v1600
  %v1738 = vmul.f32 %v1122, %v1605
  %v1739 = vmul.f32 %v1123, %v1610
  %v1740 = vmul.f32 %v1124, %v1615
  %v1741 = vmul.f32 %v1125, %v1620
  %v1742 = vmul.f32 %v1126, %v1625
  %v1743 = vmul.f32 %v1127, %v1630
  %v1744 = vmul.f32 %v1128, %v1635
  %v1745 = vmul.f32 %v1129, %v1640
  %v1746 = vmul.f32 %v1130, %v1645
  %v1747 = vmul.f32 %v1131, %v1650
  %v1748 = vmul.f32 %v1132, %v1655
  %v1749 = vmul.f32 %v1133, %v1660
  %v1750 = vmul.f32 %v1662, %v1662
  %v1751 = vmul.f32 %v1663, %v1663
  %v1752 = vmul.f32 %v1664, %v1664
  %v1753 = vmul.f32 %v1665, %v1665
  %v1754 = vmul.f32 %v1666, %v1666
  %v1755 = vmul.f32 %v1667, %v1667
  %v1756 = vmul.f32 %v1668, %v1668
  %v1757 = vmul.f32 %v1669, %v1669
  %v1758 = vmul.f32 %v1670, %v1670
  %v1759 = vmul.f32 %v1671, %v1671
  %v1760 = vmul.f32 %v1672, %v1672
  %v1761 = vmul.f32 %v1673, %v1673
  %v1762 = vmul.f32 %v1674, %v1674
  %v1763 = vmul.f32 %v1675, %v1675
  %v1764 = vmul.f32 %v1676, %v1676
  %v1765 = vmul.f32 %v1677, %v1677
  %v1766 = vmul.f32 %v1678, %v1678
  %v1767 = vmul.f32 %v1679, %v1679
  %v1768 = vmul.f32 %v1680, %v1680
  %v1769 = vmul.f32 %v1681, %v1681
  %v1770 = vmul.f32 %v1682, %v1682
  %v1771 = vmul.f32 %v1683, %v1683
  %v1772 = vmul.f32 %v1684, %v1684
  %v1773 = vmul.f32 %v1685, %v1685
  %v1774 = vmul.f32 %v1686, %v1686
  %v1775 = vmul.f32 %v1687, %v1687
  %v1776 = vmul.f32 %v1688, %v1688
  %v1777 = vmul.f32 %v1689, %v1689
  %v1778 = vmul.f32 %v1690, %v1690
  %v1779 = vmul.f32 %v1691, %v1691
  %v1780 = vmul.f32 %v1692, %v1692
  %v1781 = vmul.f32 %v1693, %v1693
  %v1782 = vmul.f32 %v1694, %v1694
  %v1783 = vmul.f32 %v1695, %v1695
  %v1784 = vmul.f32 %v1696, %v1696
  %v1785 = vmul.f32 %v1697, %v1697
  %v1786 = vmul.f32 %v1698, %v1698
  %v1787 = vmul.f32 %v1699, %v1699
  %v1788 = vmul.f32 %v1700, %v1700
  %v1789 = vmul.f32 %v1701, %v1701
  %v1790 = vmul.f32 %v1702, %v1702
  %v1791 = vmul.f32 %v1703, %v1703
  %v1792 = vmul.f32 %v1704, %v1704
  %v1793 = vmul.f32 %v1705, %v1705
  %v1794 = vmul.f32 %v1706, %v1706
  %v1795 = vmul.f32 %v1707, %v1707
  %v1796 = vmul.f32 %v1708, %v1708
  %v1797 = vmul.f32 %v1709, %v1709
  %v1798 = vmul.f32 %v1710, %v1710
  %v1799 = vmul.f32 %v1711, %v1711
  %v1800 = vmul.f32 %v1712, %v1712
  %v1801 = vmul.f32 %v1713, %v1713
  %v1802 = vmul.f32 %v1714, %v1714
  %v1803 = vmul.f32 %v1715, %v1715
  %v1804 = vmul.f32 %v1716, %v1716
  %v1805 = vmul.f32 %v1717, %v1717
  %v1806 = vmul.f32 %v1718, %v1718
  %v1807 = vmul.f32 %v1719, %v1719
  %v1808 = vmul.f32 %v1720, %v1720
  %v1809 = vmul.f32 %v1721, %v1721
  %v1810 = vmul.f32 %v1722, %v1722
  %v1811 = vmul.f32 %v1723, %v1723
  %v1812 = vmul.f32 %v1724, %v1724
  %v1813 = vmul.f32 %v1725, %v1725
  %v1814 = vmul.f32 %v1726, %v1726
  %v1815 = vmul.f32 %v1727, %v1727
  %v1816 = vmul.f32 %v1728, %v1728
  %v1817 = vmul.f32 %v1729, %v1729
  %v1818 = vmul.f32 %v1730, %v1730
  %v1819 = vmul.f32 %v1731, %v1731
  %v1820 = vmul.f32 %v1732, %v1732
  %v1821 = vmul.f32 %v1733, %v1733
  %v1822 = vmul.f32 %v1734, %v1734
  %v1823 = vmul.f32 %v1735, %v1735
  %v1824 = vmul.f32 %v1736, %v1736
  %v1825 = vmul.f32 %v1737, %v1737
  %v1826 = vmul.f32 %v1738, %v1738
  %v1827 = vmul.f32 %v1739, %v1739
  %v1828 = vmul.f32 %v1740, %v1740
  %v1829 = vmul.f32 %v1741, %v1741
  %v1830 = vmul.f32 %v1742, %v1742
  %v1831 = vmul.f32 %v1743, %v1743
  %v1832 = vmul.f32 %v1744, %v1744
  %v1833 = vmul.f32 %v1745, %v1745
  %v1834 = vmul.f32 %v1746, %v1746
  %v1835 = vmul.f32 %v1747, %v1747
  %v1836 = vmul.f32 %v1748, %v1748
  %v1837 = vmul.f32 %v1749, %v1749
  %v1838 = vsel %vm863, %v1750, 0.0
  %v1839 = vsel %vm863, %v1751, 0.0
  %v1840 = vadd.f32 %v1838, %v1839
  %v1841 = vsel %vm863, %v1752, 0.0
  %v1842 = vadd.f32 %v1840, %v1841
  %v1843 = vsel %vm863, %v1753, 0.0
  %v1844 = vadd.f32 %v1842, %v1843
  %v1845 = vsel %vm863, %v1754, 0.0
  %v1846 = vadd.f32 %v1844, %v1845
  %v1847 = vsel %vm863, %v1755, 0.0
  %v1848 = vadd.f32 %v1846, %v1847
  %v1849 = vsel %vm863, %v1756, 0.0
  %v1850 = vadd.f32 %v1848, %v1849
  %v1851 = vsel %vm863, %v1757, 0.0
  %v1852 = vadd.f32 %v1850, %v1851
  %v1853 = vsel %vm863, %v1758, 0.0
  %v1854 = vadd.f32 %v1852, %v1853
  %v1855 = vsel %vm863, %v1759, 0.0
  %v1856 = vadd.f32 %v1854, %v1855
  %v1857 = vsel %vm863, %v1760, 0.0
  %v1858 = vadd.f32 %v1856, %v1857
  %v1859 = vsel %vm863, %v1761, 0.0
  %v1860 = vadd.f32 %v1858, %v1859
  %v1861 = vsel %vm863, %v1762, 0.0
  %v1862 = vadd.f32 %v1860, %v1861
  %v1863 = vsel %vm863, %v1763, 0.0
  %v1864 = vadd.f32 %v1862, %v1863
  %v1865 = vsel %vm863, %v1764, 0.0
  %v1866 = vadd.f32 %v1864, %v1865
  %v1867 = vsel %vm863, %v1765, 0.0
  %v1868 = vadd.f32 %v1866, %v1867
  %v1869 = vsel %vm863, %v1766, 0.0
  %v1870 = vadd.f32 %v1868, %v1869
  %v1871 = vsel %vm863, %v1767, 0.0
  %v1872 = vadd.f32 %v1870, %v1871
  %v1873 = vsel %vm863, %v1768, 0.0
  %v1874 = vadd.f32 %v1872, %v1873
  %v1875 = vsel %vm863, %v1769, 0.0
  %v1876 = vadd.f32 %v1874, %v1875
  %v1877 = vsel %vm863, %v1770, 0.0
  %v1878 = vadd.f32 %v1876, %v1877
  %v1879 = vsel %vm863, %v1771, 0.0
  %v1880 = vadd.f32 %v1878, %v1879
  %v1881 = vsel %vm863, %v1772, 0.0
  %v1882 = vadd.f32 %v1880, %v1881
  %v1883 = vsel %vm863, %v1773, 0.0
  %v1884 = vadd.f32 %v1882, %v1883
  %v1885 = vsel %vm863, %v1774, 0.0
  %v1886 = vadd.f32 %v1884, %v1885
  %v1887 = vsel %vm863, %v1775, 0.0
  %v1888 = vadd.f32 %v1886, %v1887
  %v1889 = vsel %vm863, %v1776, 0.0
  %v1890 = vadd.f32 %v1888, %v1889
  %v1891 = vsel %vm863, %v1777, 0.0
  %v1892 = vadd.f32 %v1890, %v1891
  %v1893 = vsel %vm863, %v1778, 0.0
  %v1894 = vadd.f32 %v1892, %v1893
  %v1895 = vsel %vm863, %v1779, 0.0
  %v1896 = vadd.f32 %v1894, %v1895
  %v1897 = vsel %vm863, %v1780, 0.0
  %v1898 = vadd.f32 %v1896, %v1897
  %v1899 = vsel %vm863, %v1781, 0.0
  %v1900 = vadd.f32 %v1898, %v1899
  %v1901 = vsel %vm863, %v1782, 0.0
  %v1902 = vadd.f32 %v1900, %v1901
  %v1903 = vsel %vm863, %v1783, 0.0
  %v1904 = vadd.f32 %v1902, %v1903
  %v1905 = vsel %vm863, %v1784, 0.0
  %v1906 = vadd.f32 %v1904, %v1905
  %v1907 = vsel %vm863, %v1785, 0.0
  %v1908 = vadd.f32 %v1906, %v1907
  %v1909 = vsel %vm863, %v1786, 0.0
  %v1910 = vadd.f32 %v1908, %v1909
  %v1911 = vsel %vm863, %v1787, 0.0
  %v1912 = vadd.f32 %v1910, %v1911
  %v1913 = vsel %vm863, %v1788, 0.0
  %v1914 = vadd.f32 %v1912, %v1913
  %v1915 = vsel %vm863, %v1789, 0.0
  %v1916 = vadd.f32 %v1914, %v1915
  %v1917 = vsel %vm863, %v1790, 0.0
  %v1918 = vadd.f32 %v1916, %v1917
  %v1919 = vsel %vm863, %v1791, 0.0
  %v1920 = vadd.f32 %v1918, %v1919
  %v1921 = vsel %vm863, %v1792, 0.0
  %v1922 = vadd.f32 %v1920, %v1921
  %v1923 = vsel %vm863, %v1793, 0.0
  %v1924 = vadd.f32 %v1922, %v1923
  %v1925 = vsel %vm863, %v1794, 0.0
  %v1926 = vadd.f32 %v1924, %v1925
  %v1927 = vsel %vm863, %v1795, 0.0
  %v1928 = vadd.f32 %v1926, %v1927
  %v1929 = vsel %vm863, %v1796, 0.0
  %v1930 = vadd.f32 %v1928, %v1929
  %v1931 = vsel %vm863, %v1797, 0.0
  %v1932 = vadd.f32 %v1930, %v1931
  %v1933 = vsel %vm863, %v1798, 0.0
  %v1934 = vadd.f32 %v1932, %v1933
  %v1935 = vsel %vm863, %v1799, 0.0
  %v1936 = vadd.f32 %v1934, %v1935
  %v1937 = vsel %vm863, %v1800, 0.0
  %v1938 = vadd.f32 %v1936, %v1937
  %v1939 = vsel %vm863, %v1801, 0.0
  %v1940 = vadd.f32 %v1938, %v1939
  %v1941 = vsel %vm863, %v1802, 0.0
  %v1942 = vadd.f32 %v1940, %v1941
  %v1943 = vsel %vm863, %v1803, 0.0
  %v1944 = vadd.f32 %v1942, %v1943
  %v1945 = vsel %vm863, %v1804, 0.0
  %v1946 = vadd.f32 %v1944, %v1945
  %v1947 = vsel %vm863, %v1805, 0.0
  %v1948 = vadd.f32 %v1946, %v1947
  %v1949 = vsel %vm863, %v1806, 0.0
  %v1950 = vadd.f32 %v1948, %v1949
  %v1951 = vsel %vm863, %v1807, 0.0
  %v1952 = vadd.f32 %v1950, %v1951
  %v1953 = vsel %vm863, %v1808, 0.0
  %v1954 = vadd.f32 %v1952, %v1953
  %v1955 = vsel %vm863, %v1809, 0.0
  %v1956 = vadd.f32 %v1954, %v1955
  %v1957 = vsel %vm863, %v1810, 0.0
  %v1958 = vadd.f32 %v1956, %v1957
  %v1959 = vsel %vm863, %v1811, 0.0
  %v1960 = vadd.f32 %v1958, %v1959
  %v1961 = vsel %vm863, %v1812, 0.0
  %v1962 = vadd.f32 %v1960, %v1961
  %v1963 = vsel %vm863, %v1813, 0.0
  %v1964 = vadd.f32 %v1962, %v1963
  %v1965 = vsel %vm863, %v1814, 0.0
  %v1966 = vadd.f32 %v1964, %v1965
  %v1967 = vsel %vm863, %v1815, 0.0
  %v1968 = vadd.f32 %v1966, %v1967
  %v1969 = vsel %vm863, %v1816, 0.0
  %v1970 = vadd.f32 %v1968, %v1969
  %v1971 = vsel %vm863, %v1817, 0.0
  %v1972 = vadd.f32 %v1970, %v1971
  %v1973 = vsel %vm863, %v1818, 0.0
  %v1974 = vadd.f32 %v1972, %v1973
  %v1975 = vsel %vm863, %v1819, 0.0
  %v1976 = vadd.f32 %v1974, %v1975
  %v1977 = vsel %vm863, %v1820, 0.0
  %v1978 = vadd.f32 %v1976, %v1977
  %v1979 = vsel %vm863, %v1821, 0.0
  %v1980 = vadd.f32 %v1978, %v1979
  %v1981 = vsel %vm863, %v1822, 0.0
  %v1982 = vadd.f32 %v1980, %v1981
  %v1983 = vsel %vm863, %v1823, 0.0
  %v1984 = vadd.f32 %v1982, %v1983
  %v1985 = vsel %vm863, %v1824, 0.0
  %v1986 = vadd.f32 %v1984, %v1985
  %v1987 = vsel %vm863, %v1825, 0.0
  %v1988 = vadd.f32 %v1986, %v1987
  %v1989 = vsel %vm863, %v1826, 0.0
  %v1990 = vadd.f32 %v1988, %v1989
  %v1991 = vsel %vm863, %v1827, 0.0
  %v1992 = vadd.f32 %v1990, %v1991
  %v1993 = vsel %vm863, %v1828, 0.0
  %v1994 = vadd.f32 %v1992, %v1993
  %v1995 = vsel %vm863, %v1829, 0.0
  %v1996 = vadd.f32 %v1994, %v1995
  %v1997 = vsel %vm863, %v1830, 0.0
  %v1998 = vadd.f32 %v1996, %v1997
  %v1999 = vsel %vm863, %v1831, 0.0
  %v2000 = vadd.f32 %v1998, %v1999
  %v2001 = vsel %vm863, %v1832, 0.0
  %v2002 = vadd.f32 %v2000, %v2001
  %v2003 = vsel %vm863, %v1833, 0.0
  %v2004 = vadd.f32 %v2002, %v2003
  %v2005 = vsel %vm863, %v1834, 0.0
  %v2006 = vadd.f32 %v2004, %v2005
  %v2007 = vsel %vm863, %v1835, 0.0
  %v2008 = vadd.f32 %v2006, %v2007
  %v2009 = vsel %vm863, %v1836, 0.0
  %v2010 = vadd.f32 %v2008, %v2009
  %v2011 = vsel %vm863, %v1837, 0.0
  %v2012 = vadd.f32 %v2010, %v2011
  %v2013 = vrot.slane %v2012, 4
  %v2014 = vadd.f32 %v2012, %v2013
  %v2015 = vrot.slane %v2014, 2
  %v2016 = vadd.f32 %v2014, %v2015
  %v2017 = vrot.slane %v2016, 1
  %v2018 = vadd.f32 %v2016, %v2017
  %v2019 = vmul.f32 %v2018, 0.0015432099
  %v2020 = vld [vmem:[%s3] sm:$0x1]
  %v2021 = vadd.f32 %v2019, 1e-05
  %v2022 = vrsqrt.pop %v2021
  %v2023 = vmul.f32 %v2020, %v2022
  %v2024 = vld [vmem:[%s4] sm:$0x1]
  %v2025 = vmul.f32 %v1045, %v2023
  %v2026 = vsub.f32 %v2024, %v2025
  %v2028 = vlaneseq
  %v2029 = vshrl.u32 %v2028, 7
  %v2030 = vsub.s32 0, %v2029
  %v2031 = vrot.slane %v2023, %v2030
  %v2033 = vmul.f32 %v513, %v2031
  %v2034 = vmul.f32 %v516, %v2031
  %v2035 = vmul.f32 %v521, %v2031
  %v2036 = vmul.f32 %v524, %v2031
  %v2037 = vmul.f32 %v529, %v2031
  %v2038 = vmul.f32 %v532, %v2031
  %v2039 = vmul.f32 %v537, %v2031
  %v2040 = vmul.f32 %v540, %v2031
  %v2041 = vmul.f32 %v545, %v2031
  %v2042 = vmul.f32 %v548, %v2031
  %v2043 = vmul.f32 %v553, %v2031
  %v2044 = vmul.f32 %v556, %v2031
  %v2045 = vmul.f32 %v561, %v2031
  %v2046 = vmul.f32 %v564, %v2031
  %v2047 = vmul.f32 %v569, %v2031
  %v2048 = vmul.f32 %v572, %v2031
  %v2049 = vmul.f32 %v577, %v2031
  %v2050 = vmul.f32 %v580, %v2031
  %v2051 = vmul.f32 %v585, %v2031
  %v2052 = vmul.f32 %v588, %v2031
  %v2053 = vmul.f32 %v593, %v2031
  %v2054 = vmul.f32 %v596, %v2031
  %v2055 = vmul.f32 %v601, %v2031
  %v2056 = vmul.f32 %v604, %v2031
  %v2057 = vmul.f32 %v609, %v2031
  %v2058 = vmul.f32 %v612, %v2031
  %v2059 = vmul.f32 %v617, %v2031
  %v2060 = vmul.f32 %v620, %v2031
  %v2061 = vmul.f32 %v625, %v2031
  %v2062 = vmul.f32 %v628, %v2031
  %v2063 = vmul.f32 %v633, %v2031
  %v2064 = vmul.f32 %v636, %v2031
  %v2065 = vmul.f32 %v641, %v2031
  %v2066 = vmul.f32 %v644, %v2031
  %v2067 = vmul.f32 %v649, %v2031
  %v2068 = vmul.f32 %v652, %v2031
  %v2069 = vmul.f32 %v657, %v2031
  %v2070 = vmul.f32 %v660, %v2031
  %v2071 = vmul.f32 %v665, %v2031
  %v2072 = vmul.f32 %v668, %v2031
  %v2073 = vmul.f32 %v673, %v2031
  %v2074 = vmul.f32 %v676, %v2031
  %v2075 = vmul.f32 %v681, %v2031
  %v2076 = vmul.f32 %v684, %v2031
  %v2077 = vmul.f32 %v689, %v2031
  %v2078 = vmul.f32 %v692, %v2031
  %v2079 = vmul.f32 %v697, %v2031
  %v2080 = vmul.f32 %v700, %v2031
  %v2081 = vmul.f32 %v705, %v2031
  %v2082 = vmul.f32 %v708, %v2031
  %v2083 = vmul.f32 %v713, %v2031
  %v2084 = vmul.f32 %v716, %v2031
  %v2085 = vmul.f32 %v721, %v2031
  %v2086 = vmul.f32 %v724, %v2031
  %v2087 = vmul.f32 %v729, %v2031
  %v2088 = vmul.f32 %v732, %v2031
  %v2089 = vmul.f32 %v737, %v2031
  %v2090 = vmul.f32 %v740, %v2031
  %v2091 = vmul.f32 %v745, %v2031
  %v2092 = vmul.f32 %v748, %v2031
  %v2093 = vmul.f32 %v753, %v2031
  %v2094 = vmul.f32 %v756, %v2031
  %v2095 = vmul.f32 %v761, %v2031
  %v2096 = vmul.f32 %v764, %v2031
  %v2097 = vmul.f32 %v769, %v2031
  %v2098 = vmul.f32 %v772, %v2031
  %v2099 = vmul.f32 %v777, %v2031
  %v2100 = vmul.f32 %v780, %v2031
  %v2101 = vmul.f32 %v785, %v2031
  %v2102 = vmul.f32 %v788, %v2031
  %v2103 = vmul.f32 %v793, %v2031
  %v2104 = vmul.f32 %v796, %v2031
  %v2105 = vmul.f32 %v801, %v2031
  %v2106 = vmul.f32 %v804, %v2031
  %v2107 = vmul.f32 %v809, %v2031
  %v2108 = vmul.f32 %v812, %v2031
  %v2109 = vmul.f32 %v817, %v2031
  %v2110 = vmul.f32 %v820, %v2031
  %v2111 = vmul.f32 %v825, %v2031
  %v2112 = vmul.f32 %v828, %v2031
  %v2113 = vmul.f32 %v833, %v2031
  %v2114 = vmul.f32 %v836, %v2031
  %v2115 = vmul.f32 %v841, %v2031
  %v2116 = vmul.f32 %v844, %v2031
  %v2117 = vmul.f32 %v849, %v2031
  %v2118 = vmul.f32 %v852, %v2031
  %v2119 = vmul.f32 %v857, %v2031
  %v2120 = vmul.f32 %v860, %v2031
  %v2122 = vlaneseq
  %v2123 = vshrl.u32 %v2122, 7
  %v2124 = vsub.s32 0, %v2123
  %v2125 = vrot.slane %v2026, %v2124
  %v2127 = vadd.f32 %v2033, %v2125
  %v2128 = vadd.f32 %v2034, %v2125
  %v2129 = vadd.f32 %v2035, %v2125
  %v2130 = vadd.f32 %v2036, %v2125
  %v2131 = vadd.f32 %v2037, %v2125
  %v2132 = vadd.f32 %v2038, %v2125
  %v2133 = vadd.f32 %v2039, %v2125
  %v2134 = vadd.f32 %v2040, %v2125
  %v2135 = vadd.f32 %v2041, %v2125
  %v2136 = vadd.f32 %v2042, %v2125
  %v2137 = vadd.f32 %v2043, %v2125
  %v2138 = vadd.f32 %v2044, %v2125
  %v2139 = vadd.f32 %v2045, %v2125
  %v2140 = vadd.f32 %v2046, %v2125
  %v2141 = vadd.f32 %v2047, %v2125
  %v2142 = vadd.f32 %v2048, %v2125
  %v2143 = vadd.f32 %v2049, %v2125
  %v2144 = vadd.f32 %v2050, %v2125
  %v2145 = vadd.f32 %v2051, %v2125
  %v2146 = vadd.f32 %v2052, %v2125
  %v2147 = vadd.f32 %v2053, %v2125
  %v2148 = vadd.f32 %v2054, %v2125
  %v2149 = vadd.f32 %v2055, %v2125
  %v2150 = vadd.f32 %v2056, %v2125
  %v2151 = vadd.f32 %v2057, %v2125
  %v2152 = vadd.f32 %v2058, %v2125
  %v2153 = vadd.f32 %v2059, %v2125
  %v2154 = vadd.f32 %v2060, %v2125
  %v2155 = vadd.f32 %v2061, %v2125
  %v2156 = vadd.f32 %v2062, %v2125
  %v2157 = vadd.f32 %v2063, %v2125
  %v2158 = vadd.f32 %v2064, %v2125
  %v2159 = vadd.f32 %v2065, %v2125
  %v2160 = vadd.f32 %v2066, %v2125
  %v2161 = vadd.f32 %v2067, %v2125
  %v2162 = vadd.f32 %v2068, %v2125
  %v2163 = vadd.f32 %v2069, %v2125
  %v2164 = vadd.f32 %v2070, %v2125
  %v2165 = vadd.f32 %v2071, %v2125
  %v2166 = vadd.f32 %v2072, %v2125
  %v2167 = vadd.f32 %v2073, %v2125
  %v2168 = vadd.f32 %v2074, %v2125
  %v2169 = vadd.f32 %v2075, %v2125
  %v2170 = vadd.f32 %v2076, %v2125
  %v2171 = vadd.f32 %v2077, %v2125
  %v2172 = vadd.f32 %v2078, %v2125
  %v2173 = vadd.f32 %v2079, %v2125
  %v2174 = vadd.f32 %v2080, %v2125
  %v2175 = vadd.f32 %v2081, %v2125
  %v2176 = vadd.f32 %v2082, %v2125
  %v2177 = vadd.f32 %v2083, %v2125
  %v2178 = vadd.f32 %v2084, %v2125
  %v2179 = vadd.f32 %v2085, %v2125
  %v2180 = vadd.f32 %v2086, %v2125
  %v2181 = vadd.f32 %v2087, %v2125
  %v2182 = vadd.f32 %v2088, %v2125
  %v2183 = vadd.f32 %v2089, %v2125
  %v2184 = vadd.f32 %v2090, %v2125
  %v2185 = vadd.f32 %v2091, %v2125
  %v2186 = vadd.f32 %v2092, %v2125
  %v2187 = vadd.f32 %v2093, %v2125
  %v2188 = vadd.f32 %v2094, %v2125
  %v2189 = vadd.f32 %v2095, %v2125
  %v2190 = vadd.f32 %v2096, %v2125
  %v2191 = vadd.f32 %v2097, %v2125
  %v2192 = vadd.f32 %v2098, %v2125
  %v2193 = vadd.f32 %v2099, %v2125
  %v2194 = vadd.f32 %v2100, %v2125
  %v2195 = vadd.f32 %v2101, %v2125
  %v2196 = vadd.f32 %v2102, %v2125
  %v2197 = vadd.f32 %v2103, %v2125
  %v2198 = vadd.f32 %v2104, %v2125
  %v2199 = vadd.f32 %v2105, %v2125
  %v2200 = vadd.f32 %v2106, %v2125
  %v2201 = vadd.f32 %v2107, %v2125
  %v2202 = vadd.f32 %v2108, %v2125
  %v2203 = vadd.f32 %v2109, %v2125
  %v2204 = vadd.f32 %v2110, %v2125
  %v2205 = vadd.f32 %v2111, %v2125
  %v2206 = vadd.f32 %v2112, %v2125
  %v2207 = vadd.f32 %v2113, %v2125
  %v2208 = vadd.f32 %v2114, %v2125
  %v2209 = vadd.f32 %v2115, %v2125
  %v2210 = vadd.f32 %v2116, %v2125
  %v2211 = vadd.f32 %v2117, %v2125
  %v2212 = vadd.f32 %v2118, %v2125
  %v2213 = vadd.f32 %v2119, %v2125
  %v2214 = vadd.f32 %v2120, %v2125
  %v2215 = vmax.f32 %v2127, 0.0
  %v2216 = vmax.f32 %v2128, 0.0
  %v2217 = vmax.f32 %v2129, 0.0
  %v2218 = vmax.f32 %v2130, 0.0
  %v2219 = vmax.f32 %v2131, 0.0
  %v2220 = vmax.f32 %v2132, 0.0
  %v2221 = vmax.f32 %v2133, 0.0
  %v2222 = vmax.f32 %v2134, 0.0
  %v2223 = vmax.f32 %v2135, 0.0
  %v2224 = vmax.f32 %v2136, 0.0
  %v2225 = vmax.f32 %v2137, 0.0
  %v2226 = vmax.f32 %v2138, 0.0
  %v2227 = vmax.f32 %v2139, 0.0
  %v2228 = vmax.f32 %v2140, 0.0
  %v2229 = vmax.f32 %v2141, 0.0
  %v2230 = vmax.f32 %v2142, 0.0
  %v2231 = vmax.f32 %v2143, 0.0
  %v2232 = vmax.f32 %v2144, 0.0
  %v2233 = vmax.f32 %v2145, 0.0
  %v2234 = vmax.f32 %v2146, 0.0
  %v2235 = vmax.f32 %v2147, 0.0
  %v2236 = vmax.f32 %v2148, 0.0
  %v2237 = vmax.f32 %v2149, 0.0
  %v2238 = vmax.f32 %v2150, 0.0
  %v2239 = vmax.f32 %v2151, 0.0
  %v2240 = vmax.f32 %v2152, 0.0
  %v2241 = vmax.f32 %v2153, 0.0
  %v2242 = vmax.f32 %v2154, 0.0
  %v2243 = vmax.f32 %v2155, 0.0
  %v2244 = vmax.f32 %v2156, 0.0
  %v2245 = vmax.f32 %v2157, 0.0
  %v2246 = vmax.f32 %v2158, 0.0
  %v2247 = vmax.f32 %v2159, 0.0
  %v2248 = vmax.f32 %v2160, 0.0
  %v2249 = vmax.f32 %v2161, 0.0
  %v2250 = vmax.f32 %v2162, 0.0
  %v2251 = vmax.f32 %v2163, 0.0
  %v2252 = vmax.f32 %v2164, 0.0
  %v2253 = vmax.f32 %v2165, 0.0
  %v2254 = vmax.f32 %v2166, 0.0
  %v2255 = vmax.f32 %v2167, 0.0
  %v2256 = vmax.f32 %v2168, 0.0
  %v2257 = vmax.f32 %v2169, 0.0
  %v2258 = vmax.f32 %v2170, 0.0
  %v2259 = vmax.f32 %v2171, 0.0
  %v2260 = vmax.f32 %v2172, 0.0
  %v2261 = vmax.f32 %v2173, 0.0
  %v2262 = vmax.f32 %v2174, 0.0
  %v2263 = vmax.f32 %v2175, 0.0
  %v2264 = vmax.f32 %v2176, 0.0
  %v2265 = vmax.f32 %v2177, 0.0
  %v2266 = vmax.f32 %v2178, 0.0
  %v2267 = vmax.f32 %v2179, 0.0
  %v2268 = vmax.f32 %v2180, 0.0
  %v2269 = vmax.f32 %v2181, 0.0
  %v2270 = vmax.f32 %v2182, 0.0
  %v2271 = vmax.f32 %v2183, 0.0
  %v2272 = vmax.f32 %v2184, 0.0
  %v2273 = vmax.f32 %v2185, 0.0
  %v2274 = vmax.f32 %v2186, 0.0
  %v2275 = vmax.f32 %v2187, 0.0
  %v2276 = vmax.f32 %v2188, 0.0
  %v2277 = vmax.f32 %v2189, 0.0
  %v2278 = vmax.f32 %v2190, 0.0
  %v2279 = vmax.f32 %v2191, 0.0
  %v2280 = vmax.f32 %v2192, 0.0
  %v2281 = vmax.f32 %v2193, 0.0
  %v2282 = vmax.f32 %v2194, 0.0
  %v2283 = vmax.f32 %v2195, 0.0
  %v2284 = vmax.f32 %v2196, 0.0
  %v2285 = vmax.f32 %v2197, 0.0
  %v2286 = vmax.f32 %v2198, 0.0
  %v2287 = vmax.f32 %v2199, 0.0
  %v2288 = vmax.f32 %v2200, 0.0
  %v2289 = vmax.f32 %v2201, 0.0
  %v2290 = vmax.f32 %v2202, 0.0
  %v2291 = vmax.f32 %v2203, 0.0
  %v2292 = vmax.f32 %v2204, 0.0
  %v2293 = vmax.f32 %v2205, 0.0
  %v2294 = vmax.f32 %v2206, 0.0
  %v2295 = vmax.f32 %v2207, 0.0
  %v2296 = vmax.f32 %v2208, 0.0
  %v2297 = vmax.f32 %v2209, 0.0
  %v2298 = vmax.f32 %v2210, 0.0
  %v2299 = vmax.f32 %v2211, 0.0
  %v2300 = vmax.f32 %v2212, 0.0
  %v2301 = vmax.f32 %v2213, 0.0
  %v2302 = vmax.f32 %v2214, 0.0
  %v2303 = vmax.f32 %v2215, %v2237
  %v2304 = vmax.f32 %v2216, %v2238
  %v2305 = vmax.f32 %v2217, %v2239
  %v2306 = vmax.f32 %v2218, %v2240
  %v2307 = vmax.f32 %v2219, %v2241
  %v2308 = vmax.f32 %v2220, %v2242
  %v2309 = vmax.f32 %v2221, %v2243
  %v2310 = vmax.f32 %v2222, %v2244
  %v2311 = vmax.f32 %v2223, %v2245
  %v2312 = vmax.f32 %v2224, %v2246
  %v2313 = vmax.f32 %v2225, %v2247
  %v2314 = vmax.f32 %v2226, %v2248
  %v2315 = vmax.f32 %v2227, %v2249
  %v2316 = vmax.f32 %v2228, %v2250
  %v2317 = vmax.f32 %v2229, %v2251
  %v2318 = vmax.f32 %v2230, %v2252
  %v2319 = vmax.f32 %v2231, %v2253
  %v2320 = vmax.f32 %v2232, %v2254
  %v2321 = vmax.f32 %v2233, %v2255
  %v2322 = vmax.f32 %v2234, %v2256
  %v2323 = vmax.f32 %v2235, %v2257
  %v2324 = vmax.f32 %v2236, %v2258
  %v2325 = vmax.f32 %v2259, %v2281
  %v2326 = vmax.f32 %v2260, %v2282
  %v2327 = vmax.f32 %v2261, %v2283
  %v2328 = vmax.f32 %v2262, %v2284
  %v2329 = vmax.f32 %v2263, %v2285
  %v2330 = vmax.f32 %v2264, %v2286
  %v2331 = vmax.f32 %v2265, %v2287
  %v2332 = vmax.f32 %v2266, %v2288
  %v2333 = vmax.f32 %v2267, %v2289
  %v2334 = vmax.f32 %v2268, %v2290
  %v2335 = vmax.f32 %v2269, %v2291
  %v2336 = vmax.f32 %v2270, %v2292
  %v2337 = vmax.f32 %v2271, %v2293
  %v2338 = vmax.f32 %v2272, %v2294
  %v2339 = vmax.f32 %v2273, %v2295
  %v2340 = vmax.f32 %v2274, %v2296
  %v2341 = vmax.f32 %v2275, %v2297
  %v2342 = vmax.f32 %v2276, %v2298
  %v2343 = vmax.f32 %v2277, %v2299
  %v2344 = vmax.f32 %v2278, %v2300
  %v2345 = vmax.f32 %v2279, %v2301
  %v2346 = vmax.f32 %v2280, %v2302
  %v2347 = vmax.f32 %v2303, %v2325
  %v2348 = vmax.f32 %v2304, %v2326
  %v2349 = vmax.f32 %v2305, %v2327
  %v2350 = vmax.f32 %v2306, %v2328
  %v2351 = vmax.f32 %v2307, %v2329
  %v2352 = vmax.f32 %v2308, %v2330
  %v2353 = vmax.f32 %v2309, %v2331
  %v2354 = vmax.f32 %v2310, %v2332
  %v2355 = vmax.f32 %v2311, %v2333
  %v2356 = vmax.f32 %v2312, %v2334
  %v2357 = vmax.f32 %v2313, %v2335
  %v2358 = vmax.f32 %v2314, %v2336
  %v2359 = vmax.f32 %v2315, %v2337
  %v2360 = vmax.f32 %v2316, %v2338
  %v2361 = vmax.f32 %v2317, %v2339
  %v2362 = vmax.f32 %v2318, %v2340
  %v2363 = vmax.f32 %v2319, %v2341
  %v2364 = vmax.f32 %v2320, %v2342
  %v2365 = vmax.f32 %v2321, %v2343
  %v2366 = vmax.f32 %v2322, %v2344
  %v2367 = vmax.f32 %v2323, %v2345
  %v2368 = vmax.f32 %v2324, %v2346
  %v2369 = vpack.c.bf16 %v2348, %v2347
  %v2370 = vpack.c.bf16 %v2350, %v2349
  %v2371 = vpack.c.bf16 %v2352, %v2351
  %v2372 = vpack.c.bf16 %v2354, %v2353
  %v2373 = vpack.c.bf16 %v2356, %v2355
  %v2374 = vpack.c.bf16 %v2358, %v2357
  %v2375 = vpack.c.bf16 %v2360, %v2359
  %v2376 = vpack.c.bf16 %v2362, %v2361
  %v2377 = vpack.c.bf16 %v2364, %v2363
  %v2378 = vpack.c.bf16 %v2366, %v2365
  %v2379 = vpack.c.bf16 %v2368, %v2367
  %v2391 = vunpack.c.l.b16 %v2369
  %v2392 = vunpack.c.h.b16 %v2369
  %v2393 = vunpack.c.l.b16 %v2370
  %v2394 = vunpack.c.h.b16 %v2370
  %v2395 = vunpack.c.l.b16 %v2371
  %v2396 = vunpack.c.h.b16 %v2371
  %v2397 = vunpack.c.l.b16 %v2372
  %v2398 = vunpack.c.h.b16 %v2372
  %v2399 = vunpack.c.l.b16 %v2373
  %v2400 = vunpack.c.h.b16 %v2373
  %v2401 = vunpack.c.l.b16 %v2374
  %v2402 = vunpack.c.h.b16 %v2374
  %v2403 = vunpack.c.l.b16 %v2375
  %v2404 = vunpack.c.h.b16 %v2375
  %v2405 = vunpack.c.l.b16 %v2376
  %v2406 = vunpack.c.h.b16 %v2376
  %v2407 = vunpack.c.l.b16 %v2377
  %v2408 = vunpack.c.h.b16 %v2377
  %v2409 = vunpack.c.l.b16 %v2378
  %v2410 = vunpack.c.h.b16 %v2378
  %v2411 = vunpack.c.l.b16 %v2379
  %v2412 = vunpack.c.h.b16 %v2379
  %v2413 = vpack.c.b16 %v2391, %v2391
  %v2414 = vpack.c.b16 %v2392, %v2392
  %v2415 = vpack.c.b16 %v2393, %v2393
  %v2416 = vpack.c.b16 %v2394, %v2394
  %v2417 = vpack.c.b16 %v2395, %v2395
  %v2418 = vpack.c.b16 %v2396, %v2396
  %v2419 = vpack.c.b16 %v2397, %v2397
  %v2420 = vpack.c.b16 %v2398, %v2398
  %v2421 = vpack.c.b16 %v2399, %v2399
  %v2422 = vpack.c.b16 %v2400, %v2400
  %v2423 = vpack.c.b16 %v2401, %v2401
  %v2424 = vpack.c.b16 %v2402, %v2402
  %v2425 = vpack.c.b16 %v2403, %v2403
  %v2426 = vpack.c.b16 %v2404, %v2404
  %v2427 = vpack.c.b16 %v2405, %v2405
  %v2428 = vpack.c.b16 %v2406, %v2406
  %v2429 = vpack.c.b16 %v2407, %v2407
  %v2430 = vpack.c.b16 %v2408, %v2408
  %v2431 = vpack.c.b16 %v2409, %v2409
  %v2432 = vpack.c.b16 %v2410, %v2410
  %v2433 = vpack.c.b16 %v2411, %v2411
  %v2434 = vpack.c.b16 %v2412, %v2412
  %vm2457 = vcmask 519168
  %2458 = vst.msk [vmem:[%s5] sm:$0xf] %vm2457, %v2413
  %2459 = vst.msk [vmem:[%s5 + $0x4] sm:$0xf] %vm2457, %v2414
  %2460 = vst.msk [vmem:[%s5 + $0x8] sm:$0xf] %vm2457, %v2415
  %2461 = vst.msk [vmem:[%s5 + $0xc] sm:$0xf] %vm2457, %v2416
  %2462 = vst.msk [vmem:[%s5 + $0x10] sm:$0xf] %vm2457, %v2417
  %2463 = vst.msk [vmem:[%s5 + $0x14] sm:$0xf] %vm2457, %v2418
  %2464 = vst.msk [vmem:[%s5 + $0x18] sm:$0xf] %vm2457, %v2419
  %2465 = vst.msk [vmem:[%s5 + $0x1c] sm:$0xf] %vm2457, %v2420
  %2466 = vst.msk [vmem:[%s5 + $0x20] sm:$0xf] %vm2457, %v2421
  %2467 = vst.msk [vmem:[%s5 + $0x24] sm:$0xf] %vm2457, %v2422
  %2468 = vst.msk [vmem:[%s5 + $0x28] sm:$0xf] %vm2457, %v2423
  %2469 = vst.msk [vmem:[%s5 + $0x2c] sm:$0xf] %vm2457, %v2424
  %2470 = vst.msk [vmem:[%s5 + $0x30] sm:$0xf] %vm2457, %v2425
  %2471 = vst.msk [vmem:[%s5 + $0x34] sm:$0xf] %vm2457, %v2426
  %2472 = vst.msk [vmem:[%s5 + $0x38] sm:$0xf] %vm2457, %v2427
  %2473 = vst.msk [vmem:[%s5 + $0x3c] sm:$0xf] %vm2457, %v2428
  %2474 = vst.msk [vmem:[%s5 + $0x40] sm:$0xf] %vm2457, %v2429
  %2475 = vst.msk [vmem:[%s5 + $0x44] sm:$0xf] %vm2457, %v2430
  %2476 = vst.msk [vmem:[%s5 + $0x48] sm:$0xf] %vm2457, %v2431
  %2477 = vst.msk [vmem:[%s5 + $0x4c] sm:$0xf] %vm2457, %v2432
  %2478 = vst.msk [vmem:[%s5 + $0x50] sm:$0xf] %vm2457, %v2433
  %2479 = vst.msk [vmem:[%s5 + $0x54] sm:$0xf] %vm2457, %v2434
  // Predicated region
  $region22: #{forward.4} parent=0 // pred_check
    _
  $region23: #{forward.4} parent=0 // pred_check_branch
    %2481 = sbr.rel (0) target = $region25
  $region24: #{forward.4} parent=0 // pred_region
    _
  $region25: #{forward.4} parent=0 // pred_fallthru
    _
  // Predicated region
  $region26: #{forward.4} parent=0 // pred_check
    _
  $region27: #{forward.4} parent=0 // pred_check_branch
    %2483 = sbr.rel (0) target = $region29
  $region28: #{forward.4} parent=0 // pred_region
    _
  $region29: #{forward.4} parent=0 // pred_fallthru
    _

// kernel: forward.5
$region0: #{forward.5}
  #allocation0 [shape = 'u32[]', space=smem, size = 0x4, offset = 0x4, fixed_abs, tag = 'smem constant byte address 0x4 - core index']
  #allocation1 [shape = 'u32[144,128]{1,0:T(1,128)}', space=vmem, size = 0x12000, scoped, tag = 'internal scratch']
  %s0 = inlined_call_operand.vmem [shape: bf16[160,576], index: 0, kind: input, shape index: {}]
  %s1 = inlined_call_operand.vmem [shape: bf16[576,64], index: 1, kind: input, shape index: {}]
  %s2 = inlined_call_operand.vmem [shape: f32[160,1], index: 2, kind: input, shape index: {}]
  %s3 = inlined_call_operand.vmem [shape: f32[1,64], index: 3, kind: input, shape index: {}]
  %s4 = inlined_call_operand.vmem [shape: f32[1,64], index: 4, kind: input, shape index: {}]
  %s5 = inlined_call_operand.vmem [shape: bf16[32,64], index: 5, kind: output, shape index: {}]
  %s6 = sld [smem:[#allocation0]]
  $region30: #{forward.5} parent=0
    _
  %s8 = ssub.s32 1, %s6
  %s9 = scalar_select 0, %s8, %s6
  // Predicated region
  $region2: #{forward.5} parent=0 // pred_check
    _
  $region3: #{forward.5} parent=0 // pred_check_branch
    %11 = sbr.rel (0) target = $region5
  $region4: #{forward.5} parent=0 // pred_region
    _
  $region5: #{forward.5} parent=0 // pred_fallthru
    _
  // Predicated region
  $region6: #{forward.5} parent=0 // pred_check
    _
  $region7: #{forward.5} parent=0 // pred_check_branch
    %13 = sbr.rel (0) target = $region9
  $region8: #{forward.5} parent=0 // pred_region
    _
  $region9: #{forward.5} parent=0 // pred_fallthru
    _
  // Predicated region
  $region10: #{forward.5} parent=0 // pred_check
    _
  $region11: #{forward.5} parent=0 // pred_check_branch
    %15 = sbr.rel (0) target = $region13
  $region12: #{forward.5} parent=0 // pred_region
    _
  $region13: #{forward.5} parent=0 // pred_fallthru
    _
  // Predicated region
  $region14: #{forward.5} parent=0 // pred_check
    _
  $region15: #{forward.5} parent=0 // pred_check_branch
    %17 = sbr.rel (0) target = $region17
  $region16: #{forward.5} parent=0 // pred_region
    _
  $region17: #{forward.5} parent=0 // pred_fallthru
    _
  // Predicated region
  $region18: #{forward.5} parent=0 // pred_check
    _
  $region19: #{forward.5} parent=0 // pred_check_branch
    %19 = sbr.rel (0) target = $region21
  $region20: #{forward.5} parent=0 // pred_region
    _
  $region21: #{forward.5} parent=0 // pred_fallthru
    _
  %v21 = vld [vmem:[%s0] sm:$0xff]
  %v22 = vld [vmem:[%s0 + $0x8] sm:$0xff]
  %v23 = vld [vmem:[%s0 + $0x10] sm:$0xf]
  %v24 = vld [vmem:[%s0 + $0x14] sm:$0xff]
  %v25 = vld [vmem:[%s0 + $0x1c] sm:$0xff]
  %v26 = vld [vmem:[%s0 + $0x24] sm:$0xf]
  %v27 = vld [vmem:[%s0 + $0x28] sm:$0xff]
  %v28 = vld [vmem:[%s0 + $0x30] sm:$0xff]
  %v29 = vld [vmem:[%s0 + $0x38] sm:$0xf]
  %v30 = vld [vmem:[%s0 + $0x3c] sm:$0xff]
  %v31 = vld [vmem:[%s0 + $0x44] sm:$0xff]
  %v32 = vld [vmem:[%s0 + $0x4c] sm:$0xf]
  %v33 = vld [vmem:[%s0 + $0x50] sm:$0xff]
  %v34 = vld [vmem:[%s0 + $0x58] sm:$0xff]
  %v35 = vld [vmem:[%s0 + $0x60] sm:$0xf]
  %v36 = vld [vmem:[%s0 + $0x64] sm:$0xff]
  %v37 = vld [vmem:[%s0 + $0x6c] sm:$0xff]
  %v38 = vld [vmem:[%s0 + $0x74] sm:$0xf]
  %v39 = vld [vmem:[%s0 + $0x78] sm:$0xff]
  %v40 = vld [vmem:[%s0 + $0x80] sm:$0xff]
  %v41 = vld [vmem:[%s0 + $0x88] sm:$0xf]
  %v42 = vld [vmem:[%s0 + $0x8c] sm:$0xff]
  %v43 = vld [vmem:[%s0 + $0x94] sm:$0xff]
  %v44 = vld [vmem:[%s0 + $0x9c] sm:$0xf]
  %v45 = vld [vmem:[%s0 + $0xa0] sm:$0xff]
  %v46 = vld [vmem:[%s0 + $0xa8] sm:$0xff]
  %v47 = vld [vmem:[%s0 + $0xb0] sm:$0xf]
  %v48 = vld [vmem:[%s0 + $0xb4] sm:$0xff]
  %v49 = vld [vmem:[%s0 + $0xbc] sm:$0xff]
  %v50 = vld [vmem:[%s0 + $0xc4] sm:$0xf]
  %v51 = vld [vmem:[%s0 + $0xc8] sm:$0xff]
  %v52 = vld [vmem:[%s0 + $0xd0] sm:$0xff]
  %v53 = vld [vmem:[%s0 + $0xd8] sm:$0xf]
  %v54 = vld [vmem:[%s0 + $0xdc] sm:$0xff]
  %v55 = vld [vmem:[%s0 + $0xe4] sm:$0xff]
  %v56 = vld [vmem:[%s0 + $0xec] sm:$0xf]
  %v57 = vld [vmem:[%s0 + $0xf0] sm:$0xff]
  %v58 = vld [vmem:[%s0 + $0xf8] sm:$0xff]
  %v59 = vld [vmem:[%s0 + $0x100] sm:$0xf]
  %v60 = vld [vmem:[%s0 + $0x104] sm:$0xff]
  %v61 = vld [vmem:[%s0 + $0x10c] sm:$0xff]
  %v62 = vld [vmem:[%s0 + $0x114] sm:$0xf]
  %v63 = vld [vmem:[%s0 + $0x118] sm:$0xff]
  %v64 = vld [vmem:[%s0 + $0x120] sm:$0xff]
  %v65 = vld [vmem:[%s0 + $0x128] sm:$0xf]
  %v66 = vld [vmem:[%s0 + $0x12c] sm:$0xff]
  %v67 = vld [vmem:[%s0 + $0x134] sm:$0xff]
  %v68 = vld [vmem:[%s0 + $0x13c] sm:$0xf]
  %v69 = vld [vmem:[%s0 + $0x140] sm:$0xff]
  %v70 = vld [vmem:[%s0 + $0x148] sm:$0xff]
  %v71 = vld [vmem:[%s0 + $0x150] sm:$0xf]
  %v72 = vld [vmem:[%s0 + $0x154] sm:$0xff]
  %v73 = vld [vmem:[%s0 + $0x15c] sm:$0xff]
  %v74 = vld [vmem:[%s0 + $0x164] sm:$0xf]
  %v75 = vld [vmem:[%s0 + $0x168] sm:$0xff]
  %v76 = vld [vmem:[%s0 + $0x170] sm:$0xff]
  %v77 = vld [vmem:[%s0 + $0x178] sm:$0xf]
  %v78 = vld [vmem:[%s0 + $0x17c] sm:$0xff]
  %v79 = vld [vmem:[%s0 + $0x184] sm:$0xff]
  %v80 = vld [vmem:[%s0 + $0x18c] sm:$0xf]
  %v81 = vld [vmem:[%s1] sm:$0xf]
  %v82 = vld [vmem:[%s1 + $0x4] sm:$0xf]
  %v83 = vld [vmem:[%s1 + $0x8] sm:$0xf]
  %v84 = vld [vmem:[%s1 + $0xc] sm:$0xf]
  %v85 = vld [vmem:[%s1 + $0x10] sm:$0xf]
  %v86 = vld [vmem:[%s1 + $0x14] sm:$0xf]
  %v87 = vld [vmem:[%s1 + $0x18] sm:$0xf]
  %v88 = vld [vmem:[%s1 + $0x1c] sm:$0xf]
  %v89 = vld [vmem:[%s1 + $0x20] sm:$0xf]
  %v90 = vld [vmem:[%s1 + $0x24] sm:$0xf]
  %v91 = vld [vmem:[%s1 + $0x28] sm:$0xf]
  %v92 = vld [vmem:[%s1 + $0x2c] sm:$0xf]
  %v93 = vld [vmem:[%s1 + $0x30] sm:$0xf]
  %v94 = vld [vmem:[%s1 + $0x34] sm:$0xf]
  %v95 = vld [vmem:[%s1 + $0x38] sm:$0xf]
  %v96 = vld [vmem:[%s1 + $0x3c] sm:$0xf]
  %v97 = vld [vmem:[%s1 + $0x40] sm:$0xf]
  %v98 = vld [vmem:[%s1 + $0x44] sm:$0xf]
  %v99 = vld [vmem:[%s1 + $0x48] sm:$0xf]
  %v100 = vld [vmem:[%s1 + $0x4c] sm:$0xf]
  %v101 = vld [vmem:[%s1 + $0x50] sm:$0xf]
  %v102 = vld [vmem:[%s1 + $0x54] sm:$0xf]
  %v103 = vld [vmem:[%s1 + $0x58] sm:$0xf]
  %v104 = vld [vmem:[%s1 + $0x5c] sm:$0xf]
  %v105 = vld [vmem:[%s1 + $0x60] sm:$0xf]
  %v106 = vld [vmem:[%s1 + $0x64] sm:$0xf]
  %v107 = vld [vmem:[%s1 + $0x68] sm:$0xf]
  %v108 = vld [vmem:[%s1 + $0x6c] sm:$0xf]
  %v109 = vld [vmem:[%s1 + $0x70] sm:$0xf]
  %v110 = vld [vmem:[%s1 + $0x74] sm:$0xf]
  %v111 = vld [vmem:[%s1 + $0x78] sm:$0xf]
  %v112 = vld [vmem:[%s1 + $0x7c] sm:$0xf]
  %v113 = vld [vmem:[%s1 + $0x80] sm:$0xf]
  %v114 = vld [vmem:[%s1 + $0x84] sm:$0xf]
  %v115 = vld [vmem:[%s1 + $0x88] sm:$0xf]
  %v116 = vld [vmem:[%s1 + $0x8c] sm:$0xf]
  %v117 = vld [vmem:[%s1 + $0x90] sm:$0xf]
  %v118 = vld [vmem:[%s1 + $0x94] sm:$0xf]
  %v119 = vld [vmem:[%s1 + $0x98] sm:$0xf]
  %v120 = vld [vmem:[%s1 + $0x9c] sm:$0xf]
  %v121 = vld [vmem:[%s1 + $0xa0] sm:$0xf]
  %v122 = vld [vmem:[%s1 + $0xa4] sm:$0xf]
  %v123 = vld [vmem:[%s1 + $0xa8] sm:$0xf]
  %v124 = vld [vmem:[%s1 + $0xac] sm:$0xf]
  %v125 = vld [vmem:[%s1 + $0xb0] sm:$0xf]
  %v126 = vld [vmem:[%s1 + $0xb4] sm:$0xf]
  %v127 = vld [vmem:[%s1 + $0xb8] sm:$0xf]
  %v128 = vld [vmem:[%s1 + $0xbc] sm:$0xf]
  %v129 = vld [vmem:[%s1 + $0xc0] sm:$0xf]
  %v130 = vld [vmem:[%s1 + $0xc4] sm:$0xf]
  %v131 = vld [vmem:[%s1 + $0xc8] sm:$0xf]
  %v132 = vld [vmem:[%s1 + $0xcc] sm:$0xf]
  %v133 = vld [vmem:[%s1 + $0xd0] sm:$0xf]
  %v134 = vld [vmem:[%s1 + $0xd4] sm:$0xf]
  %v135 = vld [vmem:[%s1 + $0xd8] sm:$0xf]
  %v136 = vld [vmem:[%s1 + $0xdc] sm:$0xf]
  %v137 = vld [vmem:[%s1 + $0xe0] sm:$0xf]
  %v138 = vld [vmem:[%s1 + $0xe4] sm:$0xf]
  %v139 = vld [vmem:[%s1 + $0xe8] sm:$0xf]
  %v140 = vld [vmem:[%s1 + $0xec] sm:$0xf]
  %v141 = vld [vmem:[%s1 + $0xf0] sm:$0xf]
  %v142 = vld [vmem:[%s1 + $0xf4] sm:$0xf]
  %v143 = vld [vmem:[%s1 + $0xf8] sm:$0xf]
  %v144 = vld [vmem:[%s1 + $0xfc] sm:$0xf]
  %v145 = vld [vmem:[%s1 + $0x100] sm:$0xf]
  %v146 = vld [vmem:[%s1 + $0x104] sm:$0xf]
  %v147 = vld [vmem:[%s1 + $0x108] sm:$0xf]
  %v148 = vld [vmem:[%s1 + $0x10c] sm:$0xf]
  %v149 = vld [vmem:[%s1 + $0x110] sm:$0xf]
  %v150 = vld [vmem:[%s1 + $0x114] sm:$0xf]
  %v151 = vld [vmem:[%s1 + $0x118] sm:$0xf]
  %v152 = vld [vmem:[%s1 + $0x11c] sm:$0xf]
  %v213 = vunpack.c.l.b16 %v21
  %v214 = vunpack.c.h.b16 %v21
  %v215 = vunpack.c.l.b16 %v22
  %v216 = vunpack.c.h.b16 %v22
  %v217 = vunpack.c.l.b16 %v23
  %v218 = vunpack.c.l.b16 %v24
  %v219 = vunpack.c.h.b16 %v24
  %v220 = vunpack.c.l.b16 %v25
  %v221 = vunpack.c.h.b16 %v25
  %v222 = vunpack.c.l.b16 %v26
  %v223 = vunpack.c.l.b16 %v27
  %v224 = vunpack.c.h.b16 %v27
  %v225 = vunpack.c.l.b16 %v28
  %v226 = vunpack.c.h.b16 %v28
  %v227 = vunpack.c.l.b16 %v29
  %v228 = vunpack.c.l.b16 %v30
  %v229 = vunpack.c.h.b16 %v30
  %v230 = vunpack.c.l.b16 %v31
  %v231 = vunpack.c.h.b16 %v31
  %v232 = vunpack.c.l.b16 %v32
  %v233 = vunpack.c.l.b16 %v33
  %v234 = vunpack.c.h.b16 %v33
  %v235 = vunpack.c.l.b16 %v34
  %v236 = vunpack.c.h.b16 %v34
  %v237 = vunpack.c.l.b16 %v35
  %v238 = vunpack.c.l.b16 %v36
  %v239 = vunpack.c.h.b16 %v36
  %v240 = vunpack.c.l.b16 %v37
  %v241 = vunpack.c.h.b16 %v37
  %v242 = vunpack.c.l.b16 %v38
  %v243 = vunpack.c.l.b16 %v39
  %v244 = vunpack.c.h.b16 %v39
  %v245 = vunpack.c.l.b16 %v40
  %v246 = vunpack.c.h.b16 %v40
  %v247 = vunpack.c.l.b16 %v41
  %v248 = vunpack.c.l.b16 %v42
  %v249 = vunpack.c.h.b16 %v42
  %v250 = vunpack.c.l.b16 %v43
  %v251 = vunpack.c.h.b16 %v43
  %v252 = vunpack.c.l.b16 %v44
  %v253 = vunpack.c.l.b16 %v45
  %v254 = vunpack.c.h.b16 %v45
  %v255 = vunpack.c.l.b16 %v46
  %v256 = vunpack.c.h.b16 %v46
  %v257 = vunpack.c.l.b16 %v47
  %v258 = vunpack.c.l.b16 %v48
  %v259 = vunpack.c.h.b16 %v48
  %v260 = vunpack.c.l.b16 %v49
  %v261 = vunpack.c.h.b16 %v49
  %v262 = vunpack.c.l.b16 %v50
  %v263 = vunpack.c.l.b16 %v51
  %v264 = vunpack.c.h.b16 %v51
  %v265 = vunpack.c.l.b16 %v52
  %v266 = vunpack.c.h.b16 %v52
  %v267 = vunpack.c.l.b16 %v53
  %v268 = vunpack.c.l.b16 %v54
  %v269 = vunpack.c.h.b16 %v54
  %v270 = vunpack.c.l.b16 %v55
  %v271 = vunpack.c.h.b16 %v55
  %v272 = vunpack.c.l.b16 %v56
  %v273 = vunpack.c.l.b16 %v57
  %v274 = vunpack.c.h.b16 %v57
  %v275 = vunpack.c.l.b16 %v58
  %v276 = vunpack.c.h.b16 %v58
  %v277 = vunpack.c.l.b16 %v59
  %v278 = vunpack.c.l.b16 %v60
  %v279 = vunpack.c.h.b16 %v60
  %v280 = vunpack.c.l.b16 %v61
  %v281 = vunpack.c.h.b16 %v61
  %v282 = vunpack.c.l.b16 %v62
  %v283 = vunpack.c.l.b16 %v63
  %v284 = vunpack.c.h.b16 %v63
  %v285 = vunpack.c.l.b16 %v64
  %v286 = vunpack.c.h.b16 %v64
  %v287 = vunpack.c.l.b16 %v65
  %v288 = vunpack.c.l.b16 %v66
  %v289 = vunpack.c.h.b16 %v66
  %v290 = vunpack.c.l.b16 %v67
  %v291 = vunpack.c.h.b16 %v67
  %v292 = vunpack.c.l.b16 %v68
  %v293 = vunpack.c.l.b16 %v69
  %v294 = vunpack.c.h.b16 %v69
  %v295 = vunpack.c.l.b16 %v70
  %v296 = vunpack.c.h.b16 %v70
  %v297 = vunpack.c.l.b16 %v71
  %v298 = vunpack.c.l.b16 %v72
  %v299 = vunpack.c.h.b16 %v72
  %v300 = vunpack.c.l.b16 %v73
  %v301 = vunpack.c.h.b16 %v73
  %v302 = vunpack.c.l.b16 %v74
  %v303 = vunpack.c.l.b16 %v75
  %v304 = vunpack.c.h.b16 %v75
  %v305 = vunpack.c.l.b16 %v76
  %v306 = vunpack.c.h.b16 %v76
  %v307 = vunpack.c.l.b16 %v77
  %v308 = vunpack.c.l.b16 %v78
  %v309 = vunpack.c.h.b16 %v78
  %v310 = vunpack.c.l.b16 %v79
  %v311 = vunpack.c.h.b16 %v79
  %v312 = vunpack.c.l.b16 %v80
  %v313 = vpack.c.b16 %v218, %v213
  %v314 = vpack.c.b16 %v219, %v214
  %v315 = vpack.c.b16 %v220, %v215
  %v316 = vpack.c.b16 %v221, %v216
  %v317 = vpack.c.b16 %v222, %v217
  %v318 = vpack.c.b16 %v228, %v223
  %v319 = vpack.c.b16 %v229, %v224
  %v320 = vpack.c.b16 %v230, %v225
  %v321 = vpack.c.b16 %v231, %v226
  %v322 = vpack.c.b16 %v232, %v227
  %v323 = vpack.c.b16 %v238, %v233
  %v324 = vpack.c.b16 %v239, %v234
  %v325 = vpack.c.b16 %v240, %v235
  %v326 = vpack.c.b16 %v241, %v236
  %v327 = vpack.c.b16 %v242, %v237
  %v328 = vpack.c.b16 %v248, %v243
  %v329 = vpack.c.b16 %v249, %v244
  %v330 = vpack.c.b16 %v250, %v245
  %v331 = vpack.c.b16 %v251, %v246
  %v332 = vpack.c.b16 %v252, %v247
  %v333 = vpack.c.b16 %v258, %v253
  %v334 = vpack.c.b16 %v259, %v254
  %v335 = vpack.c.b16 %v260, %v255
  %v336 = vpack.c.b16 %v261, %v256
  %v337 = vpack.c.b16 %v262, %v257
  %v338 = vpack.c.b16 %v268, %v263
  %v339 = vpack.c.b16 %v269, %v264
  %v340 = vpack.c.b16 %v270, %v265
  %v341 = vpack.c.b16 %v271, %v266
  %v342 = vpack.c.b16 %v272, %v267
  %v343 = vpack.c.b16 %v278, %v273
  %v344 = vpack.c.b16 %v279, %v274
  %v345 = vpack.c.b16 %v280, %v275
  %v346 = vpack.c.b16 %v281, %v276
  %v347 = vpack.c.b16 %v282, %v277
  %v348 = vpack.c.b16 %v288, %v283
  %v349 = vpack.c.b16 %v289, %v284
  %v350 = vpack.c.b16 %v290, %v285
  %v351 = vpack.c.b16 %v291, %v286
  %v352 = vpack.c.b16 %v292, %v287
  %v353 = vpack.c.b16 %v298, %v293
  %v354 = vpack.c.b16 %v299, %v294
  %v355 = vpack.c.b16 %v300, %v295
  %v356 = vpack.c.b16 %v301, %v296
  %v357 = vpack.c.b16 %v302, %v297
  %v358 = vpack.c.b16 %v308, %v303
  %v359 = vpack.c.b16 %v309, %v304
  %v360 = vpack.c.b16 %v310, %v305
  %v361 = vpack.c.b16 %v311, %v306
  %v362 = vpack.c.b16 %v312, %v307
  %v475 = vunpack.c.l.b16 %v81
  %v476 = vunpack.c.l.b16 %v82
  %v477 = vunpack.c.l.b16 %v83
  %v478 = vunpack.c.l.b16 %v84
  %v479 = vunpack.c.l.b16 %v85
  %v480 = vunpack.c.l.b16 %v86
  %v481 = vunpack.c.l.b16 %v87
  %v482 = vunpack.c.l.b16 %v88
  %v483 = vunpack.c.l.b16 %v89
  %v484 = vunpack.c.l.b16 %v90
  %v485 = vunpack.c.l.b16 %v91
  %v486 = vunpack.c.l.b16 %v92
  %v487 = vunpack.c.l.b16 %v93
  %v488 = vunpack.c.l.b16 %v94
  %v489 = vunpack.c.l.b16 %v95
  %v490 = vunpack.c.l.b16 %v96
  %v491 = vunpack.c.l.b16 %v97
  %v492 = vunpack.c.l.b16 %v98
  %v493 = vunpack.c.l.b16 %v99
  %v494 = vunpack.c.l.b16 %v100
  %v495 = vunpack.c.l.b16 %v101
  %v496 = vunpack.c.l.b16 %v102
  %v497 = vunpack.c.l.b16 %v103
  %v498 = vunpack.c.l.b16 %v104
  %v499 = vunpack.c.l.b16 %v105
  %v500 = vunpack.c.l.b16 %v106
  %v501 = vunpack.c.l.b16 %v107
  %v502 = vunpack.c.l.b16 %v108
  %v503 = vunpack.c.l.b16 %v109
  %v504 = vunpack.c.l.b16 %v110
  %v505 = vunpack.c.l.b16 %v111
  %v506 = vunpack.c.l.b16 %v112
  %v507 = vunpack.c.l.b16 %v113
  %v508 = vunpack.c.l.b16 %v114
  %v509 = vunpack.c.l.b16 %v115
  %v510 = vunpack.c.l.b16 %v116
  %v511 = vunpack.c.l.b16 %v117
  %v512 = vunpack.c.l.b16 %v118
  %v513 = vunpack.c.l.b16 %v119
  %v514 = vunpack.c.l.b16 %v120
  %v515 = vunpack.c.l.b16 %v121
  %v516 = vunpack.c.l.b16 %v122
  %v517 = vunpack.c.l.b16 %v123
  %v518 = vunpack.c.l.b16 %v124
  %v519 = vunpack.c.l.b16 %v125
  %v520 = vunpack.c.l.b16 %v126
  %v521 = vunpack.c.l.b16 %v127
  %v522 = vunpack.c.l.b16 %v128
  %v523 = vunpack.c.l.b16 %v129
  %v524 = vunpack.c.l.b16 %v130
  %v525 = vunpack.c.l.b16 %v131
  %v526 = vunpack.c.l.b16 %v132
  %v527 = vunpack.c.l.b16 %v133
  %v528 = vunpack.c.l.b16 %v134
  %v529 = vunpack.c.l.b16 %v135
  %v530 = vunpack.c.l.b16 %v136
  %v531 = vunpack.c.l.b16 %v137
  %v532 = vunpack.c.l.b16 %v138
  %v533 = vunpack.c.l.b16 %v139
  %v534 = vunpack.c.l.b16 %v140
  %v535 = vunpack.c.l.b16 %v141
  %v536 = vunpack.c.l.b16 %v142
  %v537 = vunpack.c.l.b16 %v143
  %v538 = vunpack.c.l.b16 %v144
  %v539 = vunpack.c.l.b16 %v145
  %v540 = vunpack.c.l.b16 %v146
  %v541 = vunpack.c.l.b16 %v147
  %v542 = vunpack.c.l.b16 %v148
  %v543 = vunpack.c.l.b16 %v149
  %v544 = vunpack.c.l.b16 %v150
  %v545 = vunpack.c.l.b16 %v151
  %v546 = vunpack.c.l.b16 %v152
  %v547 = vpack.c.b16 %v476, %v475
  %v548 = vpack.c.b16 %v478, %v477
  %v549 = vpack.c.b16 %v480, %v479
  %v550 = vpack.c.b16 %v482, %v481
  %v551 = vpack.c.b16 %v484, %v483
  %v552 = vpack.c.b16 %v486, %v485
  %v553 = vpack.c.b16 %v488, %v487
  %v554 = vpack.c.b16 %v490, %v489
  %v555 = vpack.c.b16 %v492, %v491
  %v556 = vpack.c.b16 %v494, %v493
  %v557 = vpack.c.b16 %v496, %v495
  %v558 = vpack.c.b16 %v498, %v497
  %v559 = vpack.c.b16 %v500, %v499
  %v560 = vpack.c.b16 %v502, %v501
  %v561 = vpack.c.b16 %v504, %v503
  %v562 = vpack.c.b16 %v506, %v505
  %v563 = vpack.c.b16 %v508, %v507
  %v564 = vpack.c.b16 %v510, %v509
  %v565 = vpack.c.b16 %v512, %v511
  %v566 = vpack.c.b16 %v514, %v513
  %v567 = vpack.c.b16 %v516, %v515
  %v568 = vpack.c.b16 %v518, %v517
  %v569 = vpack.c.b16 %v520, %v519
  %v570 = vpack.c.b16 %v522, %v521
  %v571 = vpack.c.b16 %v524, %v523
  %v572 = vpack.c.b16 %v526, %v525
  %v573 = vpack.c.b16 %v528, %v527
  %v574 = vpack.c.b16 %v530, %v529
  %v575 = vpack.c.b16 %v532, %v531
  %v576 = vpack.c.b16 %v534, %v533
  %v577 = vpack.c.b16 %v536, %v535
  %v578 = vpack.c.b16 %v538, %v537
  %v579 = vpack.c.b16 %v540, %v539
  %v580 = vpack.c.b16 %v542, %v541
  %v581 = vpack.c.b16 %v544, %v543
  %v582 = vpack.c.b16 %v546, %v545
  %vm619 = vcmask 523264
  %v621 = vsel %vm619, %v317, 0
  %v624 = vsel %vm619, %v322, 0
  %v627 = vsel %vm619, %v327, 0
  %v630 = vsel %vm619, %v332, 0
  %v633 = vsel %vm619, %v337, 0
  %v636 = vsel %vm619, %v342, 0
  %v639 = vsel %vm619, %v347, 0
  %v642 = vsel %vm619, %v352, 0
  %v645 = vsel %vm619, %v357, 0
  %v648 = vsel %vm619, %v362, 0
  %650 = vmatprep.subr.bf16.mxu0 0
  %651 = vmatpush1.bf16.msra.mxu0 %v547
  %652 = vmatprep.subr.bf16.mxu0 0
  %653 = vmatpush1.bf16.msra.mxu0 %v548
  %654 = vmatprep.subr.bf16.mxu0 0
  %655 = vmatpush1.bf16.msra.mxu0 %v549
  %656 = vmatprep.subr.bf16.mxu0 0
  %657 = vmatpush1.bf16.msra.mxu0 %v550
  %658 = vmatprep.subr.bf16.mxu0 0
  %659 = vmatpush1.bf16.msra.mxu0 %v551
  %660 = vmatprep.subr.bf16.mxu0 0
  %661 = vmatpush1.bf16.msra.mxu0 %v552
  %662 = vmatprep.subr.bf16.mxu0 0
  %663 = vmatpush1.bf16.msra.mxu0 %v553
  %664 = vmatprep.subr.bf16.mxu0 0
  %665 = vmatpush1.bf16.msra.mxu0 %v554
  %666 = vmatprep.subr.bf16.mxu0 0
  %667 = vmatpush1.bf16.msra.mxu0 %v555
  %668 = vmatprep.subr.bf16.mxu0 0
  %669 = vmatpush1.bf16.msra.mxu0 %v556
  %670 = vmatprep.subr.bf16.mxu0 0
  %671 = vmatpush1.bf16.msra.mxu0 %v557
  %672 = vmatprep.subr.bf16.mxu0 0
  %673 = vmatpush1.bf16.msra.mxu0 %v558
  %674 = vmatprep.subr.bf16.mxu0 0
  %675 = vmatpush1.bf16.msra.mxu0 %v559
  %676 = vmatprep.subr.bf16.mxu0 0
  %677 = vmatpush1.bf16.msra.mxu0 %v560
  %678 = vmatprep.subr.bf16.mxu0 0
  %679 = vmatpush1.bf16.msra.mxu0 %v561
  %680 = vmatprep.subr.bf16.mxu0 0
  %681 = vmatpush1.bf16.msra.mxu0 %v562
  %682 = vmatprep.mubr.bf16.mxu0 %v314
  %683 = vmatmul.mubr.bf16.gmra.mrb[0].mxu0 %v313
  %v684 = vpop.f32.mrb[0].mxu0
  %v685 = vadd.f32 0.0, %v684
  %v686 = vpop.f32.mrb[0].mxu0
  %v687 = vpop.f32.mrb[0].mxu0
  %v688 = vadd.f32 0.0, %v687
  %v689 = vpop.f32.mrb[0].mxu0
  %690 = vmatprep.mubr.bf16.mxu0 %v319
  %691 = vmatmul.mubr.bf16.gmra.mrb[0].mxu0 %v318
  %v692 = vpop.f32.mrb[0].mxu0
  %v693 = vadd.f32 0.0, %v692
  %v694 = vpop.f32.mrb[0].mxu0
  %v695 = vpop.f32.mrb[0].mxu0
  %v696 = vadd.f32 0.0, %v695
  %v697 = vpop.f32.mrb[0].mxu0
  %698 = vmatprep.mubr.bf16.mxu0 %v324
  %699 = vmatmul.mubr.bf16.gmra.mrb[0].mxu0 %v323
  %v700 = vpop.f32.mrb[0].mxu0
  %v701 = vadd.f32 0.0, %v700
  %v702 = vpop.f32.mrb[0].mxu0
  %v703 = vpop.f32.mrb[0].mxu0
  %v704 = vadd.f32 0.0, %v703
  %v705 = vpop.f32.mrb[0].mxu0
  %706 = vmatprep.mubr.bf16.mxu0 %v329
  %707 = vmatmul.mubr.bf16.gmra.mrb[0].mxu0 %v328
  %v708 = vpop.f32.mrb[0].mxu0
  %v709 = vadd.f32 0.0, %v708
  %v710 = vpop.f32.mrb[0].mxu0
  %v711 = vpop.f32.mrb[0].mxu0
  %v712 = vadd.f32 0.0, %v711
  %v713 = vpop.f32.mrb[0].mxu0
  %714 = vmatprep.mubr.bf16.mxu0 %v334
  %715 = vmatmul.mubr.bf16.gmra.mrb[0].mxu0 %v333
  %v716 = vpop.f32.mrb[0].mxu0
  %v717 = vadd.f32 0.0, %v716
  %v718 = vpop.f32.mrb[0].mxu0
  %v719 = vpop.f32.mrb[0].mxu0
  %v720 = vadd.f32 0.0, %v719
  %v721 = vpop.f32.mrb[0].mxu0
  %722 = vmatprep.mubr.bf16.mxu0 %v339
  %723 = vmatmul.mubr.bf16.gmra.mrb[0].mxu0 %v338
  %v724 = vpop.f32.mrb[0].mxu0
  %v725 = vadd.f32 0.0, %v724
  %v726 = vpop.f32.mrb[0].mxu0
  %v727 = vpop.f32.mrb[0].mxu0
  %v728 = vadd.f32 0.0, %v727
  %v729 = vpop.f32.mrb[0].mxu0
  %730 = vmatprep.mubr.bf16.mxu0 %v344
  %731 = vmatmul.mubr.bf16.gmra.mrb[0].mxu0 %v343
  %v732 = vpop.f32.mrb[0].mxu0
  %v733 = vadd.f32 0.0, %v732
  %v734 = vpop.f32.mrb[0].mxu0
  %v735 = vpop.f32.mrb[0].mxu0
  %v736 = vadd.f32 0.0, %v735
  %v737 = vpop.f32.mrb[0].mxu0
  %738 = vmatprep.mubr.bf16.mxu0 %v349
  %739 = vmatmul.mubr.bf16.gmra.mrb[0].mxu0 %v348
  %v740 = vpop.f32.mrb[0].mxu0
  %v741 = vadd.f32 0.0, %v740
  %v742 = vpop.f32.mrb[0].mxu0
  %v743 = vpop.f32.mrb[0].mxu0
  %v744 = vadd.f32 0.0, %v743
  %v745 = vpop.f32.mrb[0].mxu0
  %746 = vmatprep.mubr.bf16.mxu0 %v354
  %747 = vmatmul.mubr.bf16.gmra.mrb[0].mxu0 %v353
  %v748 = vpop.f32.mrb[0].mxu0
  %v749 = vadd.f32 0.0, %v748
  %v750 = vpop.f32.mrb[0].mxu0
  %v751 = vpop.f32.mrb[0].mxu0
  %v752 = vadd.f32 0.0, %v751
  %v753 = vpop.f32.mrb[0].mxu0
  %754 = vmatprep.mubr.bf16.mxu0 %v359
  %755 = vmatmul.mubr.bf16.gmra.mrb[0].mxu0 %v358
  %v756 = vpop.f32.mrb[0].mxu0
  %v757 = vadd.f32 0.0, %v756
  %v758 = vpop.f32.mrb[0].mxu0
  %v759 = vpop.f32.mrb[0].mxu0
  %v760 = vadd.f32 0.0, %v759
  %v761 = vpop.f32.mrb[0].mxu0
  %762 = vdwg.mxu0
  %763 = vmatprep.subr.bf16.mxu0 0
  %764 = vmatpush1.bf16.msra.mxu0 %v563
  %765 = vmatprep.subr.bf16.mxu0 0
  %766 = vmatpush1.bf16.msra.mxu0 %v564
  %767 = vmatprep.subr.bf16.mxu0 0
  %768 = vmatpush1.bf16.msra.mxu0 %v565
  %769 = vmatprep.subr.bf16.mxu0 0
  %770 = vmatpush1.bf16.msra.mxu0 %v566
  %771 = vmatprep.subr.bf16.mxu0 0
  %772 = vmatpush1.bf16.msra.mxu0 %v567
  %773 = vmatprep.subr.bf16.mxu0 0
  %774 = vmatpush1.bf16.msra.mxu0 %v568
  %775 = vmatprep.subr.bf16.mxu0 0
  %776 = vmatpush1.bf16.msra.mxu0 %v569
  %777 = vmatprep.subr.bf16.mxu0 0
  %778 = vmatpush1.bf16.msra.mxu0 %v570
  %779 = vmatprep.subr.bf16.mxu0 0
  %780 = vmatpush1.bf16.msra.mxu0 %v571
  %781 = vmatprep.subr.bf16.mxu0 0
  %782 = vmatpush1.bf16.msra.mxu0 %v572
  %783 = vmatprep.subr.bf16.mxu0 0
  %784 = vmatpush1.bf16.msra.mxu0 %v573
  %785 = vmatprep.subr.bf16.mxu0 0
  %786 = vmatpush1.bf16.msra.mxu0 %v574
  %787 = vmatprep.subr.bf16.mxu0 0
  %788 = vmatpush1.bf16.msra.mxu0 %v575
  %789 = vmatprep.subr.bf16.mxu0 0
  %790 = vmatpush1.bf16.msra.mxu0 %v576
  %791 = vmatprep.subr.bf16.mxu0 0
  %792 = vmatpush1.bf16.msra.mxu0 %v577
  %793 = vmatprep.subr.bf16.mxu0 0
  %794 = vmatpush1.bf16.msra.mxu0 %v578
  %795 = vmatprep.mubr.bf16.mxu0 %v316
  %796 = vmatmul.mubr.bf16.gmra.mrb[0].mxu0 %v315
  %v797 = vpop.f32.mrb[0].mxu0
  %v798 = vadd.f32 %v685, %v797
  %v799 = vpop.f32.mrb[0].mxu0
  %v800 = vpop.f32.mrb[0].mxu0
  %v801 = vadd.f32 %v688, %v800
  %v802 = vpop.f32.mrb[0].mxu0
  %803 = vmatprep.mubr.bf16.mxu0 %v321
  %804 = vmatmul.mubr.bf16.gmra.mrb[0].mxu0 %v320
  %v805 = vpop.f32.mrb[0].mxu0
  %v806 = vadd.f32 %v693, %v805
  %v807 = vpop.f32.mrb[0].mxu0
  %v808 = vpop.f32.mrb[0].mxu0
  %v809 = vadd.f32 %v696, %v808
  %v810 = vpop.f32.mrb[0].mxu0
  %811 = vmatprep.mubr.bf16.mxu0 %v326
  %812 = vmatmul.mubr.bf16.gmra.mrb[0].mxu0 %v325
  %v813 = vpop.f32.mrb[0].mxu0
  %v814 = vadd.f32 %v701, %v813
  %v815 = vpop.f32.mrb[0].mxu0
  %v816 = vpop.f32.mrb[0].mxu0
  %v817 = vadd.f32 %v704, %v816
  %v818 = vpop.f32.mrb[0].mxu0
  %819 = vmatprep.mubr.bf16.mxu0 %v331
  %820 = vmatmul.mubr.bf16.gmra.mrb[0].mxu0 %v330
  %v821 = vpop.f32.mrb[0].mxu0
  %v822 = vadd.f32 %v709, %v821
  %v823 = vpop.f32.mrb[0].mxu0
  %v824 = vpop.f32.mrb[0].mxu0
  %v825 = vadd.f32 %v712, %v824
  %v826 = vpop.f32.mrb[0].mxu0
  %827 = vmatprep.mubr.bf16.mxu0 %v336
  %828 = vmatmul.mubr.bf16.gmra.mrb[0].mxu0 %v335
  %v829 = vpop.f32.mrb[0].mxu0
  %v830 = vadd.f32 %v717, %v829
  %v831 = vpop.f32.mrb[0].mxu0
  %v832 = vpop.f32.mrb[0].mxu0
  %v833 = vadd.f32 %v720, %v832
  %v834 = vpop.f32.mrb[0].mxu0
  %835 = vmatprep.mubr.bf16.mxu0 %v341
  %836 = vmatmul.mubr.bf16.gmra.mrb[0].mxu0 %v340
  %v837 = vpop.f32.mrb[0].mxu0
  %v838 = vadd.f32 %v725, %v837
  %v839 = vpop.f32.mrb[0].mxu0
  %v840 = vpop.f32.mrb[0].mxu0
  %v841 = vadd.f32 %v728, %v840
  %v842 = vpop.f32.mrb[0].mxu0
  %843 = vmatprep.mubr.bf16.mxu0 %v346
  %844 = vmatmul.mubr.bf16.gmra.mrb[0].mxu0 %v345
  %v845 = vpop.f32.mrb[0].mxu0
  %v846 = vadd.f32 %v733, %v845
  %v847 = vpop.f32.mrb[0].mxu0
  %v848 = vpop.f32.mrb[0].mxu0
  %v849 = vadd.f32 %v736, %v848
  %v850 = vpop.f32.mrb[0].mxu0
  %851 = vmatprep.mubr.bf16.mxu0 %v351
  %852 = vmatmul.mubr.bf16.gmra.mrb[0].mxu0 %v350
  %v853 = vpop.f32.mrb[0].mxu0
  %v854 = vadd.f32 %v741, %v853
  %v855 = vpop.f32.mrb[0].mxu0
  %v856 = vpop.f32.mrb[0].mxu0
  %v857 = vadd.f32 %v744, %v856
  %v858 = vpop.f32.mrb[0].mxu0
  %859 = vmatprep.mubr.bf16.mxu0 %v356
  %860 = vmatmul.mubr.bf16.gmra.mrb[0].mxu0 %v355
  %v861 = vpop.f32.mrb[0].mxu0
  %v862 = vadd.f32 %v749, %v861
  %v863 = vpop.f32.mrb[0].mxu0
  %v864 = vpop.f32.mrb[0].mxu0
  %v865 = vadd.f32 %v752, %v864
  %v866 = vpop.f32.mrb[0].mxu0
  %867 = vmatprep.mubr.bf16.mxu0 %v361
  %868 = vmatmul.mubr.bf16.gmra.mrb[0].mxu0 %v360
  %v869 = vpop.f32.mrb[0].mxu0
  %v870 = vadd.f32 %v757, %v869
  %v871 = vpop.f32.mrb[0].mxu0
  %v872 = vpop.f32.mrb[0].mxu0
  %v873 = vadd.f32 %v760, %v872
  %v874 = vpop.f32.mrb[0].mxu0
  %875 = vdwg.mxu0
  %876 = vmatprep.subr.bf16.mxu0 0
  %877 = vmatpush1.bf16.msra.mxu0 %v579
  %878 = vmatprep.subr.bf16.mxu0 0
  %879 = vmatpush1.bf16.msra.mxu0 %v580
  %880 = vmatprep.subr.bf16.mxu0 0
  %881 = vmatpush1.bf16.msra.mxu0 %v581
  %882 = vmatprep.subr.bf16.mxu0 0
  %883 = vmatpush1.bf16.msra.mxu0 %v582
  %884 = vmatprep.subr.bf16.mxu0 0
  %885 = vmatpush1.bf16.msra.mxu0 0
  %886 = vmatprep.subr.bf16.mxu0 0
  %887 = vmatpush1.bf16.msra.mxu0 0
  %888 = vmatprep.subr.bf16.mxu0 0
  %889 = vmatpush1.bf16.msra.mxu0 0
  %890 = vmatprep.subr.bf16.mxu0 0
  %891 = vmatpush1.bf16.msra.mxu0 0
  %892 = vmatprep.subr.bf16.mxu0 0
  %893 = vmatpush1.bf16.msra.mxu0 0
  %894 = vmatprep.subr.bf16.mxu0 0
  %895 = vmatpush1.bf16.msra.mxu0 0
  %896 = vmatprep.subr.bf16.mxu0 0
  %897 = vmatpush1.bf16.msra.mxu0 0
  %898 = vmatprep.subr.bf16.mxu0 0
  %899 = vmatpush1.bf16.msra.mxu0 0
  %900 = vmatprep.subr.bf16.mxu0 0
  %901 = vmatpush1.bf16.msra.mxu0 0
  %902 = vmatprep.subr.bf16.mxu0 0
  %903 = vmatpush1.bf16.msra.mxu0 0
  %904 = vmatprep.subr.bf16.mxu0 0
  %905 = vmatpush1.bf16.msra.mxu0 0
  %906 = vmatprep.subr.bf16.mxu0 0
  %907 = vmatpush1.bf16.msra.mxu0 0
  %908 = vmatprep.mubr.bf16.mxu0 0
  %909 = vmatmul.mubr.bf16.gmra.mrb[0].mxu0 %v621
  %v910 = vpop.f32.mrb[0].mxu0
  %v911 = vadd.f32 %v798, %v910
  %v912 = vpop.f32.mrb[0].mxu0
  %v913 = vpop.f32.mrb[0].mxu0
  %v914 = vadd.f32 %v801, %v913
  %v915 = vpop.f32.mrb[0].mxu0
  %916 = vmatprep.mubr.bf16.mxu0 0
  %917 = vmatmul.mubr.bf16.gmra.mrb[0].mxu0 %v624
  %v918 = vpop.f32.mrb[0].mxu0
  %v919 = vadd.f32 %v806, %v918
  %v920 = vpop.f32.mrb[0].mxu0
  %v921 = vpop.f32.mrb[0].mxu0
  %v922 = vadd.f32 %v809, %v921
  %v923 = vpop.f32.mrb[0].mxu0
  %924 = vmatprep.mubr.bf16.mxu0 0
  %925 = vmatmul.mubr.bf16.gmra.mrb[0].mxu0 %v627
  %v926 = vpop.f32.mrb[0].mxu0
  %v927 = vadd.f32 %v814, %v926
  %v928 = vpop.f32.mrb[0].mxu0
  %v929 = vpop.f32.mrb[0].mxu0
  %v930 = vadd.f32 %v817, %v929
  %v931 = vpop.f32.mrb[0].mxu0
  %932 = vmatprep.mubr.bf16.mxu0 0
  %933 = vmatmul.mubr.bf16.gmra.mrb[0].mxu0 %v630
  %v934 = vpop.f32.mrb[0].mxu0
  %v935 = vadd.f32 %v822, %v934
  %v936 = vpop.f32.mrb[0].mxu0
  %v937 = vpop.f32.mrb[0].mxu0
  %v938 = vadd.f32 %v825, %v937
  %v939 = vpop.f32.mrb[0].mxu0
  %940 = vmatprep.mubr.bf16.mxu0 0
  %941 = vmatmul.mubr.bf16.gmra.mrb[0].mxu0 %v633
  %v942 = vpop.f32.mrb[0].mxu0
  %v943 = vadd.f32 %v830, %v942
  %v944 = vpop.f32.mrb[0].mxu0
  %v945 = vpop.f32.mrb[0].mxu0
  %v946 = vadd.f32 %v833, %v945
  %v947 = vpop.f32.mrb[0].mxu0
  %948 = vmatprep.mubr.bf16.mxu0 0
  %949 = vmatmul.mubr.bf16.gmra.mrb[0].mxu0 %v636
  %v950 = vpop.f32.mrb[0].mxu0
  %v951 = vadd.f32 %v838, %v950
  %v952 = vpop.f32.mrb[0].mxu0
  %v953 = vpop.f32.mrb[0].mxu0
  %v954 = vadd.f32 %v841, %v953
  %v955 = vpop.f32.mrb[0].mxu0
  %956 = vmatprep.mubr.bf16.mxu0 0
  %957 = vmatmul.mubr.bf16.gmra.mrb[0].mxu0 %v639
  %v958 = vpop.f32.mrb[0].mxu0
  %v959 = vadd.f32 %v846, %v958
  %v960 = vpop.f32.mrb[0].mxu0
  %v961 = vpop.f32.mrb[0].mxu0
  %v962 = vadd.f32 %v849, %v961
  %v963 = vpop.f32.mrb[0].mxu0
  %964 = vmatprep.mubr.bf16.mxu0 0
  %965 = vmatmul.mubr.bf16.gmra.mrb[0].mxu0 %v642
  %v966 = vpop.f32.mrb[0].mxu0
  %v967 = vadd.f32 %v854, %v966
  %v968 = vpop.f32.mrb[0].mxu0
  %v969 = vpop.f32.mrb[0].mxu0
  %v970 = vadd.f32 %v857, %v969
  %v971 = vpop.f32.mrb[0].mxu0
  %972 = vmatprep.mubr.bf16.mxu0 0
  %973 = vmatmul.mubr.bf16.gmra.mrb[0].mxu0 %v645
  %v974 = vpop.f32.mrb[0].mxu0
  %v975 = vadd.f32 %v862, %v974
  %v976 = vpop.f32.mrb[0].mxu0
  %v977 = vpop.f32.mrb[0].mxu0
  %v978 = vadd.f32 %v865, %v977
  %v979 = vpop.f32.mrb[0].mxu0
  %980 = vmatprep.mubr.bf16.mxu0 0
  %981 = vmatmul.mubr.bf16.gmra.mrb[0].mxu0 %v648
  %v982 = vpop.f32.mrb[0].mxu0
  %v983 = vadd.f32 %v870, %v982
  %v984 = vpop.f32.mrb[0].mxu0
  %v985 = vpop.f32.mrb[0].mxu0
  %v986 = vadd.f32 %v873, %v985
  %v987 = vpop.f32.mrb[0].mxu0
  %988 = vdwg.mxu0
  %v989 = vsel %vm619, %v911, 0.0
  %v990 = vsel %vm619, %v914, 0.0
  %v991 = vadd.f32 %v989, %v990
  %v992 = vsel %vm619, %v919, 0.0
  %v993 = vadd.f32 %v991, %v992
  %v994 = vsel %vm619, %v922, 0.0
  %v995 = vadd.f32 %v993, %v994
  %v996 = vsel %vm619, %v927, 0.0
  %v997 = vadd.f32 %v995, %v996
  %v998 = vsel %vm619, %v930, 0.0
  %v999 = vadd.f32 %v997, %v998
  %v1000 = vsel %vm619, %v935, 0.0
  %v1001 = vadd.f32 %v999, %v1000
  %v1002 = vsel %vm619, %v938, 0.0
  %v1003 = vadd.f32 %v1001, %v1002
  %v1004 = vsel %vm619, %v943, 0.0
  %v1005 = vadd.f32 %v1003, %v1004
  %v1006 = vsel %vm619, %v946, 0.0
  %v1007 = vadd.f32 %v1005, %v1006
  %v1008 = vsel %vm619, %v951, 0.0
  %v1009 = vadd.f32 %v1007, %v1008
  %v1010 = vsel %vm619, %v954, 0.0
  %v1011 = vadd.f32 %v1009, %v1010
  %v1012 = vsel %vm619, %v959, 0.0
  %v1013 = vadd.f32 %v1011, %v1012
  %v1014 = vsel %vm619, %v962, 0.0
  %v1015 = vadd.f32 %v1013, %v1014
  %v1016 = vsel %vm619, %v967, 0.0
  %v1017 = vadd.f32 %v1015, %v1016
  %v1018 = vsel %vm619, %v970, 0.0
  %v1019 = vadd.f32 %v1017, %v1018
  %v1020 = vsel %vm619, %v975, 0.0
  %v1021 = vadd.f32 %v1019, %v1020
  %v1022 = vsel %vm619, %v978, 0.0
  %v1023 = vadd.f32 %v1021, %v1022
  %v1024 = vsel %vm619, %v983, 0.0
  %v1025 = vadd.f32 %v1023, %v1024
  %v1026 = vsel %vm619, %v986, 0.0
  %v1027 = vadd.f32 %v1025, %v1026
  %v1028 = vrot.slane %v1027, 4
  %v1029 = vadd.f32 %v1027, %v1028
  %v1030 = vrot.slane %v1029, 2
  %v1031 = vadd.f32 %v1029, %v1030
  %v1032 = vrot.slane %v1031, 1
  %v1033 = vadd.f32 %v1031, %v1032
  %v1034 = vmul.f32 %v1033, 0.010204081
  %v1035 = vsub.f32 %v911, %v1034
  %v1036 = vsub.f32 %v914, %v1034
  %v1037 = vsub.f32 %v919, %v1034
  %v1038 = vsub.f32 %v922, %v1034
  %v1039 = vsub.f32 %v927, %v1034
  %v1040 = vsub.f32 %v930, %v1034
  %v1041 = vsub.f32 %v935, %v1034
  %v1042 = vsub.f32 %v938, %v1034
  %v1043 = vsub.f32 %v943, %v1034
  %v1044 = vsub.f32 %v946, %v1034
  %v1045 = vsub.f32 %v951, %v1034
  %v1046 = vsub.f32 %v954, %v1034
  %v1047 = vsub.f32 %v959, %v1034
  %v1048 = vsub.f32 %v962, %v1034
  %v1049 = vsub.f32 %v967, %v1034
  %v1050 = vsub.f32 %v970, %v1034
  %v1051 = vsub.f32 %v975, %v1034
  %v1052 = vsub.f32 %v978, %v1034
  %v1053 = vsub.f32 %v983, %v1034
  %v1054 = vsub.f32 %v986, %v1034
  %v1055 = vld [vmem:[%s2] sm:$0xff]
  %v1056 = vld [vmem:[%s2 + $0x8] sm:$0xff]
  %v1057 = vld [vmem:[%s2 + $0x10] sm:$0xff]
  %v1058 = vld [vmem:[%s2 + $0x18] sm:$0xff]
  %v1059 = vld [vmem:[%s2 + $0x20] sm:$0xff]
  %v1060 = vld [vmem:[%s2 + $0x28] sm:$0xff]
  %v1061 = vld [vmem:[%s2 + $0x30] sm:$0xff]
  %v1062 = vld [vmem:[%s2 + $0x38] sm:$0xff]
  %v1063 = vld [vmem:[%s2 + $0x40] sm:$0xff]
  %v1064 = vld [vmem:[%s2 + $0x48] sm:$0xff]
  %v1065 = vld [vmem:[%s2 + $0x50] sm:$0xff]
  %v1066 = vld [vmem:[%s2 + $0x58] sm:$0xff]
  %v1067 = vld [vmem:[%s2 + $0x60] sm:$0xff]
  %v1068 = vld [vmem:[%s2 + $0x68] sm:$0xff]
  %v1069 = vld [vmem:[%s2 + $0x70] sm:$0xff]
  %v1070 = vld [vmem:[%s2 + $0x78] sm:$0xff]
  %v1071 = vld [vmem:[%s2 + $0x80] sm:$0xff]
  %v1072 = vld [vmem:[%s2 + $0x88] sm:$0xff]
  %v1073 = vld [vmem:[%s2 + $0x90] sm:$0xff]
  %v1074 = vld [vmem:[%s2 + $0x98] sm:$0xff]
  %1076 = vset.pattern.permute.xlu0 0
  %1077 = vperm.xlu0 %1076, %v1055
  %v1078 = vpop.permute.xlu0 %1077
  %1081 = vset.pattern.permute.xlu0 0
  %1082 = vperm.xlu0 %1081, %v1056
  %v1083 = vpop.permute.xlu0 %1082
  %1086 = vset.pattern.permute.xlu0 0
  %1087 = vperm.xlu0 %1086, %v1057
  %v1088 = vpop.permute.xlu0 %1087
  %1091 = vset.pattern.permute.xlu0 0
  %1092 = vperm.xlu0 %1091, %v1058
  %v1093 = vpop.permute.xlu0 %1092
  %1096 = vset.pattern.permute.xlu0 0
  %1097 = vperm.xlu0 %1096, %v1059
  %v1098 = vpop.permute.xlu0 %1097
  %1101 = vset.pattern.permute.xlu0 0
  %1102 = vperm.xlu0 %1101, %v1060
  %v1103 = vpop.permute.xlu0 %1102
  %1106 = vset.pattern.permute.xlu0 0
  %1107 = vperm.xlu0 %1106, %v1061
  %v1108 = vpop.permute.xlu0 %1107
  %1111 = vset.pattern.permute.xlu0 0
  %1112 = vperm.xlu0 %1111, %v1062
  %v1113 = vpop.permute.xlu0 %1112
  %1116 = vset.pattern.permute.xlu0 0
  %1117 = vperm.xlu0 %1116, %v1063
  %v1118 = vpop.permute.xlu0 %1117
  %1121 = vset.pattern.permute.xlu0 0
  %1122 = vperm.xlu0 %1121, %v1064
  %v1123 = vpop.permute.xlu0 %1122
  %1126 = vset.pattern.permute.xlu0 0
  %1127 = vperm.xlu0 %1126, %v1065
  %v1128 = vpop.permute.xlu0 %1127
  %1131 = vset.pattern.permute.xlu0 0
  %1132 = vperm.xlu0 %1131, %v1066
  %v1133 = vpop.permute.xlu0 %1132
  %1136 = vset.pattern.permute.xlu0 0
  %1137 = vperm.xlu0 %1136, %v1067
  %v1138 = vpop.permute.xlu0 %1137
  %1141 = vset.pattern.permute.xlu0 0
  %1142 = vperm.xlu0 %1141, %v1068
  %v1143 = vpop.permute.xlu0 %1142
  %1146 = vset.pattern.permute.xlu0 0
  %1147 = vperm.xlu0 %1146, %v1069
  %v1148 = vpop.permute.xlu0 %1147
  %1151 = vset.pattern.permute.xlu0 0
  %1152 = vperm.xlu0 %1151, %v1070
  %v1153 = vpop.permute.xlu0 %1152
  %1156 = vset.pattern.permute.xlu0 0
  %1157 = vperm.xlu0 %1156, %v1071
  %v1158 = vpop.permute.xlu0 %1157
  %1161 = vset.pattern.permute.xlu0 0
  %1162 = vperm.xlu0 %1161, %v1072
  %v1163 = vpop.permute.xlu0 %1162
  %1166 = vset.pattern.permute.xlu0 0
  %1167 = vperm.xlu0 %1166, %v1073
  %v1168 = vpop.permute.xlu0 %1167
  %1171 = vset.pattern.permute.xlu0 0
  %1172 = vperm.xlu0 %1171, %v1074
  %v1173 = vpop.permute.xlu0 %1172
  %v1175 = vmul.f32 %v1035, %v1078
  %v1176 = vmul.f32 %v1036, %v1083
  %v1177 = vmul.f32 %v1037, %v1088
  %v1178 = vmul.f32 %v1038, %v1093
  %v1179 = vmul.f32 %v1039, %v1098
  %v1180 = vmul.f32 %v1040, %v1103
  %v1181 = vmul.f32 %v1041, %v1108
  %v1182 = vmul.f32 %v1042, %v1113
  %v1183 = vmul.f32 %v1043, %v1118
  %v1184 = vmul.f32 %v1044, %v1123
  %v1185 = vmul.f32 %v1045, %v1128
  %v1186 = vmul.f32 %v1046, %v1133
  %v1187 = vmul.f32 %v1047, %v1138
  %v1188 = vmul.f32 %v1048, %v1143
  %v1189 = vmul.f32 %v1049, %v1148
  %v1190 = vmul.f32 %v1050, %v1153
  %v1191 = vmul.f32 %v1051, %v1158
  %v1192 = vmul.f32 %v1052, %v1163
  %v1193 = vmul.f32 %v1053, %v1168
  %v1194 = vmul.f32 %v1054, %v1173
  %v1195 = vmul.f32 %v1175, %v1175
  %v1196 = vmul.f32 %v1176, %v1176
  %v1197 = vmul.f32 %v1177, %v1177
  %v1198 = vmul.f32 %v1178, %v1178
  %v1199 = vmul.f32 %v1179, %v1179
  %v1200 = vmul.f32 %v1180, %v1180
  %v1201 = vmul.f32 %v1181, %v1181
  %v1202 = vmul.f32 %v1182, %v1182
  %v1203 = vmul.f32 %v1183, %v1183
  %v1204 = vmul.f32 %v1184, %v1184
  %v1205 = vmul.f32 %v1185, %v1185
  %v1206 = vmul.f32 %v1186, %v1186
  %v1207 = vmul.f32 %v1187, %v1187
  %v1208 = vmul.f32 %v1188, %v1188
  %v1209 = vmul.f32 %v1189, %v1189
  %v1210 = vmul.f32 %v1190, %v1190
  %v1211 = vmul.f32 %v1191, %v1191
  %v1212 = vmul.f32 %v1192, %v1192
  %v1213 = vmul.f32 %v1193, %v1193
  %v1214 = vmul.f32 %v1194, %v1194
  %v1215 = vsel %vm619, %v1195, 0.0
  %v1216 = vsel %vm619, %v1196, 0.0
  %v1217 = vadd.f32 %v1215, %v1216
  %v1218 = vsel %vm619, %v1197, 0.0
  %v1219 = vadd.f32 %v1217, %v1218
  %v1220 = vsel %vm619, %v1198, 0.0
  %v1221 = vadd.f32 %v1219, %v1220
  %v1222 = vsel %vm619, %v1199, 0.0
  %v1223 = vadd.f32 %v1221, %v1222
  %v1224 = vsel %vm619, %v1200, 0.0
  %v1225 = vadd.f32 %v1223, %v1224
  %v1226 = vsel %vm619, %v1201, 0.0
  %v1227 = vadd.f32 %v1225, %v1226
  %v1228 = vsel %vm619, %v1202, 0.0
  %v1229 = vadd.f32 %v1227, %v1228
  %v1230 = vsel %vm619, %v1203, 0.0
  %v1231 = vadd.f32 %v1229, %v1230
  %v1232 = vsel %vm619, %v1204, 0.0
  %v1233 = vadd.f32 %v1231, %v1232
  %v1234 = vsel %vm619, %v1205, 0.0
  %v1235 = vadd.f32 %v1233, %v1234
  %v1236 = vsel %vm619, %v1206, 0.0
  %v1237 = vadd.f32 %v1235, %v1236
  %v1238 = vsel %vm619, %v1207, 0.0
  %v1239 = vadd.f32 %v1237, %v1238
  %v1240 = vsel %vm619, %v1208, 0.0
  %v1241 = vadd.f32 %v1239, %v1240
  %v1242 = vsel %vm619, %v1209, 0.0
  %v1243 = vadd.f32 %v1241, %v1242
  %v1244 = vsel %vm619, %v1210, 0.0
  %v1245 = vadd.f32 %v1243, %v1244
  %v1246 = vsel %vm619, %v1211, 0.0
  %v1247 = vadd.f32 %v1245, %v1246
  %v1248 = vsel %vm619, %v1212, 0.0
  %v1249 = vadd.f32 %v1247, %v1248
  %v1250 = vsel %vm619, %v1213, 0.0
  %v1251 = vadd.f32 %v1249, %v1250
  %v1252 = vsel %vm619, %v1214, 0.0
  %v1253 = vadd.f32 %v1251, %v1252
  %v1254 = vrot.slane %v1253, 4
  %v1255 = vadd.f32 %v1253, %v1254
  %v1256 = vrot.slane %v1255, 2
  %v1257 = vadd.f32 %v1255, %v1256
  %v1258 = vrot.slane %v1257, 1
  %v1259 = vadd.f32 %v1257, %v1258
  %v1260 = vmul.f32 %v1259, 0.010204081
  %v1261 = vld [vmem:[%s3] sm:$0x1]
  %v1262 = vadd.f32 %v1260, 1e-05
  %v1263 = vrsqrt.pop %v1262
  %v1264 = vmul.f32 %v1261, %v1263
  %v1265 = vld [vmem:[%s4] sm:$0x1]
  %v1266 = vmul.f32 %v1034, %v1264
  %v1267 = vsub.f32 %v1265, %v1266
  %v1269 = vlaneseq
  %v1270 = vshrl.u32 %v1269, 7
  %v1271 = vsub.s32 0, %v1270
  %v1272 = vrot.slane %v1264, %v1271
  %v1274 = vmul.f32 %v911, %v1272
  %v1275 = vmul.f32 %v914, %v1272
  %v1276 = vmul.f32 %v919, %v1272
  %v1277 = vmul.f32 %v922, %v1272
  %v1278 = vmul.f32 %v927, %v1272
  %v1279 = vmul.f32 %v930, %v1272
  %v1280 = vmul.f32 %v935, %v1272
  %v1281 = vmul.f32 %v938, %v1272
  %v1282 = vmul.f32 %v943, %v1272
  %v1283 = vmul.f32 %v946, %v1272
  %v1284 = vmul.f32 %v951, %v1272
  %v1285 = vmul.f32 %v954, %v1272
  %v1286 = vmul.f32 %v959, %v1272
  %v1287 = vmul.f32 %v962, %v1272
  %v1288 = vmul.f32 %v967, %v1272
  %v1289 = vmul.f32 %v970, %v1272
  %v1291 = vlaneseq
  %v1292 = vshrl.u32 %v1291, 7
  %v1293 = vsub.s32 0, %v1292
  %v1294 = vrot.slane %v1267, %v1293
  %v1296 = vadd.f32 %v1274, %v1294
  %v1297 = vadd.f32 %v1275, %v1294
  %v1298 = vadd.f32 %v1276, %v1294
  %v1299 = vadd.f32 %v1277, %v1294
  %v1300 = vadd.f32 %v1278, %v1294
  %v1301 = vadd.f32 %v1279, %v1294
  %v1302 = vadd.f32 %v1280, %v1294
  %v1303 = vadd.f32 %v1281, %v1294
  %v1304 = vadd.f32 %v1282, %v1294
  %v1305 = vadd.f32 %v1283, %v1294
  %v1306 = vadd.f32 %v1284, %v1294
  %v1307 = vadd.f32 %v1285, %v1294
  %v1308 = vadd.f32 %v1286, %v1294
  %v1309 = vadd.f32 %v1287, %v1294
  %v1310 = vadd.f32 %v1288, %v1294
  %v1311 = vadd.f32 %v1289, %v1294
  %v1312 = vmax.f32 %v1296, 0.0
  %v1313 = vmax.f32 %v1297, 0.0
  %v1314 = vmax.f32 %v1298, 0.0
  %v1315 = vmax.f32 %v1299, 0.0
  %v1316 = vmax.f32 %v1300, 0.0
  %v1317 = vmax.f32 %v1301, 0.0
  %v1318 = vmax.f32 %v1302, 0.0
  %v1319 = vmax.f32 %v1303, 0.0
  %v1320 = vmax.f32 %v1304, 0.0
  %v1321 = vmax.f32 %v1305, 0.0
  %v1322 = vmax.f32 %v1306, 0.0
  %v1323 = vmax.f32 %v1307, 0.0
  %v1324 = vmax.f32 %v1308, 0.0
  %v1325 = vmax.f32 %v1309, 0.0
  %v1326 = vmax.f32 %v1310, 0.0
  %v1327 = vmax.f32 %v1311, 0.0
  %v1328 = vmax.f32 %v1312, %v1316
  %v1329 = vmax.f32 %v1313, %v1317
  %v1330 = vmax.f32 %v1314, %v1318
  %v1331 = vmax.f32 %v1315, %v1319
  %v1332 = vmax.f32 %v1320, %v1324
  %v1333 = vmax.f32 %v1321, %v1325
  %v1334 = vmax.f32 %v1322, %v1326
  %v1335 = vmax.f32 %v1323, %v1327
  %v1336 = vmax.f32 %v1328, %v1332
  %v1337 = vmax.f32 %v1329, %v1333
  %v1338 = vmax.f32 %v1330, %v1334
  %v1339 = vmax.f32 %v1331, %v1335
  %v1340 = vpack.c.bf16 %v1337, %v1336
  %v1341 = vpack.c.bf16 %v1339, %v1338
  %v1344 = vunpack.c.l.b16 %v1340
  %v1345 = vunpack.c.h.b16 %v1340
  %v1346 = vunpack.c.l.b16 %v1341
  %v1347 = vunpack.c.h.b16 %v1341
  %v1348 = vpack.c.b16 %v1344, %v1344
  %v1349 = vpack.c.b16 %v1345, %v1345
  %v1350 = vpack.c.b16 %v1346, %v1346
  %v1351 = vpack.c.b16 %v1347, %v1347
  %vm1356 = vcmask 519168
  %1357 = vst.msk [vmem:[%s5] sm:$0xf] %vm1356, %v1348
  %1358 = vst.msk [vmem:[%s5 + $0x4] sm:$0xf] %vm1356, %v1349
  %1359 = vst.msk [vmem:[%s5 + $0x8] sm:$0xf] %vm1356, %v1350
  %1360 = vst.msk [vmem:[%s5 + $0xc] sm:$0xf] %vm1356, %v1351
  // Predicated region
  $region22: #{forward.5} parent=0 // pred_check
    _
  $region23: #{forward.5} parent=0 // pred_check_branch
    %1362 = sbr.rel (0) target = $region25
  $region24: #{forward.5} parent=0 // pred_region
    _
  $region25: #{forward.5} parent=0 // pred_fallthru
    _
  // Predicated region
  $region26: #{forward.5} parent=0 // pred_check
    _
  $region27: #{forward.5} parent=0 // pred_check_branch
    %1364 = sbr.rel (0) target = $region29
  $region28: #{forward.5} parent=0 // pred_region
    _
  $region29: #{forward.5} parent=0 // pred_fallthru
    _

// kernel: forward.7
$region0: #{forward.7}
  #allocation0 [shape = 'u32[]', space=smem, size = 0x4, offset = 0x4, fixed_abs, tag = 'smem constant byte address 0x4 - core index']
  #allocation1 [shape = 'u32[144,128]{1,0:T(1,128)}', space=vmem, size = 0x12000, scoped, tag = 'internal scratch']
  %s0 = inlined_call_operand.vmem [shape: bf16[32,576], index: 0, kind: input, shape index: {}]
  %s1 = inlined_call_operand.vmem [shape: bf16[576,64], index: 1, kind: input, shape index: {}]
  %s2 = inlined_call_operand.vmem [shape: f32[32,1], index: 2, kind: input, shape index: {}]
  %s3 = inlined_call_operand.vmem [shape: f32[1,64], index: 3, kind: input, shape index: {}]
  %s4 = inlined_call_operand.vmem [shape: f32[1,64], index: 4, kind: input, shape index: {}]
  %s5 = inlined_call_operand.vmem [shape: f32[32,64], index: 5, kind: output, shape index: {}]
  %s6 = sld [smem:[#allocation0]]
  $region30: #{forward.7} parent=0
    _
  %s8 = ssub.s32 1, %s6
  %s9 = scalar_select 0, %s8, %s6
  // Predicated region
  $region2: #{forward.7} parent=0 // pred_check
    _
  $region3: #{forward.7} parent=0 // pred_check_branch
    %11 = sbr.rel (0) target = $region5
  $region4: #{forward.7} parent=0 // pred_region
    _
  $region5: #{forward.7} parent=0 // pred_fallthru
    _
  // Predicated region
  $region6: #{forward.7} parent=0 // pred_check
    _
  $region7: #{forward.7} parent=0 // pred_check_branch
    %13 = sbr.rel (0) target = $region9
  $region8: #{forward.7} parent=0 // pred_region
    _
  $region9: #{forward.7} parent=0 // pred_fallthru
    _
  // Predicated region
  $region10: #{forward.7} parent=0 // pred_check
    _
  $region11: #{forward.7} parent=0 // pred_check_branch
    %15 = sbr.rel (0) target = $region13
  $region12: #{forward.7} parent=0 // pred_region
    _
  $region13: #{forward.7} parent=0 // pred_fallthru
    _
  // Predicated region
  $region14: #{forward.7} parent=0 // pred_check
    _
  $region15: #{forward.7} parent=0 // pred_check_branch
    %17 = sbr.rel (0) target = $region17
  $region16: #{forward.7} parent=0 // pred_region
    _
  $region17: #{forward.7} parent=0 // pred_fallthru
    _
  // Predicated region
  $region18: #{forward.7} parent=0 // pred_check
    _
  $region19: #{forward.7} parent=0 // pred_check_branch
    %19 = sbr.rel (0) target = $region21
  $region20: #{forward.7} parent=0 // pred_region
    _
  $region21: #{forward.7} parent=0 // pred_fallthru
    _
  %v21 = vld [vmem:[%s0] sm:$0xff]
  %v22 = vld [vmem:[%s0 + $0x8] sm:$0xff]
  %v23 = vld [vmem:[%s0 + $0x10] sm:$0xf]
  %v24 = vld [vmem:[%s0 + $0x14] sm:$0xff]
  %v25 = vld [vmem:[%s0 + $0x1c] sm:$0xff]
  %v26 = vld [vmem:[%s0 + $0x24] sm:$0xf]
  %v27 = vld [vmem:[%s0 + $0x28] sm:$0xff]
  %v28 = vld [vmem:[%s0 + $0x30] sm:$0xff]
  %v29 = vld [vmem:[%s0 + $0x38] sm:$0xf]
  %v30 = vld [vmem:[%s0 + $0x3c] sm:$0xff]
  %v31 = vld [vmem:[%s0 + $0x44] sm:$0xff]
  %v32 = vld [vmem:[%s0 + $0x4c] sm:$0xf]
  %v33 = vld [vmem:[%s1] sm:$0xf]
  %v34 = vld [vmem:[%s1 + $0x4] sm:$0xf]
  %v35 = vld [vmem:[%s1 + $0x8] sm:$0xf]
  %v36 = vld [vmem:[%s1 + $0xc] sm:$0xf]
  %v37 = vld [vmem:[%s1 + $0x10] sm:$0xf]
  %v38 = vld [vmem:[%s1 + $0x14] sm:$0xf]
  %v39 = vld [vmem:[%s1 + $0x18] sm:$0xf]
  %v40 = vld [vmem:[%s1 + $0x1c] sm:$0xf]
  %v41 = vld [vmem:[%s1 + $0x20] sm:$0xf]
  %v42 = vld [vmem:[%s1 + $0x24] sm:$0xf]
  %v43 = vld [vmem:[%s1 + $0x28] sm:$0xf]
  %v44 = vld [vmem:[%s1 + $0x2c] sm:$0xf]
  %v45 = vld [vmem:[%s1 + $0x30] sm:$0xf]
  %v46 = vld [vmem:[%s1 + $0x34] sm:$0xf]
  %v47 = vld [vmem:[%s1 + $0x38] sm:$0xf]
  %v48 = vld [vmem:[%s1 + $0x3c] sm:$0xf]
  %v49 = vld [vmem:[%s1 + $0x40] sm:$0xf]
  %v50 = vld [vmem:[%s1 + $0x44] sm:$0xf]
  %v51 = vld [vmem:[%s1 + $0x48] sm:$0xf]
  %v52 = vld [vmem:[%s1 + $0x4c] sm:$0xf]
  %v53 = vld [vmem:[%s1 + $0x50] sm:$0xf]
  %v54 = vld [vmem:[%s1 + $0x54] sm:$0xf]
  %v55 = vld [vmem:[%s1 + $0x58] sm:$0xf]
  %v56 = vld [vmem:[%s1 + $0x5c] sm:$0xf]
  %v57 = vld [vmem:[%s1 + $0x60] sm:$0xf]
  %v58 = vld [vmem:[%s1 + $0x64] sm:$0xf]
  %v59 = vld [vmem:[%s1 + $0x68] sm:$0xf]
  %v60 = vld [vmem:[%s1 + $0x6c] sm:$0xf]
  %v61 = vld [vmem:[%s1 + $0x70] sm:$0xf]
  %v62 = vld [vmem:[%s1 + $0x74] sm:$0xf]
  %v63 = vld [vmem:[%s1 + $0x78] sm:$0xf]
  %v64 = vld [vmem:[%s1 + $0x7c] sm:$0xf]
  %v65 = vld [vmem:[%s1 + $0x80] sm:$0xf]
  %v66 = vld [vmem:[%s1 + $0x84] sm:$0xf]
  %v67 = vld [vmem:[%s1 + $0x88] sm:$0xf]
  %v68 = vld [vmem:[%s1 + $0x8c] sm:$0xf]
  %v69 = vld [vmem:[%s1 + $0x90] sm:$0xf]
  %v70 = vld [vmem:[%s1 + $0x94] sm:$0xf]
  %v71 = vld [vmem:[%s1 + $0x98] sm:$0xf]
  %v72 = vld [vmem:[%s1 + $0x9c] sm:$0xf]
  %v73 = vld [vmem:[%s1 + $0xa0] sm:$0xf]
  %v74 = vld [vmem:[%s1 + $0xa4] sm:$0xf]
  %v75 = vld [vmem:[%s1 + $0xa8] sm:$0xf]
  %v76 = vld [vmem:[%s1 + $0xac] sm:$0xf]
  %v77 = vld [vmem:[%s1 + $0xb0] sm:$0xf]
  %v78 = vld [vmem:[%s1 + $0xb4] sm:$0xf]
  %v79 = vld [vmem:[%s1 + $0xb8] sm:$0xf]
  %v80 = vld [vmem:[%s1 + $0xbc] sm:$0xf]
  %v81 = vld [vmem:[%s1 + $0xc0] sm:$0xf]
  %v82 = vld [vmem:[%s1 + $0xc4] sm:$0xf]
  %v83 = vld [vmem:[%s1 + $0xc8] sm:$0xf]
  %v84 = vld [vmem:[%s1 + $0xcc] sm:$0xf]
  %v85 = vld [vmem:[%s1 + $0xd0] sm:$0xf]
  %v86 = vld [vmem:[%s1 + $0xd4] sm:$0xf]
  %v87 = vld [vmem:[%s1 + $0xd8] sm:$0xf]
  %v88 = vld [vmem:[%s1 + $0xdc] sm:$0xf]
  %v89 = vld [vmem:[%s1 + $0xe0] sm:$0xf]
  %v90 = vld [vmem:[%s1 + $0xe4] sm:$0xf]
  %v91 = vld [vmem:[%s1 + $0xe8] sm:$0xf]
  %v92 = vld [vmem:[%s1 + $0xec] sm:$0xf]
  %v93 = vld [vmem:[%s1 + $0xf0] sm:$0xf]
  %v94 = vld [vmem:[%s1 + $0xf4] sm:$0xf]
  %v95 = vld [vmem:[%s1 + $0xf8] sm:$0xf]
  %v96 = vld [vmem:[%s1 + $0xfc] sm:$0xf]
  %v97 = vld [vmem:[%s1 + $0x100] sm:$0xf]
  %v98 = vld [vmem:[%s1 + $0x104] sm:$0xf]
  %v99 = vld [vmem:[%s1 + $0x108] sm:$0xf]
  %v100 = vld [vmem:[%s1 + $0x10c] sm:$0xf]
  %v101 = vld [vmem:[%s1 + $0x110] sm:$0xf]
  %v102 = vld [vmem:[%s1 + $0x114] sm:$0xf]
  %v103 = vld [vmem:[%s1 + $0x118] sm:$0xf]
  %v104 = vld [vmem:[%s1 + $0x11c] sm:$0xf]
  %v117 = vunpack.c.l.b16 %v21
  %v118 = vunpack.c.h.b16 %v21
  %v119 = vunpack.c.l.b16 %v22
  %v120 = vunpack.c.h.b16 %v22
  %v121 = vunpack.c.l.b16 %v23
  %v122 = vunpack.c.l.b16 %v24
  %v123 = vunpack.c.h.b16 %v24
  %v124 = vunpack.c.l.b16 %v25
  %v125 = vunpack.c.h.b16 %v25
  %v126 = vunpack.c.l.b16 %v26
  %v127 = vunpack.c.l.b16 %v27
  %v128 = vunpack.c.h.b16 %v27
  %v129 = vunpack.c.l.b16 %v28
  %v130 = vunpack.c.h.b16 %v28
  %v131 = vunpack.c.l.b16 %v29
  %v132 = vunpack.c.l.b16 %v30
  %v133 = vunpack.c.h.b16 %v30
  %v134 = vunpack.c.l.b16 %v31
  %v135 = vunpack.c.h.b16 %v31
  %v136 = vunpack.c.l.b16 %v32
  %v137 = vpack.c.b16 %v122, %v117
  %v138 = vpack.c.b16 %v123, %v118
  %v139 = vpack.c.b16 %v124, %v119
  %v140 = vpack.c.b16 %v125, %v120
  %v141 = vpack.c.b16 %v126, %v121
  %v142 = vpack.c.b16 %v132, %v127
  %v143 = vpack.c.b16 %v133, %v128
  %v144 = vpack.c.b16 %v134, %v129
  %v145 = vpack.c.b16 %v135, %v130
  %v146 = vpack.c.b16 %v136, %v131
  %v227 = vunpack.c.l.b16 %v33
  %v228 = vunpack.c.l.b16 %v34
  %v229 = vunpack.c.l.b16 %v35
  %v230 = vunpack.c.l.b16 %v36
  %v231 = vunpack.c.l.b16 %v37
  %v232 = vunpack.c.l.b16 %v38
  %v233 = vunpack.c.l.b16 %v39
  %v234 = vunpack.c.l.b16 %v40
  %v235 = vunpack.c.l.b16 %v41
  %v236 = vunpack.c.l.b16 %v42
  %v237 = vunpack.c.l.b16 %v43
  %v238 = vunpack.c.l.b16 %v44
  %v239 = vunpack.c.l.b16 %v45
  %v240 = vunpack.c.l.b16 %v46
  %v241 = vunpack.c.l.b16 %v47
  %v242 = vunpack.c.l.b16 %v48
  %v243 = vunpack.c.l.b16 %v49
  %v244 = vunpack.c.l.b16 %v50
  %v245 = vunpack.c.l.b16 %v51
  %v246 = vunpack.c.l.b16 %v52
  %v247 = vunpack.c.l.b16 %v53
  %v248 = vunpack.c.l.b16 %v54
  %v249 = vunpack.c.l.b16 %v55
  %v250 = vunpack.c.l.b16 %v56
  %v251 = vunpack.c.l.b16 %v57
  %v252 = vunpack.c.l.b16 %v58
  %v253 = vunpack.c.l.b16 %v59
  %v254 = vunpack.c.l.b16 %v60
  %v255 = vunpack.c.l.b16 %v61
  %v256 = vunpack.c.l.b16 %v62
  %v257 = vunpack.c.l.b16 %v63
  %v258 = vunpack.c.l.b16 %v64
  %v259 = vunpack.c.l.b16 %v65
  %v260 = vunpack.c.l.b16 %v66
  %v261 = vunpack.c.l.b16 %v67
  %v262 = vunpack.c.l.b16 %v68
  %v263 = vunpack.c.l.b16 %v69
  %v264 = vunpack.c.l.b16 %v70
  %v265 = vunpack.c.l.b16 %v71
  %v266 = vunpack.c.l.b16 %v72
  %v267 = vunpack.c.l.b16 %v73
  %v268 = vunpack.c.l.b16 %v74
  %v269 = vunpack.c.l.b16 %v75
  %v270 = vunpack.c.l.b16 %v76
  %v271 = vunpack.c.l.b16 %v77
  %v272 = vunpack.c.l.b16 %v78
  %v273 = vunpack.c.l.b16 %v79
  %v274 = vunpack.c.l.b16 %v80
  %v275 = vunpack.c.l.b16 %v81
  %v276 = vunpack.c.l.b16 %v82
  %v277 = vunpack.c.l.b16 %v83
  %v278 = vunpack.c.l.b16 %v84
  %v279 = vunpack.c.l.b16 %v85
  %v280 = vunpack.c.l.b16 %v86
  %v281 = vunpack.c.l.b16 %v87
  %v282 = vunpack.c.l.b16 %v88
  %v283 = vunpack.c.l.b16 %v89
  %v284 = vunpack.c.l.b16 %v90
  %v285 = vunpack.c.l.b16 %v91
  %v286 = vunpack.c.l.b16 %v92
  %v287 = vunpack.c.l.b16 %v93
  %v288 = vunpack.c.l.b16 %v94
  %v289 = vunpack.c.l.b16 %v95
  %v290 = vunpack.c.l.b16 %v96
  %v291 = vunpack.c.l.b16 %v97
  %v292 = vunpack.c.l.b16 %v98
  %v293 = vunpack.c.l.b16 %v99
  %v294 = vunpack.c.l.b16 %v100
  %v295 = vunpack.c.l.b16 %v101
  %v296 = vunpack.c.l.b16 %v102
  %v297 = vunpack.c.l.b16 %v103
  %v298 = vunpack.c.l.b16 %v104
  %v299 = vpack.c.b16 %v228, %v227
  %v300 = vpack.c.b16 %v230, %v229
  %v301 = vpack.c.b16 %v232, %v231
  %v302 = vpack.c.b16 %v234, %v233
  %v303 = vpack.c.b16 %v236, %v235
  %v304 = vpack.c.b16 %v238, %v237
  %v305 = vpack.c.b16 %v240, %v239
  %v306 = vpack.c.b16 %v242, %v241
  %v307 = vpack.c.b16 %v244, %v243
  %v308 = vpack.c.b16 %v246, %v245
  %v309 = vpack.c.b16 %v248, %v247
  %v310 = vpack.c.b16 %v250, %v249
  %v311 = vpack.c.b16 %v252, %v251
  %v312 = vpack.c.b16 %v254, %v253
  %v313 = vpack.c.b16 %v256, %v255
  %v314 = vpack.c.b16 %v258, %v257
  %v315 = vpack.c.b16 %v260, %v259
  %v316 = vpack.c.b16 %v262, %v261
  %v317 = vpack.c.b16 %v264, %v263
  %v318 = vpack.c.b16 %v266, %v265
  %v319 = vpack.c.b16 %v268, %v267
  %v320 = vpack.c.b16 %v270, %v269
  %v321 = vpack.c.b16 %v272, %v271
  %v322 = vpack.c.b16 %v274, %v273
  %v323 = vpack.c.b16 %v276, %v275
  %v324 = vpack.c.b16 %v278, %v277
  %v325 = vpack.c.b16 %v280, %v279
  %v326 = vpack.c.b16 %v282, %v281
  %v327 = vpack.c.b16 %v284, %v283
  %v328 = vpack.c.b16 %v286, %v285
  %v329 = vpack.c.b16 %v288, %v287
  %v330 = vpack.c.b16 %v290, %v289
  %v331 = vpack.c.b16 %v292, %v291
  %v332 = vpack.c.b16 %v294, %v293
  %v333 = vpack.c.b16 %v296, %v295
  %v334 = vpack.c.b16 %v298, %v297
  %vm371 = vcmask 523264
  %v373 = vsel %vm371, %v141, 0
  %v376 = vsel %vm371, %v146, 0
  %378 = vmatprep.subr.bf16.mxu0 0
  %379 = vmatpush1.bf16.msra.mxu0 %v299
  %380 = vmatprep.subr.bf16.mxu0 0
  %381 = vmatpush1.bf16.msra.mxu0 %v300
  %382 = vmatprep.subr.bf16.mxu0 0
  %383 = vmatpush1.bf16.msra.mxu0 %v301
  %384 = vmatprep.subr.bf16.mxu0 0
  %385 = vmatpush1.bf16.msra.mxu0 %v302
  %386 = vmatprep.subr.bf16.mxu0 0
  %387 = vmatpush1.bf16.msra.mxu0 %v303
  %388 = vmatprep.subr.bf16.mxu0 0
  %389 = vmatpush1.bf16.msra.mxu0 %v304
  %390 = vmatprep.subr.bf16.mxu0 0
  %391 = vmatpush1.bf16.msra.mxu0 %v305
  %392 = vmatprep.subr.bf16.mxu0 0
  %393 = vmatpush1.bf16.msra.mxu0 %v306
  %394 = vmatprep.subr.bf16.mxu0 0
  %395 = vmatpush1.bf16.msra.mxu0 %v307
  %396 = vmatprep.subr.bf16.mxu0 0
  %397 = vmatpush1.bf16.msra.mxu0 %v308
  %398 = vmatprep.subr.bf16.mxu0 0
  %399 = vmatpush1.bf16.msra.mxu0 %v309
  %400 = vmatprep.subr.bf16.mxu0 0
  %401 = vmatpush1.bf16.msra.mxu0 %v310
  %402 = vmatprep.subr.bf16.mxu0 0
  %403 = vmatpush1.bf16.msra.mxu0 %v311
  %404 = vmatprep.subr.bf16.mxu0 0
  %405 = vmatpush1.bf16.msra.mxu0 %v312
  %406 = vmatprep.subr.bf16.mxu0 0
  %407 = vmatpush1.bf16.msra.mxu0 %v313
  %408 = vmatprep.subr.bf16.mxu0 0
  %409 = vmatpush1.bf16.msra.mxu0 %v314
  %410 = vmatprep.mubr.bf16.mxu0 %v138
  %411 = vmatmul.mubr.bf16.gmra.mrb[0].mxu0 %v137
  %v412 = vpop.f32.mrb[0].mxu0
  %v413 = vadd.f32 0.0, %v412
  %v414 = vpop.f32.mrb[0].mxu0
  %v415 = vpop.f32.mrb[0].mxu0
  %v416 = vadd.f32 0.0, %v415
  %v417 = vpop.f32.mrb[0].mxu0
  %418 = vmatprep.mubr.bf16.mxu0 %v143
  %419 = vmatmul.mubr.bf16.gmra.mrb[0].mxu0 %v142
  %v420 = vpop.f32.mrb[0].mxu0
  %v421 = vadd.f32 0.0, %v420
  %v422 = vpop.f32.mrb[0].mxu0
  %v423 = vpop.f32.mrb[0].mxu0
  %v424 = vadd.f32 0.0, %v423
  %v425 = vpop.f32.mrb[0].mxu0
  %426 = vdwg.mxu0
  %427 = vmatprep.subr.bf16.mxu0 0
  %428 = vmatpush1.bf16.msra.mxu0 %v315
  %429 = vmatprep.subr.bf16.mxu0 0
  %430 = vmatpush1.bf16.msra.mxu0 %v316
  %431 = vmatprep.subr.bf16.mxu0 0
  %432 = vmatpush1.bf16.msra.mxu0 %v317
  %433 = vmatprep.subr.bf16.mxu0 0
  %434 = vmatpush1.bf16.msra.mxu0 %v318
  %435 = vmatprep.subr.bf16.mxu0 0
  %436 = vmatpush1.bf16.msra.mxu0 %v319
  %437 = vmatprep.subr.bf16.mxu0 0
  %438 = vmatpush1.bf16.msra.mxu0 %v320
  %439 = vmatprep.subr.bf16.mxu0 0
  %440 = vmatpush1.bf16.msra.mxu0 %v321
  %441 = vmatprep.subr.bf16.mxu0 0
  %442 = vmatpush1.bf16.msra.mxu0 %v322
  %443 = vmatprep.subr.bf16.mxu0 0
  %444 = vmatpush1.bf16.msra.mxu0 %v323
  %445 = vmatprep.subr.bf16.mxu0 0
  %446 = vmatpush1.bf16.msra.mxu0 %v324
  %447 = vmatprep.subr.bf16.mxu0 0
  %448 = vmatpush1.bf16.msra.mxu0 %v325
  %449 = vmatprep.subr.bf16.mxu0 0
  %450 = vmatpush1.bf16.msra.mxu0 %v326
  %451 = vmatprep.subr.bf16.mxu0 0
  %452 = vmatpush1.bf16.msra.mxu0 %v327
  %453 = vmatprep.subr.bf16.mxu0 0
  %454 = vmatpush1.bf16.msra.mxu0 %v328
  %455 = vmatprep.subr.bf16.mxu0 0
  %456 = vmatpush1.bf16.msra.mxu0 %v329
  %457 = vmatprep.subr.bf16.mxu0 0
  %458 = vmatpush1.bf16.msra.mxu0 %v330
  %459 = vmatprep.mubr.bf16.mxu0 %v140
  %460 = vmatmul.mubr.bf16.gmra.mrb[0].mxu0 %v139
  %v461 = vpop.f32.mrb[0].mxu0
  %v462 = vadd.f32 %v413, %v461
  %v463 = vpop.f32.mrb[0].mxu0
  %v464 = vpop.f32.mrb[0].mxu0
  %v465 = vadd.f32 %v416, %v464
  %v466 = vpop.f32.mrb[0].mxu0
  %467 = vmatprep.mubr.bf16.mxu0 %v145
  %468 = vmatmul.mubr.bf16.gmra.mrb[0].mxu0 %v144
  %v469 = vpop.f32.mrb[0].mxu0
  %v470 = vadd.f32 %v421, %v469
  %v471 = vpop.f32.mrb[0].mxu0
  %v472 = vpop.f32.mrb[0].mxu0
  %v473 = vadd.f32 %v424, %v472
  %v474 = vpop.f32.mrb[0].mxu0
  %475 = vdwg.mxu0
  %476 = vmatprep.subr.bf16.mxu0 0
  %477 = vmatpush1.bf16.msra.mxu0 %v331
  %478 = vmatprep.subr.bf16.mxu0 0
  %479 = vmatpush1.bf16.msra.mxu0 %v332
  %480 = vmatprep.subr.bf16.mxu0 0
  %481 = vmatpush1.bf16.msra.mxu0 %v333
  %482 = vmatprep.subr.bf16.mxu0 0
  %483 = vmatpush1.bf16.msra.mxu0 %v334
  %484 = vmatprep.subr.bf16.mxu0 0
  %485 = vmatpush1.bf16.msra.mxu0 0
  %486 = vmatprep.subr.bf16.mxu0 0
  %487 = vmatpush1.bf16.msra.mxu0 0
  %488 = vmatprep.subr.bf16.mxu0 0
  %489 = vmatpush1.bf16.msra.mxu0 0
  %490 = vmatprep.subr.bf16.mxu0 0
  %491 = vmatpush1.bf16.msra.mxu0 0
  %492 = vmatprep.subr.bf16.mxu0 0
  %493 = vmatpush1.bf16.msra.mxu0 0
  %494 = vmatprep.subr.bf16.mxu0 0
  %495 = vmatpush1.bf16.msra.mxu0 0
  %496 = vmatprep.subr.bf16.mxu0 0
  %497 = vmatpush1.bf16.msra.mxu0 0
  %498 = vmatprep.subr.bf16.mxu0 0
  %499 = vmatpush1.bf16.msra.mxu0 0
  %500 = vmatprep.subr.bf16.mxu0 0
  %501 = vmatpush1.bf16.msra.mxu0 0
  %502 = vmatprep.subr.bf16.mxu0 0
  %503 = vmatpush1.bf16.msra.mxu0 0
  %504 = vmatprep.subr.bf16.mxu0 0
  %505 = vmatpush1.bf16.msra.mxu0 0
  %506 = vmatprep.subr.bf16.mxu0 0
  %507 = vmatpush1.bf16.msra.mxu0 0
  %508 = vmatprep.mubr.bf16.mxu0 0
  %509 = vmatmul.mubr.bf16.gmra.mrb[0].mxu0 %v373
  %v510 = vpop.f32.mrb[0].mxu0
  %v511 = vadd.f32 %v462, %v510
  %v512 = vpop.f32.mrb[0].mxu0
  %v513 = vpop.f32.mrb[0].mxu0
  %v514 = vadd.f32 %v465, %v513
  %v515 = vpop.f32.mrb[0].mxu0
  %516 = vmatprep.mubr.bf16.mxu0 0
  %517 = vmatmul.mubr.bf16.gmra.mrb[0].mxu0 %v376
  %v518 = vpop.f32.mrb[0].mxu0
  %v519 = vadd.f32 %v470, %v518
  %v520 = vpop.f32.mrb[0].mxu0
  %v521 = vpop.f32.mrb[0].mxu0
  %v522 = vadd.f32 %v473, %v521
  %v523 = vpop.f32.mrb[0].mxu0
  %524 = vdwg.mxu0
  %v525 = vsel %vm371, %v511, 0.0
  %v526 = vsel %vm371, %v514, 0.0
  %v527 = vadd.f32 %v525, %v526
  %v528 = vsel %vm371, %v519, 0.0
  %v529 = vadd.f32 %v527, %v528
  %v530 = vsel %vm371, %v522, 0.0
  %v531 = vadd.f32 %v529, %v530
  %v532 = vrot.slane %v531, 4
  %v533 = vadd.f32 %v531, %v532
  %v534 = vrot.slane %v533, 2
  %v535 = vadd.f32 %v533, %v534
  %v536 = vrot.slane %v535, 1
  %v537 = vadd.f32 %v535, %v536
  %v538 = vmul.f32 %v537, 0.055555556
  %v539 = vsub.f32 %v511, %v538
  %v540 = vsub.f32 %v514, %v538
  %v541 = vsub.f32 %v519, %v538
  %v542 = vsub.f32 %v522, %v538
  %v543 = vld [vmem:[%s2] sm:$0xff]
  %v544 = vld [vmem:[%s2 + $0x8] sm:$0xff]
  %v545 = vld [vmem:[%s2 + $0x10] sm:$0xff]
  %v546 = vld [vmem:[%s2 + $0x18] sm:$0xff]
  %548 = vset.pattern.permute.xlu0 0
  %549 = vperm.xlu0 %548, %v543
  %v550 = vpop.permute.xlu0 %549
  %553 = vset.pattern.permute.xlu0 0
  %554 = vperm.xlu0 %553, %v544
  %v555 = vpop.permute.xlu0 %554
  %558 = vset.pattern.permute.xlu0 0
  %559 = vperm.xlu0 %558, %v545
  %v560 = vpop.permute.xlu0 %559
  %563 = vset.pattern.permute.xlu0 0
  %564 = vperm.xlu0 %563, %v546
  %v565 = vpop.permute.xlu0 %564
  %v567 = vmul.f32 %v539, %v550
  %v568 = vmul.f32 %v540, %v555
  %v569 = vmul.f32 %v541, %v560
  %v570 = vmul.f32 %v542, %v565
  %v571 = vmul.f32 %v567, %v567
  %v572 = vmul.f32 %v568, %v568
  %v573 = vmul.f32 %v569, %v569
  %v574 = vmul.f32 %v570, %v570
  %v575 = vsel %vm371, %v571, 0.0
  %v576 = vsel %vm371, %v572, 0.0
  %v577 = vadd.f32 %v575, %v576
  %v578 = vsel %vm371, %v573, 0.0
  %v579 = vadd.f32 %v577, %v578
  %v580 = vsel %vm371, %v574, 0.0
  %v581 = vadd.f32 %v579, %v580
  %v582 = vrot.slane %v581, 4
  %v583 = vadd.f32 %v581, %v582
  %v584 = vrot.slane %v583, 2
  %v585 = vadd.f32 %v583, %v584
  %v586 = vrot.slane %v585, 1
  %v587 = vadd.f32 %v585, %v586
  %v588 = vmul.f32 %v587, 0.055555556
  %v589 = vld [vmem:[%s3] sm:$0x1]
  %v590 = vadd.f32 %v588, 1e-05
  %v591 = vrsqrt.pop %v590
  %v592 = vmul.f32 %v589, %v591
  %v593 = vld [vmem:[%s4] sm:$0x1]
  %v594 = vmul.f32 %v538, %v592
  %v595 = vsub.f32 %v593, %v594
  %v597 = vlaneseq
  %v598 = vshrl.u32 %v597, 7
  %v599 = vsub.s32 0, %v598
  %v600 = vrot.slane %v592, %v599
  %v602 = vmul.f32 %v511, %v600
  %v603 = vmul.f32 %v514, %v600
  %v604 = vmul.f32 %v519, %v600
  %v605 = vmul.f32 %v522, %v600
  %v607 = vlaneseq
  %v608 = vshrl.u32 %v607, 7
  %v609 = vsub.s32 0, %v608
  %v610 = vrot.slane %v595, %v609
  %v612 = vadd.f32 %v602, %v610
  %v613 = vadd.f32 %v603, %v610
  %v614 = vadd.f32 %v604, %v610
  %v615 = vadd.f32 %v605, %v610
  %v616 = vmax.f32 %v612, 0.0
  %v617 = vmax.f32 %v613, 0.0
  %v618 = vmax.f32 %v614, 0.0
  %v619 = vmax.f32 %v615, 0.0
  %620 = vst.msk [vmem:[%s5] sm:$0xff] %vm371, %v616
  %621 = vst.msk [vmem:[%s5 + $0x8] sm:$0xff] %vm371, %v617
  %622 = vst.msk [vmem:[%s5 + $0x10] sm:$0xff] %vm371, %v618
  %623 = vst.msk [vmem:[%s5 + $0x18] sm:$0xff] %vm371, %v619
  // Predicated region
  $region22: #{forward.7} parent=0 // pred_check
    _
  $region23: #{forward.7} parent=0 // pred_check_branch
    %625 = sbr.rel (0) target = $region25
  $region24: #{forward.7} parent=0 // pred_region
    _
  $region25: #{forward.7} parent=0 // pred_fallthru
    _
  // Predicated region
  $region26: #{forward.7} parent=0 // pred_check
    _
  $region27: #{forward.7} parent=0 // pred_check_branch
    %627 = sbr.rel (0) target = $region29
  $region28: #{forward.7} parent=0 // pred_region
    _
  $region29: #{forward.7} parent=0 // pred_fallthru
    _

// kernel: forward.6
$region0: #{forward.6}
  #allocation0 [shape = 'u32[]', space=smem, size = 0x4, offset = 0x4, fixed_abs, tag = 'smem constant byte address 0x4 - core index']
  #allocation1 [shape = 'u32[144,128]{1,0:T(1,128)}', space=vmem, size = 0x12000, scoped, tag = 'internal scratch']
  %s0 = inlined_call_operand.vmem [shape: bf16[32,576], index: 0, kind: input, shape index: {}]
  %s1 = inlined_call_operand.vmem [shape: bf16[576,64], index: 1, kind: input, shape index: {}]
  %s2 = inlined_call_operand.vmem [shape: f32[32,1], index: 2, kind: input, shape index: {}]
  %s3 = inlined_call_operand.vmem [shape: f32[1,64], index: 3, kind: input, shape index: {}]
  %s4 = inlined_call_operand.vmem [shape: f32[1,64], index: 4, kind: input, shape index: {}]
  %s5 = inlined_call_operand.vmem [shape: bf16[32,64], index: 5, kind: output, shape index: {}]
  %s6 = sld [smem:[#allocation0]]
  $region30: #{forward.6} parent=0
    _
  %s8 = ssub.s32 1, %s6
  %s9 = scalar_select 0, %s8, %s6
  // Predicated region
  $region2: #{forward.6} parent=0 // pred_check
    _
  $region3: #{forward.6} parent=0 // pred_check_branch
    %11 = sbr.rel (0) target = $region5
  $region4: #{forward.6} parent=0 // pred_region
    _
  $region5: #{forward.6} parent=0 // pred_fallthru
    _
  // Predicated region
  $region6: #{forward.6} parent=0 // pred_check
    _
  $region7: #{forward.6} parent=0 // pred_check_branch
    %13 = sbr.rel (0) target = $region9
  $region8: #{forward.6} parent=0 // pred_region
    _
  $region9: #{forward.6} parent=0 // pred_fallthru
    _
  // Predicated region
  $region10: #{forward.6} parent=0 // pred_check
    _
  $region11: #{forward.6} parent=0 // pred_check_branch
    %15 = sbr.rel (0) target = $region13
  $region12: #{forward.6} parent=0 // pred_region
    _
  $region13: #{forward.6} parent=0 // pred_fallthru
    _
  // Predicated region
  $region14: #{forward.6} parent=0 // pred_check
    _
  $region15: #{forward.6} parent=0 // pred_check_branch
    %17 = sbr.rel (0) target = $region17
  $region16: #{forward.6} parent=0 // pred_region
    _
  $region17: #{forward.6} parent=0 // pred_fallthru
    _
  // Predicated region
  $region18: #{forward.6} parent=0 // pred_check
    _
  $region19: #{forward.6} parent=0 // pred_check_branch
    %19 = sbr.rel (0) target = $region21
  $region20: #{forward.6} parent=0 // pred_region
    _
  $region21: #{forward.6} parent=0 // pred_fallthru
    _
  %v21 = vld [vmem:[%s0] sm:$0xff]
  %v22 = vld [vmem:[%s0 + $0x8] sm:$0xff]
  %v23 = vld [vmem:[%s0 + $0x10] sm:$0xf]
  %v24 = vld [vmem:[%s0 + $0x14] sm:$0xff]
  %v25 = vld [vmem:[%s0 + $0x1c] sm:$0xff]
  %v26 = vld [vmem:[%s0 + $0x24] sm:$0xf]
  %v27 = vld [vmem:[%s0 + $0x28] sm:$0xff]
  %v28 = vld [vmem:[%s0 + $0x30] sm:$0xff]
  %v29 = vld [vmem:[%s0 + $0x38] sm:$0xf]
  %v30 = vld [vmem:[%s0 + $0x3c] sm:$0xff]
  %v31 = vld [vmem:[%s0 + $0x44] sm:$0xff]
  %v32 = vld [vmem:[%s0 + $0x4c] sm:$0xf]
  %v33 = vld [vmem:[%s1] sm:$0xf]
  %v34 = vld [vmem:[%s1 + $0x4] sm:$0xf]
  %v35 = vld [vmem:[%s1 + $0x8] sm:$0xf]
  %v36 = vld [vmem:[%s1 + $0xc] sm:$0xf]
  %v37 = vld [vmem:[%s1 + $0x10] sm:$0xf]
  %v38 = vld [vmem:[%s1 + $0x14] sm:$0xf]
  %v39 = vld [vmem:[%s1 + $0x18] sm:$0xf]
  %v40 = vld [vmem:[%s1 + $0x1c] sm:$0xf]
  %v41 = vld [vmem:[%s1 + $0x20] sm:$0xf]
  %v42 = vld [vmem:[%s1 + $0x24] sm:$0xf]
  %v43 = vld [vmem:[%s1 + $0x28] sm:$0xf]
  %v44 = vld [vmem:[%s1 + $0x2c] sm:$0xf]
  %v45 = vld [vmem:[%s1 + $0x30] sm:$0xf]
  %v46 = vld [vmem:[%s1 + $0x34] sm:$0xf]
  %v47 = vld [vmem:[%s1 + $0x38] sm:$0xf]
  %v48 = vld [vmem:[%s1 + $0x3c] sm:$0xf]
  %v49 = vld [vmem:[%s1 + $0x40] sm:$0xf]
  %v50 = vld [vmem:[%s1 + $0x44] sm:$0xf]
  %v51 = vld [vmem:[%s1 + $0x48] sm:$0xf]
  %v52 = vld [vmem:[%s1 + $0x4c] sm:$0xf]
  %v53 = vld [vmem:[%s1 + $0x50] sm:$0xf]
  %v54 = vld [vmem:[%s1 + $0x54] sm:$0xf]
  %v55 = vld [vmem:[%s1 + $0x58] sm:$0xf]
  %v56 = vld [vmem:[%s1 + $0x5c] sm:$0xf]
  %v57 = vld [vmem:[%s1 + $0x60] sm:$0xf]
  %v58 = vld [vmem:[%s1 + $0x64] sm:$0xf]
  %v59 = vld [vmem:[%s1 + $0x68] sm:$0xf]
  %v60 = vld [vmem:[%s1 + $0x6c] sm:$0xf]
  %v61 = vld [vmem:[%s1 + $0x70] sm:$0xf]
  %v62 = vld [vmem:[%s1 + $0x74] sm:$0xf]
  %v63 = vld [vmem:[%s1 + $0x78] sm:$0xf]
  %v64 = vld [vmem:[%s1 + $0x7c] sm:$0xf]
  %v65 = vld [vmem:[%s1 + $0x80] sm:$0xf]
  %v66 = vld [vmem:[%s1 + $0x84] sm:$0xf]
  %v67 = vld [vmem:[%s1 + $0x88] sm:$0xf]
  %v68 = vld [vmem:[%s1 + $0x8c] sm:$0xf]
  %v69 = vld [vmem:[%s1 + $0x90] sm:$0xf]
  %v70 = vld [vmem:[%s1 + $0x94] sm:$0xf]
  %v71 = vld [vmem:[%s1 + $0x98] sm:$0xf]
  %v72 = vld [vmem:[%s1 + $0x9c] sm:$0xf]
  %v73 = vld [vmem:[%s1 + $0xa0] sm:$0xf]
  %v74 = vld [vmem:[%s1 + $0xa4] sm:$0xf]
  %v75 = vld [vmem:[%s1 + $0xa8] sm:$0xf]
  %v76 = vld [vmem:[%s1 + $0xac] sm:$0xf]
  %v77 = vld [vmem:[%s1 + $0xb0] sm:$0xf]
  %v78 = vld [vmem:[%s1 + $0xb4] sm:$0xf]
  %v79 = vld [vmem:[%s1 + $0xb8] sm:$0xf]
  %v80 = vld [vmem:[%s1 + $0xbc] sm:$0xf]
  %v81 = vld [vmem:[%s1 + $0xc0] sm:$0xf]
  %v82 = vld [vmem:[%s1 + $0xc4] sm:$0xf]
  %v83 = vld [vmem:[%s1 + $0xc8] sm:$0xf]
  %v84 = vld [vmem:[%s1 + $0xcc] sm:$0xf]
  %v85 = vld [vmem:[%s1 + $0xd0] sm:$0xf]
  %v86 = vld [vmem:[%s1 + $0xd4] sm:$0xf]
  %v87 = vld [vmem:[%s1 + $0xd8] sm:$0xf]
  %v88 = vld [vmem:[%s1 + $0xdc] sm:$0xf]
  %v89 = vld [vmem:[%s1 + $0xe0] sm:$0xf]
  %v90 = vld [vmem:[%s1 + $0xe4] sm:$0xf]
  %v91 = vld [vmem:[%s1 + $0xe8] sm:$0xf]
  %v92 = vld [vmem:[%s1 + $0xec] sm:$0xf]
  %v93 = vld [vmem:[%s1 + $0xf0] sm:$0xf]
  %v94 = vld [vmem:[%s1 + $0xf4] sm:$0xf]
  %v95 = vld [vmem:[%s1 + $0xf8] sm:$0xf]
  %v96 = vld [vmem:[%s1 + $0xfc] sm:$0xf]
  %v97 = vld [vmem:[%s1 + $0x100] sm:$0xf]
  %v98 = vld [vmem:[%s1 + $0x104] sm:$0xf]
  %v99 = vld [vmem:[%s1 + $0x108] sm:$0xf]
  %v100 = vld [vmem:[%s1 + $0x10c] sm:$0xf]
  %v101 = vld [vmem:[%s1 + $0x110] sm:$0xf]
  %v102 = vld [vmem:[%s1 + $0x114] sm:$0xf]
  %v103 = vld [vmem:[%s1 + $0x118] sm:$0xf]
  %v104 = vld [vmem:[%s1 + $0x11c] sm:$0xf]
  %v117 = vunpack.c.l.b16 %v21
  %v118 = vunpack.c.h.b16 %v21
  %v119 = vunpack.c.l.b16 %v22
  %v120 = vunpack.c.h.b16 %v22
  %v121 = vunpack.c.l.b16 %v23
  %v122 = vunpack.c.l.b16 %v24
  %v123 = vunpack.c.h.b16 %v24
  %v124 = vunpack.c.l.b16 %v25
  %v125 = vunpack.c.h.b16 %v25
  %v126 = vunpack.c.l.b16 %v26
  %v127 = vunpack.c.l.b16 %v27
  %v128 = vunpack.c.h.b16 %v27
  %v129 = vunpack.c.l.b16 %v28
  %v130 = vunpack.c.h.b16 %v28
  %v131 = vunpack.c.l.b16 %v29
  %v132 = vunpack.c.l.b16 %v30
  %v133 = vunpack.c.h.b16 %v30
  %v134 = vunpack.c.l.b16 %v31
  %v135 = vunpack.c.h.b16 %v31
  %v136 = vunpack.c.l.b16 %v32
  %v137 = vpack.c.b16 %v122, %v117
  %v138 = vpack.c.b16 %v123, %v118
  %v139 = vpack.c.b16 %v124, %v119
  %v140 = vpack.c.b16 %v125, %v120
  %v141 = vpack.c.b16 %v126, %v121
  %v142 = vpack.c.b16 %v132, %v127
  %v143 = vpack.c.b16 %v133, %v128
  %v144 = vpack.c.b16 %v134, %v129
  %v145 = vpack.c.b16 %v135, %v130
  %v146 = vpack.c.b16 %v136, %v131
  %v227 = vunpack.c.l.b16 %v33
  %v228 = vunpack.c.l.b16 %v34
  %v229 = vunpack.c.l.b16 %v35
  %v230 = vunpack.c.l.b16 %v36
  %v231 = vunpack.c.l.b16 %v37
  %v232 = vunpack.c.l.b16 %v38
  %v233 = vunpack.c.l.b16 %v39
  %v234 = vunpack.c.l.b16 %v40
  %v235 = vunpack.c.l.b16 %v41
  %v236 = vunpack.c.l.b16 %v42
  %v237 = vunpack.c.l.b16 %v43
  %v238 = vunpack.c.l.b16 %v44
  %v239 = vunpack.c.l.b16 %v45
  %v240 = vunpack.c.l.b16 %v46
  %v241 = vunpack.c.l.b16 %v47
  %v242 = vunpack.c.l.b16 %v48
  %v243 = vunpack.c.l.b16 %v49
  %v244 = vunpack.c.l.b16 %v50
  %v245 = vunpack.c.l.b16 %v51
  %v246 = vunpack.c.l.b16 %v52
  %v247 = vunpack.c.l.b16 %v53
  %v248 = vunpack.c.l.b16 %v54
  %v249 = vunpack.c.l.b16 %v55
  %v250 = vunpack.c.l.b16 %v56
  %v251 = vunpack.c.l.b16 %v57
  %v252 = vunpack.c.l.b16 %v58
  %v253 = vunpack.c.l.b16 %v59
  %v254 = vunpack.c.l.b16 %v60
  %v255 = vunpack.c.l.b16 %v61
  %v256 = vunpack.c.l.b16 %v62
  %v257 = vunpack.c.l.b16 %v63
  %v258 = vunpack.c.l.b16 %v64
  %v259 = vunpack.c.l.b16 %v65
  %v260 = vunpack.c.l.b16 %v66
  %v261 = vunpack.c.l.b16 %v67
  %v262 = vunpack.c.l.b16 %v68
  %v263 = vunpack.c.l.b16 %v69
  %v264 = vunpack.c.l.b16 %v70
  %v265 = vunpack.c.l.b16 %v71
  %v266 = vunpack.c.l.b16 %v72
  %v267 = vunpack.c.l.b16 %v73
  %v268 = vunpack.c.l.b16 %v74
  %v269 = vunpack.c.l.b16 %v75
  %v270 = vunpack.c.l.b16 %v76
  %v271 = vunpack.c.l.b16 %v77
  %v272 = vunpack.c.l.b16 %v78
  %v273 = vunpack.c.l.b16 %v79
  %v274 = vunpack.c.l.b16 %v80
  %v275 = vunpack.c.l.b16 %v81
  %v276 = vunpack.c.l.b16 %v82
  %v277 = vunpack.c.l.b16 %v83
  %v278 = vunpack.c.l.b16 %v84
  %v279 = vunpack.c.l.b16 %v85
  %v280 = vunpack.c.l.b16 %v86
  %v281 = vunpack.c.l.b16 %v87
  %v282 = vunpack.c.l.b16 %v88
  %v283 = vunpack.c.l.b16 %v89
  %v284 = vunpack.c.l.b16 %v90
  %v285 = vunpack.c.l.b16 %v91
  %v286 = vunpack.c.l.b16 %v92
  %v287 = vunpack.c.l.b16 %v93
  %v288 = vunpack.c.l.b16 %v94
  %v289 = vunpack.c.l.b16 %v95
  %v290 = vunpack.c.l.b16 %v96
  %v291 = vunpack.c.l.b16 %v97
  %v292 = vunpack.c.l.b16 %v98
  %v293 = vunpack.c.l.b16 %v99
  %v294 = vunpack.c.l.b16 %v100
  %v295 = vunpack.c.l.b16 %v101
  %v296 = vunpack.c.l.b16 %v102
  %v297 = vunpack.c.l.b16 %v103
  %v298 = vunpack.c.l.b16 %v104
  %v299 = vpack.c.b16 %v228, %v227
  %v300 = vpack.c.b16 %v230, %v229
  %v301 = vpack.c.b16 %v232, %v231
  %v302 = vpack.c.b16 %v234, %v233
  %v303 = vpack.c.b16 %v236, %v235
  %v304 = vpack.c.b16 %v238, %v237
  %v305 = vpack.c.b16 %v240, %v239
  %v306 = vpack.c.b16 %v242, %v241
  %v307 = vpack.c.b16 %v244, %v243
  %v308 = vpack.c.b16 %v246, %v245
  %v309 = vpack.c.b16 %v248, %v247
  %v310 = vpack.c.b16 %v250, %v249
  %v311 = vpack.c.b16 %v252, %v251
  %v312 = vpack.c.b16 %v254, %v253
  %v313 = vpack.c.b16 %v256, %v255
  %v314 = vpack.c.b16 %v258, %v257
  %v315 = vpack.c.b16 %v260, %v259
  %v316 = vpack.c.b16 %v262, %v261
  %v317 = vpack.c.b16 %v264, %v263
  %v318 = vpack.c.b16 %v266, %v265
  %v319 = vpack.c.b16 %v268, %v267
  %v320 = vpack.c.b16 %v270, %v269
  %v321 = vpack.c.b16 %v272, %v271
  %v322 = vpack.c.b16 %v274, %v273
  %v323 = vpack.c.b16 %v276, %v275
  %v324 = vpack.c.b16 %v278, %v277
  %v325 = vpack.c.b16 %v280, %v279
  %v326 = vpack.c.b16 %v282, %v281
  %v327 = vpack.c.b16 %v284, %v283
  %v328 = vpack.c.b16 %v286, %v285
  %v329 = vpack.c.b16 %v288, %v287
  %v330 = vpack.c.b16 %v290, %v289
  %v331 = vpack.c.b16 %v292, %v291
  %v332 = vpack.c.b16 %v294, %v293
  %v333 = vpack.c.b16 %v296, %v295
  %v334 = vpack.c.b16 %v298, %v297
  %vm371 = vcmask 523264
  %v373 = vsel %vm371, %v141, 0
  %v376 = vsel %vm371, %v146, 0
  %378 = vmatprep.subr.bf16.mxu0 0
  %379 = vmatpush1.bf16.msra.mxu0 %v299
  %380 = vmatprep.subr.bf16.mxu0 0
  %381 = vmatpush1.bf16.msra.mxu0 %v300
  %382 = vmatprep.subr.bf16.mxu0 0
  %383 = vmatpush1.bf16.msra.mxu0 %v301
  %384 = vmatprep.subr.bf16.mxu0 0
  %385 = vmatpush1.bf16.msra.mxu0 %v302
  %386 = vmatprep.subr.bf16.mxu0 0
  %387 = vmatpush1.bf16.msra.mxu0 %v303
  %388 = vmatprep.subr.bf16.mxu0 0
  %389 = vmatpush1.bf16.msra.mxu0 %v304
  %390 = vmatprep.subr.bf16.mxu0 0
  %391 = vmatpush1.bf16.msra.mxu0 %v305
  %392 = vmatprep.subr.bf16.mxu0 0
  %393 = vmatpush1.bf16.msra.mxu0 %v306
  %394 = vmatprep.subr.bf16.mxu0 0
  %395 = vmatpush1.bf16.msra.mxu0 %v307
  %396 = vmatprep.subr.bf16.mxu0 0
  %397 = vmatpush1.bf16.msra.mxu0 %v308
  %398 = vmatprep.subr.bf16.mxu0 0
  %399 = vmatpush1.bf16.msra.mxu0 %v309
  %400 = vmatprep.subr.bf16.mxu0 0
  %401 = vmatpush1.bf16.msra.mxu0 %v310
  %402 = vmatprep.subr.bf16.mxu0 0
  %403 = vmatpush1.bf16.msra.mxu0 %v311
  %404 = vmatprep.subr.bf16.mxu0 0
  %405 = vmatpush1.bf16.msra.mxu0 %v312
  %406 = vmatprep.subr.bf16.mxu0 0
  %407 = vmatpush1.bf16.msra.mxu0 %v313
  %408 = vmatprep.subr.bf16.mxu0 0
  %409 = vmatpush1.bf16.msra.mxu0 %v314
  %410 = vmatprep.mubr.bf16.mxu0 %v138
  %411 = vmatmul.mubr.bf16.gmra.mrb[0].mxu0 %v137
  %v412 = vpop.f32.mrb[0].mxu0
  %v413 = vadd.f32 0.0, %v412
  %v414 = vpop.f32.mrb[0].mxu0
  %v415 = vpop.f32.mrb[0].mxu0
  %v416 = vadd.f32 0.0, %v415
  %v417 = vpop.f32.mrb[0].mxu0
  %418 = vmatprep.mubr.bf16.mxu0 %v143
  %419 = vmatmul.mubr.bf16.gmra.mrb[0].mxu0 %v142
  %v420 = vpop.f32.mrb[0].mxu0
  %v421 = vadd.f32 0.0, %v420
  %v422 = vpop.f32.mrb[0].mxu0
  %v423 = vpop.f32.mrb[0].mxu0
  %v424 = vadd.f32 0.0, %v423
  %v425 = vpop.f32.mrb[0].mxu0
  %426 = vdwg.mxu0
  %427 = vmatprep.subr.bf16.mxu0 0
  %428 = vmatpush1.bf16.msra.mxu0 %v315
  %429 = vmatprep.subr.bf16.mxu0 0
  %430 = vmatpush1.bf16.msra.mxu0 %v316
  %431 = vmatprep.subr.bf16.mxu0 0
  %432 = vmatpush1.bf16.msra.mxu0 %v317
  %433 = vmatprep.subr.bf16.mxu0 0
  %434 = vmatpush1.bf16.msra.mxu0 %v318
  %435 = vmatprep.subr.bf16.mxu0 0
  %436 = vmatpush1.bf16.msra.mxu0 %v319
  %437 = vmatprep.subr.bf16.mxu0 0
  %438 = vmatpush1.bf16.msra.mxu0 %v320
  %439 = vmatprep.subr.bf16.mxu0 0
  %440 = vmatpush1.bf16.msra.mxu0 %v321
  %441 = vmatprep.subr.bf16.mxu0 0
  %442 = vmatpush1.bf16.msra.mxu0 %v322
  %443 = vmatprep.subr.bf16.mxu0 0
  %444 = vmatpush1.bf16.msra.mxu0 %v323
  %445 = vmatprep.subr.bf16.mxu0 0
  %446 = vmatpush1.bf16.msra.mxu0 %v324
  %447 = vmatprep.subr.bf16.mxu0 0
  %448 = vmatpush1.bf16.msra.mxu0 %v325
  %449 = vmatprep.subr.bf16.mxu0 0
  %450 = vmatpush1.bf16.msra.mxu0 %v326
  %451 = vmatprep.subr.bf16.mxu0 0
  %452 = vmatpush1.bf16.msra.mxu0 %v327
  %453 = vmatprep.subr.bf16.mxu0 0
  %454 = vmatpush1.bf16.msra.mxu0 %v328
  %455 = vmatprep.subr.bf16.mxu0 0
  %456 = vmatpush1.bf16.msra.mxu0 %v329
  %457 = vmatprep.subr.bf16.mxu0 0
  %458 = vmatpush1.bf16.msra.mxu0 %v330
  %459 = vmatprep.mubr.bf16.mxu0 %v140
  %460 = vmatmul.mubr.bf16.gmra.mrb[0].mxu0 %v139
  %v461 = vpop.f32.mrb[0].mxu0
  %v462 = vadd.f32 %v413, %v461
  %v463 = vpop.f32.mrb[0].mxu0
  %v464 = vpop.f32.mrb[0].mxu0
  %v465 = vadd.f32 %v416, %v464
  %v466 = vpop.f32.mrb[0].mxu0
  %467 = vmatprep.mubr.bf16.mxu0 %v145
  %468 = vmatmul.mubr.bf16.gmra.mrb[0].mxu0 %v144
  %v469 = vpop.f32.mrb[0].mxu0
  %v470 = vadd.f32 %v421, %v469
  %v471 = vpop.f32.mrb[0].mxu0
  %v472 = vpop.f32.mrb[0].mxu0
  %v473 = vadd.f32 %v424, %v472
  %v474 = vpop.f32.mrb[0].mxu0
  %475 = vdwg.mxu0
  %476 = vmatprep.subr.bf16.mxu0 0
  %477 = vmatpush1.bf16.msra.mxu0 %v331
  %478 = vmatprep.subr.bf16.mxu0 0
  %479 = vmatpush1.bf16.msra.mxu0 %v332
  %480 = vmatprep.subr.bf16.mxu0 0
  %481 = vmatpush1.bf16.msra.mxu0 %v333
  %482 = vmatprep.subr.bf16.mxu0 0
  %483 = vmatpush1.bf16.msra.mxu0 %v334
  %484 = vmatprep.subr.bf16.mxu0 0
  %485 = vmatpush1.bf16.msra.mxu0 0
  %486 = vmatprep.subr.bf16.mxu0 0
  %487 = vmatpush1.bf16.msra.mxu0 0
  %488 = vmatprep.subr.bf16.mxu0 0
  %489 = vmatpush1.bf16.msra.mxu0 0
  %490 = vmatprep.subr.bf16.mxu0 0
  %491 = vmatpush1.bf16.msra.mxu0 0
  %492 = vmatprep.subr.bf16.mxu0 0
  %493 = vmatpush1.bf16.msra.mxu0 0
  %494 = vmatprep.subr.bf16.mxu0 0
  %495 = vmatpush1.bf16.msra.mxu0 0
  %496 = vmatprep.subr.bf16.mxu0 0
  %497 = vmatpush1.bf16.msra.mxu0 0
  %498 = vmatprep.subr.bf16.mxu0 0
  %499 = vmatpush1.bf16.msra.mxu0 0
  %500 = vmatprep.subr.bf16.mxu0 0
  %501 = vmatpush1.bf16.msra.mxu0 0
  %502 = vmatprep.subr.bf16.mxu0 0
  %503 = vmatpush1.bf16.msra.mxu0 0
  %504 = vmatprep.subr.bf16.mxu0 0
  %505 = vmatpush1.bf16.msra.mxu0 0
  %506 = vmatprep.subr.bf16.mxu0 0
  %507 = vmatpush1.bf16.msra.mxu0 0
  %508 = vmatprep.mubr.bf16.mxu0 0
  %509 = vmatmul.mubr.bf16.gmra.mrb[0].mxu0 %v373
  %v510 = vpop.f32.mrb[0].mxu0
  %v511 = vadd.f32 %v462, %v510
  %v512 = vpop.f32.mrb[0].mxu0
  %v513 = vpop.f32.mrb[0].mxu0
  %v514 = vadd.f32 %v465, %v513
  %v515 = vpop.f32.mrb[0].mxu0
  %516 = vmatprep.mubr.bf16.mxu0 0
  %517 = vmatmul.mubr.bf16.gmra.mrb[0].mxu0 %v376
  %v518 = vpop.f32.mrb[0].mxu0
  %v519 = vadd.f32 %v470, %v518
  %v520 = vpop.f32.mrb[0].mxu0
  %v521 = vpop.f32.mrb[0].mxu0
  %v522 = vadd.f32 %v473, %v521
  %v523 = vpop.f32.mrb[0].mxu0
  %524 = vdwg.mxu0
  %v525 = vsel %vm371, %v511, 0.0
  %v526 = vsel %vm371, %v514, 0.0
  %v527 = vadd.f32 %v525, %v526
  %v528 = vsel %vm371, %v519, 0.0
  %v529 = vadd.f32 %v527, %v528
  %v530 = vsel %vm371, %v522, 0.0
  %v531 = vadd.f32 %v529, %v530
  %v532 = vrot.slane %v531, 4
  %v533 = vadd.f32 %v531, %v532
  %v534 = vrot.slane %v533, 2
  %v535 = vadd.f32 %v533, %v534
  %v536 = vrot.slane %v535, 1
  %v537 = vadd.f32 %v535, %v536
  %v538 = vmul.f32 %v537, 0.055555556
  %v539 = vsub.f32 %v511, %v538
  %v540 = vsub.f32 %v514, %v538
  %v541 = vsub.f32 %v519, %v538
  %v542 = vsub.f32 %v522, %v538
  %v543 = vld [vmem:[%s2] sm:$0xff]
  %v544 = vld [vmem:[%s2 + $0x8] sm:$0xff]
  %v545 = vld [vmem:[%s2 + $0x10] sm:$0xff]
  %v546 = vld [vmem:[%s2 + $0x18] sm:$0xff]
  %548 = vset.pattern.permute.xlu0 0
  %549 = vperm.xlu0 %548, %v543
  %v550 = vpop.permute.xlu0 %549
  %553 = vset.pattern.permute.xlu0 0
  %554 = vperm.xlu0 %553, %v544
  %v555 = vpop.permute.xlu0 %554
  %558 = vset.pattern.permute.xlu0 0
  %559 = vperm.xlu0 %558, %v545
  %v560 = vpop.permute.xlu0 %559
  %563 = vset.pattern.permute.xlu0 0
  %564 = vperm.xlu0 %563, %v546
  %v565 = vpop.permute.xlu0 %564
  %v567 = vmul.f32 %v539, %v550
  %v568 = vmul.f32 %v540, %v555
  %v569 = vmul.f32 %v541, %v560
  %v570 = vmul.f32 %v542, %v565
  %v571 = vmul.f32 %v567, %v567
  %v572 = vmul.f32 %v568, %v568
  %v573 = vmul.f32 %v569, %v569
  %v574 = vmul.f32 %v570, %v570
  %v575 = vsel %vm371, %v571, 0.0
  %v576 = vsel %vm371, %v572, 0.0
  %v577 = vadd.f32 %v575, %v576
  %v578 = vsel %vm371, %v573, 0.0
  %v579 = vadd.f32 %v577, %v578
  %v580 = vsel %vm371, %v574, 0.0
  %v581 = vadd.f32 %v579, %v580
  %v582 = vrot.slane %v581, 4
  %v583 = vadd.f32 %v581, %v582
  %v584 = vrot.slane %v583, 2
  %v585 = vadd.f32 %v583, %v584
  %v586 = vrot.slane %v585, 1
  %v587 = vadd.f32 %v585, %v586
  %v588 = vmul.f32 %v587, 0.055555556
  %v589 = vld [vmem:[%s3] sm:$0x1]
  %v590 = vadd.f32 %v588, 1e-05
  %v591 = vrsqrt.pop %v590
  %v592 = vmul.f32 %v589, %v591
  %v593 = vld [vmem:[%s4] sm:$0x1]
  %v594 = vmul.f32 %v538, %v592
  %v595 = vsub.f32 %v593, %v594
  %v597 = vlaneseq
  %v598 = vshrl.u32 %v597, 7
  %v599 = vsub.s32 0, %v598
  %v600 = vrot.slane %v592, %v599
  %v602 = vmul.f32 %v511, %v600
  %v603 = vmul.f32 %v514, %v600
  %v604 = vmul.f32 %v519, %v600
  %v605 = vmul.f32 %v522, %v600
  %v607 = vlaneseq
  %v608 = vshrl.u32 %v607, 7
  %v609 = vsub.s32 0, %v608
  %v610 = vrot.slane %v595, %v609
  %v612 = vadd.f32 %v602, %v610
  %v613 = vadd.f32 %v603, %v610
  %v614 = vadd.f32 %v604, %v610
  %v615 = vadd.f32 %v605, %v610
  %v616 = vmax.f32 %v612, 0.0
  %v617 = vmax.f32 %v613, 0.0
  %v618 = vmax.f32 %v614, 0.0
  %v619 = vmax.f32 %v615, 0.0
  %v620 = vpack.c.bf16 %v617, %v616
  %v621 = vpack.c.bf16 %v619, %v618
  %v624 = vunpack.c.l.b16 %v620
  %v625 = vunpack.c.h.b16 %v620
  %v626 = vunpack.c.l.b16 %v621
  %v627 = vunpack.c.h.b16 %v621
  %v628 = vpack.c.b16 %v624, %v624
  %v629 = vpack.c.b16 %v625, %v625
  %v630 = vpack.c.b16 %v626, %v626
  %v631 = vpack.c.b16 %v627, %v627
  %vm636 = vcmask 519168
  %637 = vst.msk [vmem:[%s5] sm:$0xf] %vm636, %v628
  %638 = vst.msk [vmem:[%s5 + $0x4] sm:$0xf] %vm636, %v629
  %639 = vst.msk [vmem:[%s5 + $0x8] sm:$0xf] %vm636, %v630
  %640 = vst.msk [vmem:[%s5 + $0xc] sm:$0xf] %vm636, %v631
  // Predicated region
  $region22: #{forward.6} parent=0 // pred_check
    _
  $region23: #{forward.6} parent=0 // pred_check_branch
    %642 = sbr.rel (0) target = $region25
  $region24: #{forward.6} parent=0 // pred_region
    _
  $region25: #{forward.6} parent=0 // pred_fallthru
    _
  // Predicated region
  $region26: #{forward.6} parent=0 // pred_check
    _
  $region27: #{forward.6} parent=0 // pred_check_branch
    %644 = sbr.rel (0) target = $region29
  $region28: #{forward.6} parent=0 // pred_region
    _
  $region29: #{forward.6} parent=0 // pred_fallthru
    _

</llo_original>
